<compile_context>
chip_gen: v7x
topology: tpu7x:2x2x1
jax: 0.10.0
libtpu: 0.0.40
codegen_flags: <defaults>
</compile_context>

<pallas_src>
import functools

import jax
import jax.numpy as jnp
import numpy as np
from jax.experimental import pallas as pl
from jax.experimental.pallas import tpu as pltpu


def _round_up(x, m):
    return (x + m - 1) // m * m


def _vmem_capacity_bytes():
    try:
        return int(pltpu.get_tpu_info().vmem_capacity_bytes)
    except Exception:
        return 64 * 1024 * 1024  # conservative default (v7x per-TC VMEM)


def _ntxent_kernel(anchor_ref, positive_ref, negatives_ref, out_ref,
                   m_sc, l_sc, pos_sc, scale_sc, *,
                   temperature, batch_size, num_neg, tile_b, tile_n,
                   mask_rows, mask_cols):
    # torch F.normalize: x / max(||x||, eps) with eps = 1e-12.
    # rsqrt(max(ss, eps^2)) == 1 / max(sqrt(ss), eps) exactly, and runs on the
    # (otherwise idle) EUP.
    eps2 = 1e-24
    inv_t = 1.0 / temperature

    i = pl.program_id(0)   # batch tile (parallel)
    j = pl.program_id(1)   # negatives tile (online-logsumexp reduction)

    @pl.when(j == 0)
    def _init():
        a = anchor_ref[...].astype(jnp.float32)             # (TB, D)
        p = positive_ref[...].astype(jnp.float32)           # (TB, D)
        a_ss = jnp.sum(a * a, axis=1, keepdims=True)        # (TB, 1)
        p_ss = jnp.sum(p * p, axis=1, keepdims=True)        # (TB, 1)
        ap = jnp.sum(a * p, axis=1, keepdims=True)          # (TB, 1)
        inv_a = jax.lax.rsqrt(jnp.maximum(a_ss, eps2))
        inv_p = jax.lax.rsqrt(jnp.maximum(p_ss, eps2))
        pos = ap * inv_a * inv_p * inv_t                    # positive logit
        pos_sc[...] = pos
        scale_sc[...] = inv_a * inv_t
        m_sc[...] = pos                                     # running max
        l_sc[...] = jnp.ones_like(l_sc)                     # exp(pos - pos)

    n = negatives_ref[...]                                  # (TB, TN, D), native dtype

    # Raw anchor.negative dots on the MXU with f32 accumulation. HIGHEST keeps
    # f32 inputs f32-exact; for bf16 inputs it is the same single MXU pass.
    a_mx = anchor_ref[...].astype(n.dtype)[:, None, :]      # (TB, 1, D)
    na = jnp.einsum('bkd,bnd->bkn', a_mx, n,
                    preferred_element_type=jnp.float32,
                    precision=jax.lax.Precision.HIGHEST)[:, 0, :]   # (TB, TN)

    # Squared norms of the negatives: promote inside the fused reduce
    # (no stored f32 copy of the tile kept live across both uses).
    n_ss = jnp.sum(jnp.square(n.astype(jnp.float32)), axis=2)       # (TB, TN)
    inv_n = jax.lax.rsqrt(jnp.maximum(n_ss, eps2))

    neg_sim = na * inv_n * scale_sc[...]                    # (TB, TN)

    if mask_cols:  # ragged last N tile
        col = j * tile_n + jax.lax.broadcasted_iota(jnp.int32, neg_sim.shape, 1)
        neg_sim = jnp.where(col < num_neg, neg_sim, -jnp.inf)

    # Online logsumexp update (flash-attention style).
    m_prev = m_sc[...]
    m_new = jnp.maximum(m_prev, jnp.max(neg_sim, axis=1, keepdims=True))
    l_sc[...] = (l_sc[...] * jnp.exp(m_prev - m_new)
                 + jnp.sum(jnp.exp(neg_sim - m_new), axis=1, keepdims=True))
    m_sc[...] = m_new

    @pl.when(j == pl.num_programs(1) - 1)
    def _finalize():
        per_row = m_sc[...] + jnp.log(l_sc[...]) - pos_sc[...]       # (TB, 1)
        if mask_rows:  # ragged last batch tile
            row = i * tile_b + jax.lax.broadcasted_iota(
                jnp.int32, per_row.shape, 0)
            per_row = jnp.where(row < batch_size, per_row, 0.0)
        out_ref[...] = jnp.sum(per_row, axis=0, keepdims=True).reshape(1, 1, 1)


def ntxent_loss(anchor, positive, negatives, temperature=0.5):
    B, D = anchor.shape
    Bn, N, Dn = negatives.shape
    assert Bn == B and Dn == D and positive.shape == (B, D)

    itemsize = jnp.dtype(negatives.dtype).itemsize
    vmem_cap = _vmem_capacity_bytes()
    # Budget for the streamed negatives working set: double-buffered input tile
    # plus ~2 live f32 temporaries for the squared-norm reduce.
    budget = vmem_cap // 3
    vmem_limit = min(vmem_cap * 3 // 4, 96 * 1024 * 1024)
    cell_bytes = D * (2 * itemsize + 2 * 4)   # bytes per (row, negative) cell

    # Batch tile: multiple of 8 (sublane), large enough to amortize the
    # ~0.35us per-grid-step overhead, small enough that even an 8-wide N tile
    # fits the budget.
    tb = min(_round_up(B, 8), 512)
    while tb > 8 and tb * 8 * cell_bytes > budget:
        tb //= 2
    tb = max(8, (tb // 8) * 8)

    # Negatives tile along N: full extent or a multiple of 8.
    tn_fit = max(1, budget // (tb * cell_bytes))
    tn = N if tn_fit >= N else max(8, (tn_fit // 8) * 8)

    grid = (pl.cdiv(B, tb), pl.cdiv(N, tn))
    num_batch_tiles = grid[0]

    kernel = functools.partial(
        _ntxent_kernel,
        temperature=float(temperature), batch_size=B, num_neg=N,
        tile_b=tb, tile_n=tn,
        mask_rows=(B % tb != 0), mask_cols=(N % tn != 0))

    cost = pl.CostEstimate(
        flops=int(5 * B * N * D + 10 * B * D),
        transcendentals=int(B * (N + 8)),
        bytes_accessed=int(negatives.size * itemsize
                           + (anchor.size + positive.size) * itemsize
                           + 4 * num_batch_tiles))

    partials = pl.pallas_call(
        kernel,
        out_shape=jax.ShapeDtypeStruct((num_batch_tiles, 1, 1), jnp.float32),
        grid_spec=pltpu.PrefetchScalarGridSpec(
            num_scalar_prefetch=0,
            grid=grid,
            in_specs=[
                pl.BlockSpec((tb, D), lambda i, j: (i, 0)),
                pl.BlockSpec((tb, D), lambda i, j: (i, 0)),
                pl.BlockSpec((tb, tn, D), lambda i, j: (i, j, 0)),
            ],
            out_specs=pl.BlockSpec((1, 1, 1), lambda i, j: (i, 0, 0)),
            scratch_shapes=[pltpu.VMEM((tb, 1), jnp.float32)] * 4,
        ),
        compiler_params=pltpu.CompilerParams(
            # Batch tiles are independent -> megacore shards them on v7x;
            # the negatives axis is the online-logsumexp reduction.
            dimension_semantics=("parallel", "arbitrary"),
            vmem_limit_bytes=int(vmem_limit),
        ),
        cost_estimate=cost,
    )(anchor, positive, negatives)

    return jnp.sum(partials) / B


def _reference_loss(anchor, positive, negatives, temperature=0.5):
    eps = 1e-12
    a = anchor / jnp.maximum(jnp.linalg.norm(anchor, axis=1, keepdims=True), eps)
    p = positive / jnp.maximum(jnp.linalg.norm(positive, axis=1, keepdims=True), eps)
    n = negatives / jnp.maximum(jnp.linalg.norm(negatives, axis=2, keepdims=True), eps)
    pos = jnp.sum(a * p, axis=1) / temperature
    neg = jnp.sum(n * a[:, None, :], axis=2) / temperature   # exact f32 path
    logits = jnp.concatenate([pos[:, None], neg], axis=1)
    logp0 = logits[:, 0] - jax.scipy.special.logsumexp(logits, axis=1)
    return -jnp.mean(logp0)


if __name__ == "__main__":
    key = jax.random.PRNGKey(0)
    k1, k2, k3 = jax.random.split(key, 3)

    B, N, D = 8, 8, 32
    anchor = jax.random.normal(k1, (B, D), dtype=jnp.float32)
    positive = jax.random.normal(k2, (B, D), dtype=jnp.float32)
    negatives = jax.random.normal(k3, (B, N, D), dtype=jnp.float32)

    loss = ntxent_loss(anchor, positive, negatives, temperature=0.5)
    jax.block_until_ready(loss)

    ref = _reference_loss(anchor, positive, negatives, temperature=0.5)
    np.testing.assert_allclose(np.asarray(loss), np.asarray(ref),
                               rtol=1e-5, atol=1e-5)

    print("KERNEL_OK")
</pallas_src>

<mosaic_0001>
module attributes {stable_mosaic.version = 11 : i64} {
  func.func @_ntxent_kernel(%arg0: i32, %arg1: i32, %arg2: memref<8x32xf32, #tpu.memory_space<vmem>>, %arg3: memref<8x32xf32, #tpu.memory_space<vmem>>, %arg4: memref<8x8x32xf32, #tpu.memory_space<vmem>>, %arg5: memref<1x1x1xf32, #tpu.memory_space<vmem>>, %arg6: memref<8x1xf32, #tpu.memory_space<vmem>>, %arg7: memref<8x1xf32, #tpu.memory_space<vmem>>, %arg8: memref<8x1xf32, #tpu.memory_space<vmem>>, %arg9: memref<8x1xf32, #tpu.memory_space<vmem>>) attributes {dimension_semantics = [#tpu.dimension_semantics<parallel>, #tpu.dimension_semantics<arbitrary>], iteration_bounds = array<i64: 1, 1>, scalar_prefetch = 0 : i64, scratch_operands = 4 : i64, tpu.core_type = #tpu.core_type<tc>, window_params = [{transform_indices = @transform_0, window_bounds = array<i64: 8, 32>}, {transform_indices = @transform_1, window_bounds = array<i64: 8, 32>}, {transform_indices = @transform_2, window_bounds = array<i64: 8, 8, 32>}, {transform_indices = @transform_3, window_bounds = array<i64: 1, 1, 1>}]} {
    %c0_i32 = arith.constant 0 : i32
    %0 = arith.cmpi eq, %arg1, %c0_i32 : i32
    %1 = arith.extui %0 : i1 to i32
    %c0_i32_0 = arith.constant 0 : i32
    %2 = arith.cmpi ne, %1, %c0_i32_0 : i32
    scf.if %2 {
      %c0_21 = arith.constant 0 : index
      %c0_22 = arith.constant 0 : index
      %36 = vector.load %arg2[%c0_21, %c0_22] : memref<8x32xf32, #tpu.memory_space<vmem>>, vector<8x32xf32>
      %c0_23 = arith.constant 0 : index
      %c0_24 = arith.constant 0 : index
      %37 = vector.load %arg3[%c0_23, %c0_24] : memref<8x32xf32, #tpu.memory_space<vmem>>, vector<8x32xf32>
      %38 = arith.mulf %36, %36 : vector<8x32xf32>
      %cst_25 = arith.constant dense<0.000000e+00> : vector<8xf32>
      %39 = vector.multi_reduction <add>, %38, %cst_25 [1] : vector<8x32xf32> to vector<8xf32>
      %40 = vector.shape_cast %39 : vector<8xf32> to vector<8x1xf32>
      %41 = arith.mulf %37, %37 : vector<8x32xf32>
      %cst_26 = arith.constant dense<0.000000e+00> : vector<8xf32>
      %42 = vector.multi_reduction <add>, %41, %cst_26 [1] : vector<8x32xf32> to vector<8xf32>
      %43 = vector.shape_cast %42 : vector<8xf32> to vector<8x1xf32>
      %44 = arith.mulf %36, %37 : vector<8x32xf32>
      %cst_27 = arith.constant dense<0.000000e+00> : vector<8xf32>
      %45 = vector.multi_reduction <add>, %44, %cst_27 [1] : vector<8x32xf32> to vector<8xf32>
      %46 = vector.shape_cast %45 : vector<8xf32> to vector<8x1xf32>
      %cst_28 = arith.constant 1.000000e-24 : f32
      %47 = vector.broadcast %cst_28 : f32 to vector<8x1xf32>
      %48 = arith.maximumf %40, %47 : vector<8x1xf32>
      %49 = math.rsqrt %48 : vector<8x1xf32>
      %cst_29 = arith.constant 1.000000e-24 : f32
      %50 = vector.broadcast %cst_29 : f32 to vector<8x1xf32>
      %51 = arith.maximumf %43, %50 : vector<8x1xf32>
      %52 = math.rsqrt %51 : vector<8x1xf32>
      %53 = arith.mulf %46, %49 : vector<8x1xf32>
      %54 = arith.mulf %53, %52 : vector<8x1xf32>
      %cst_30 = arith.constant 2.000000e+00 : f32
      %55 = vector.broadcast %cst_30 : f32 to vector<8x1xf32>
      %56 = arith.mulf %54, %55 : vector<8x1xf32>
      %c0_31 = arith.constant 0 : index
      %c0_32 = arith.constant 0 : index
      %57 = vector.load %arg8[%c0_31, %c0_32] : memref<8x1xf32, #tpu.memory_space<vmem>>, vector<8x1xf32>
      tpu.vector_store %arg8[%c0_31, %c0_32], %56 {strides = array<i32>} : memref<8x1xf32, #tpu.memory_space<vmem>>, vector<8x1xf32>,
      %cst_33 = arith.constant 2.000000e+00 : f32
      %58 = vector.broadcast %cst_33 : f32 to vector<8x1xf32>
      %59 = arith.mulf %49, %58 : vector<8x1xf32>
      %c0_34 = arith.constant 0 : index
      %c0_35 = arith.constant 0 : index
      %60 = vector.load %arg9[%c0_34, %c0_35] : memref<8x1xf32, #tpu.memory_space<vmem>>, vector<8x1xf32>
      tpu.vector_store %arg9[%c0_34, %c0_35], %59 {strides = array<i32>} : memref<8x1xf32, #tpu.memory_space<vmem>>, vector<8x1xf32>,
      %c0_36 = arith.constant 0 : index
      %c0_37 = arith.constant 0 : index
      %61 = vector.load %arg6[%c0_36, %c0_37] : memref<8x1xf32, #tpu.memory_space<vmem>>, vector<8x1xf32>
      tpu.vector_store %arg6[%c0_36, %c0_37], %56 {strides = array<i32>} : memref<8x1xf32, #tpu.memory_space<vmem>>, vector<8x1xf32>,
      %cst_38 = arith.constant 1.000000e+00 : f32
      %62 = vector.broadcast %cst_38 : f32 to vector<8x1xf32>
      %c0_39 = arith.constant 0 : index
      %c0_40 = arith.constant 0 : index
      %63 = vector.load %arg7[%c0_39, %c0_40] : memref<8x1xf32, #tpu.memory_space<vmem>>, vector<8x1xf32>
      tpu.vector_store %arg7[%c0_39, %c0_40], %62 {strides = array<i32>} : memref<8x1xf32, #tpu.memory_space<vmem>>, vector<8x1xf32>,
    } else {
    }
    %c0 = arith.constant 0 : index
    %c0_1 = arith.constant 0 : index
    %c0_2 = arith.constant 0 : index
    %3 = vector.load %arg4[%c0, %c0_1, %c0_2] : memref<8x8x32xf32, #tpu.memory_space<vmem>>, vector<8x8x32xf32>
    %c0_3 = arith.constant 0 : index
    %c0_4 = arith.constant 0 : index
    %4 = vector.load %arg2[%c0_3, %c0_4] : memref<8x32xf32, #tpu.memory_space<vmem>>, vector<8x32xf32>
    %5 = vector.shape_cast %4 : vector<8x32xf32> to vector<8x1x32xf32>
    "tpu.trace_start"() <{level = 10 : i32, message = "bkd,bnd->bkn"}> : () -> ()
    %cst = arith.constant dense<0.000000e+00> : vector<8x1x8xf32>
    %6 = tpu.matmul %5, %3, %cst {dimension_numbers = #tpu.dot_dimension_numbers<[2], [2], [1], [1], [0, 0, 0, 1, 1, 1], [0], [0]>, precision = #tpu.contract_precision<fp32>} : vector<8x1x32xf32>, vector<8x8x32xf32>, vector<8x1x8xf32> -> vector<8x1x8xf32>
    "tpu.trace_stop"() : () -> ()
    %7 = vector.shape_cast %6 : vector<8x1x8xf32> to vector<8x8xf32>
    %8 = arith.mulf %3, %3 : vector<8x8x32xf32>
    %cst_5 = arith.constant dense<0.000000e+00> : vector<8x8xf32>
    %9 = vector.multi_reduction <add>, %8, %cst_5 [2] : vector<8x8x32xf32> to vector<8x8xf32>
    %cst_6 = arith.constant 1.000000e-24 : f32
    %10 = vector.broadcast %cst_6 : f32 to vector<8x8xf32>
    %11 = arith.maximumf %9, %10 : vector<8x8xf32>
    %12 = math.rsqrt %11 : vector<8x8xf32>
    %13 = arith.mulf %7, %12 : vector<8x8xf32>
    %c0_7 = arith.constant 0 : index
    %c0_8 = arith.constant 0 : index
    %14 = vector.load %arg9[%c0_7, %c0_8] : memref<8x1xf32, #tpu.memory_space<vmem>>, vector<8x1xf32>
    %15 = vector.broadcast %14 : vector<8x1xf32> to vector<8x8xf32>
    %16 = arith.mulf %13, %15 : vector<8x8xf32>
    %c0_9 = arith.constant 0 : index
    %c0_10 = arith.constant 0 : index
    %17 = vector.load %arg6[%c0_9, %c0_10] : memref<8x1xf32, #tpu.memory_space<vmem>>, vector<8x1xf32>
    %cst_11 = arith.constant dense<0xFF800000> : vector<8xf32>
    %18 = vector.multi_reduction <maximumf>, %16, %cst_11 [1] : vector<8x8xf32> to vector<8xf32>
    %19 = vector.shape_cast %18 : vector<8xf32> to vector<8x1xf32>
    %20 = arith.maximumf %17, %19 : vector<8x1xf32>
    %c0_12 = arith.constant 0 : index
    %c0_13 = arith.constant 0 : index
    %21 = vector.load %arg7[%c0_12, %c0_13] : memref<8x1xf32, #tpu.memory_space<vmem>>, vector<8x1xf32>
    %22 = arith.subf %17, %20 : vector<8x1xf32>
    %23 = math.exp %22 : vector<8x1xf32>
    %24 = arith.mulf %21, %23 : vector<8x1xf32>
    %25 = vector.broadcast %20 : vector<8x1xf32> to vector<8x8xf32>
    %26 = arith.subf %16, %25 : vector<8x8xf32>
    %27 = math.exp %26 : vector<8x8xf32>
    %cst_14 = arith.constant dense<0.000000e+00> : vector<8xf32>
    %28 = vector.multi_reduction <add>, %27, %cst_14 [1] : vector<8x8xf32> to vector<8xf32>
    %29 = vector.shape_cast %28 : vector<8xf32> to vector<8x1xf32>
    %30 = arith.addf %24, %29 : vector<8x1xf32>
    %c0_15 = arith.constant 0 : index
    %c0_16 = arith.constant 0 : index
    %31 = vector.load %arg7[%c0_15, %c0_16] : memref<8x1xf32, #tpu.memory_space<vmem>>, vector<8x1xf32>
    tpu.vector_store %arg7[%c0_15, %c0_16], %30 {strides = array<i32>} : memref<8x1xf32, #tpu.memory_space<vmem>>, vector<8x1xf32>,
    %c0_17 = arith.constant 0 : index
    %c0_18 = arith.constant 0 : index
    %32 = vector.load %arg6[%c0_17, %c0_18] : memref<8x1xf32, #tpu.memory_space<vmem>>, vector<8x1xf32>
    tpu.vector_store %arg6[%c0_17, %c0_18], %20 {strides = array<i32>} : memref<8x1xf32, #tpu.memory_space<vmem>>, vector<8x1xf32>,
    %c0_i32_19 = arith.constant 0 : i32
    %33 = arith.cmpi eq, %arg1, %c0_i32_19 : i32
    %34 = arith.extui %33 : i1 to i32
    %c0_i32_20 = arith.constant 0 : i32
    %35 = arith.cmpi ne, %34, %c0_i32_20 : i32
    scf.if %35 {
      %c0_21 = arith.constant 0 : index
      %c0_22 = arith.constant 0 : index
      %36 = vector.load %arg6[%c0_21, %c0_22] : memref<8x1xf32, #tpu.memory_space<vmem>>, vector<8x1xf32>
      %c0_23 = arith.constant 0 : index
      %c0_24 = arith.constant 0 : index
      %37 = vector.load %arg7[%c0_23, %c0_24] : memref<8x1xf32, #tpu.memory_space<vmem>>, vector<8x1xf32>
      %38 = math.log %37 : vector<8x1xf32>
      %39 = arith.addf %36, %38 : vector<8x1xf32>
      %c0_25 = arith.constant 0 : index
      %c0_26 = arith.constant 0 : index
      %40 = vector.load %arg8[%c0_25, %c0_26] : memref<8x1xf32, #tpu.memory_space<vmem>>, vector<8x1xf32>
      %41 = arith.subf %39, %40 : vector<8x1xf32>
      %cst_27 = arith.constant dense<0.000000e+00> : vector<1xf32>
      %42 = vector.multi_reduction <add>, %41, %cst_27 [0] : vector<8x1xf32> to vector<1xf32>
      %43 = vector.shape_cast %42 : vector<1xf32> to vector<1x1xf32>
      %44 = vector.shape_cast %43 : vector<1x1xf32> to vector<1x1x1xf32>
      %c0_28 = arith.constant 0 : index
      %c0_29 = arith.constant 0 : index
      %c0_30 = arith.constant 0 : index
      %45 = vector.load %arg5[%c0_28, %c0_29, %c0_30] : memref<1x1x1xf32, #tpu.memory_space<vmem>>, vector<1x1x1xf32>
      tpu.vector_store %arg5[%c0_28, %c0_29, %c0_30], %44 {strides = array<i32>} : memref<1x1x1xf32, #tpu.memory_space<vmem>>, vector<1x1x1xf32>,
    } else {
    }
    return
  }
  func.func @transform_0(%arg0: i32, %arg1: i32) -> (i32, i32) {
    %c0_i32 = arith.constant 0 : i32
    %c0_i32_0 = arith.constant 0 : i32
    return %arg0, %c0_i32 : i32, i32
  }
  func.func @transform_1(%arg0: i32, %arg1: i32) -> (i32, i32) {
    %c0_i32 = arith.constant 0 : i32
    %c0_i32_0 = arith.constant 0 : i32
    return %arg0, %c0_i32 : i32, i32
  }
  func.func @transform_2(%arg0: i32, %arg1: i32) -> (i32, i32, i32) {
    %c0_i32 = arith.constant 0 : i32
    %c0_i32_0 = arith.constant 0 : i32
    return %arg0, %arg1, %c0_i32 : i32, i32, i32
  }
  func.func @transform_3(%arg0: i32, %arg1: i32) -> (i32, i32, i32) {
    %c0_i32 = arith.constant 0 : i32
    %c0_i32_0 = arith.constant 0 : i32
    %c0_i32_1 = arith.constant 0 : i32
    return %arg0, %c0_i32, %c0_i32_0 : i32, i32, i32
  }
}

</mosaic_0001>

<llo_original>
// kernel: tpu_custom_call.1
$region0: #{tpu_custom_call.1}
  #allocation0 [shape = 'u32[]', space=smem, size = 0x4, offset = 0x4, fixed_abs, tag = 'smem constant byte address 0x4 - core index']
  #allocation1 [shape = 'u32[144,128]{1,0:T(1,128)}', space=vmem, size = 0x12000, scoped, tag = 'internal scratch']
  #allocation2 [shape = 'f32[8,1]{1,0:T(8,128)}', space=vmem, size = 0x1000, scoped, tag = 'scratch operand']
  #allocation3 [shape = 'f32[8,1]{1,0:T(8,128)}', space=vmem, size = 0x1000, scoped, tag = 'scratch operand']
  #allocation4 [shape = 'f32[8,1]{1,0:T(8,128)}', space=vmem, size = 0x1000, scoped, tag = 'scratch operand']
  #allocation5 [shape = 'f32[8,1]{1,0:T(8,128)}', space=vmem, size = 0x1000, scoped, tag = 'scratch operand']
  %s0 = inlined_call_operand.hbm [shape: f32[8,32], index: 0, kind: input, shape index: {}]
  %s1 = inlined_call_operand.hbm [shape: f32[8,32], index: 1, kind: input, shape index: {}]
  %s2 = inlined_call_operand.hbm [shape: f32[8,8,32], index: 2, kind: input, shape index: {}]
  %s3 = inlined_call_operand.hbm [shape: f32[1,1,1], index: 3, kind: output, shape index: {}]
  %s4 = sld [smem:[#allocation0]]
  $region42: #{tpu_custom_call.1} parent=0
    _
  %s6 = ssub.s32 1, %s4
  %s7 = scalar_select 0, %s6, %s4
  $region1: #{tpu_custom_call.1} parent=0
    #allocation6 [shape = 'u8[4096]{0}', space=vmem, size = 0x1000, scoped, tag = 'input window, operand 0, single buffered']
    #allocation7 [shape = 's32[1]{0}', space=sflag, size = 0x4, scoped, tag = 'scoped memory for tpu_custom_call.1']
    #allocation8 [shape = 's32[1]{0}', space=sflag, size = 0x4, scoped, tag = 'scoped memory for tpu_custom_call.1']
    #allocation9 [shape = 'u8[4096]{0}', space=vmem, size = 0x1000, scoped, tag = 'input window, operand 1, single buffered']
    #allocation10 [shape = 's32[1]{0}', space=sflag, size = 0x4, scoped, tag = 'scoped memory for tpu_custom_call.1']
    #allocation11 [shape = 'u8[32768]{0}', space=vmem, size = 0x8000, scoped, tag = 'input window, operand 2, single buffered']
    #allocation12 [shape = 'u8[512]{0}', space=vmem, size = 0x400, scoped, tag = 'output window, operand 0, single buffered']
    %8 = vsyncpa [#allocation7], 0
    %9 = vsyncpa [#allocation10], 0
    %10 = vsyncpa [#allocation8], 0
    // Predicated region
    $region2: #{tpu_custom_call.1} parent=1 // pred_check
      _
    $region3: #{tpu_custom_call.1} parent=1 // pred_check_branch
      %12 = sbr.rel (0) target = $region5
    $region4: #{tpu_custom_call.1} parent=1 // pred_region
      %s14 = ssub.s32 128, 128
      %15 = vsyncadd [#allocation7], %s14
      %s17 = sshll.u32 [#allocation6], 4
      %s18 = int_to_ptr.vmem [resolvable:$true] %s17
      %20 = dma.hbm_to_vmem [thread:$0]  %s0, 128, %s18, [#allocation7]
    $region5: #{tpu_custom_call.1} parent=1 // pred_fallthru
      _
    // Predicated region
    $region6: #{tpu_custom_call.1} parent=1 // pred_check
      _
    $region7: #{tpu_custom_call.1} parent=1 // pred_check_branch
      %22 = sbr.rel (0) target = $region9
    $region8: #{tpu_custom_call.1} parent=1 // pred_region
      %s24 = ssub.s32 128, 128
      %25 = vsyncadd [#allocation10], %s24
      %s27 = sshll.u32 [#allocation9], 4
      %s28 = int_to_ptr.vmem [resolvable:$true] %s27
      %30 = dma.hbm_to_vmem [thread:$0]  %s1, 128, %s28, [#allocation10]
    $region9: #{tpu_custom_call.1} parent=1 // pred_fallthru
      _
    // Predicated region
    $region10: #{tpu_custom_call.1} parent=1 // pred_check
      _
    $region11: #{tpu_custom_call.1} parent=1 // pred_check_branch
      %32 = sbr.rel (0) target = $region13
    $region12: #{tpu_custom_call.1} parent=1 // pred_region
      %s34 = ssub.s32 1024, 1024
      %35 = vsyncadd [#allocation10], %s34
      %s36 = sshll.u32 [#allocation11], 4
      %s37 = int_to_ptr.vmem [resolvable:$true] %s36
      %42 = dma.hbm_to_vmem [thread:$0]  %s2, 1024, %s37, [#allocation10], 128, 128, 8
    $region13: #{tpu_custom_call.1} parent=1 // pred_fallthru
      _
    // Predicated region
    $region14: #{tpu_custom_call.1} parent=1 // pred_check
      _
    $region15: #{tpu_custom_call.1} parent=1 // pred_check_branch
      %44 = sbr.rel (0) target = $region17
    $region16: #{tpu_custom_call.1} parent=1 // pred_region
      %45 = dma.done [#allocation7], 128
    $region17: #{tpu_custom_call.1} parent=1 // pred_fallthru
      _
    // Predicated region
    $region18: #{tpu_custom_call.1} parent=1 // pred_check
      _
    $region19: #{tpu_custom_call.1} parent=1 // pred_check_branch
      %47 = sbr.rel (0) target = $region21
    $region20: #{tpu_custom_call.1} parent=1 // pred_region
      %48 = dma.done [#allocation10], 128
    $region21: #{tpu_custom_call.1} parent=1 // pred_fallthru
      _
    // Predicated region
    $region22: #{tpu_custom_call.1} parent=1 // pred_check
      _
    $region23: #{tpu_custom_call.1} parent=1 // pred_check_branch
      %50 = sbr.rel (0) target = $region25
    $region24: #{tpu_custom_call.1} parent=1 // pred_region
      %51 = dma.done [#allocation10], 1024
    $region25: #{tpu_custom_call.1} parent=1 // pred_fallthru
      _
    %p52 = scmp.eq.s32.totalorder 0, 0
    // Predicated region
    $region26: #{tpu_custom_call.1} parent=1 // pred_check
      %p53 = pneg %p52
    $region27: #{tpu_custom_call.1} parent=1 // pred_check_branch
      %55 = sbr.rel (%p53) target = $region29
    $region28: #{tpu_custom_call.1} parent=1 // pred_region
      %v56 = vld [vmem:[#allocation6] sm:$0xff]
      %v57 = vld [vmem:[#allocation9] sm:$0xff]
      %v58 = vmul.f32 %v56, %v56
      %vm59 = vcmask 261120
      %v60 = vsel %vm59, %v58, 0.0
      %61 = vadd.xlane.f32.xlu0 %v60
      %v62 = vpop.xlane.xlu0 %61
      %v63 = vmul.f32 %v57, %v57
      %v64 = vsel %vm59, %v63, 0.0
      %65 = vadd.xlane.f32.xlu0 %v64
      %v66 = vpop.xlane.xlu0 %65
      %v67 = vmul.f32 %v56, %v57
      %v68 = vsel %vm59, %v67, 0.0
      %69 = vadd.xlane.f32.xlu0 %v68
      %v70 = vpop.xlane.xlu0 %69
      %v71 = vmax.f32 %v62, 1e-24
      %v72 = vrsqrt.pop %v71
      %v73 = vmax.f32 %v66, 1e-24
      %v74 = vrsqrt.pop %v73
      %v75 = vmul.f32 %v70, %v72
      %v76 = vmul.f32 %v75, %v74
      %v77 = vmul.f32 %v76, 2.0
      %vm78 = vcmask 7168
      %79 = vst.msk [vmem:[#allocation4] sm:$0xff] %vm78, %v77
      %v80 = vmul.f32 %v72, 2.0
      %81 = vst.msk [vmem:[#allocation5] sm:$0xff] %vm78, %v80
      %82 = vst.msk [vmem:[#allocation2] sm:$0xff] %vm78, %v77
      %83 = vst.msk [vmem:[#allocation3] sm:$0xff] %vm78, 1.0
    $region29: #{tpu_custom_call.1} parent=1 // pred_fallthru
      _
    %v84 = vld [vmem:[#allocation11] sm:$0xff]
    %v85 = vld [vmem:[#allocation11 + $0x8] sm:$0xff]
    %v86 = vld [vmem:[#allocation11 + $0x10] sm:$0xff]
    %v87 = vld [vmem:[#allocation11 + $0x18] sm:$0xff]
    %v88 = vld [vmem:[#allocation11 + $0x20] sm:$0xff]
    %v89 = vld [vmem:[#allocation11 + $0x28] sm:$0xff]
    %v90 = vld [vmem:[#allocation11 + $0x30] sm:$0xff]
    %v91 = vld [vmem:[#allocation11 + $0x38] sm:$0xff]
    %v92 = vld [vmem:[#allocation6] sm:$0xff]
    %v94 = vcombine.high %v92, %v92
    %v96 = vunpack.c.l.s4 1966171168
    %v97 = vunpack.c.0.s8 %v96
    %v98 = vlaneseq
    %v99 = vshrl.u32 %v98, 7
    %v100 = vsub.s32 %v97, %v99
    %v101 = vrot.slane %v92, %v100
    %v103 = vunpack.c.l.s4 1966171168
    %v104 = vunpack.c.0.s8 %v103
    %v105 = vlaneseq
    %v106 = vshrl.u32 %v105, 7
    %v107 = vsub.s32 %v104, %v106
    %v108 = vrot.slane %v94, %v107
    %v109 = vcombine.high %v101, %v101
    %v110 = vcombine.high %v108, %v108
    %v112 = vunpack.c.l.s4 1966171168
    %v113 = vunpack.c.0.s8 %v112
    %v114 = vlaneseq
    %v115 = vshrl.u32 %v114, 7
    %v116 = vsub.s32 %v113, %v115
    %v117 = vrot.slane %v101, %v116
    %v119 = vunpack.c.l.s4 1966171168
    %v120 = vunpack.c.0.s8 %v119
    %v121 = vlaneseq
    %v122 = vshrl.u32 %v121, 7
    %v123 = vsub.s32 %v120, %v122
    %v124 = vrot.slane %v108, %v123
    %v126 = vunpack.c.l.s4 1966171168
    %v127 = vunpack.c.0.s8 %v126
    %v128 = vlaneseq
    %v129 = vshrl.u32 %v128, 7
    %v130 = vsub.s32 %v127, %v129
    %v131 = vrot.slane %v109, %v130
    %v133 = vunpack.c.l.s4 1966171168
    %v134 = vunpack.c.0.s8 %v133
    %v135 = vlaneseq
    %v136 = vshrl.u32 %v135, 7
    %v137 = vsub.s32 %v134, %v136
    %v138 = vrot.slane %v110, %v137
    %v139 = vcombine.high %v117, %v117
    %v140 = vcombine.high %v124, %v124
    %v141 = vcombine.high %v131, %v131
    %v142 = vcombine.high %v138, %v138
    %vm143 = vcmask 261120
    %v144 = vsel %vm143, %v117, 0
    %v147 = vsel %vm143, %v84, 0
    %149 = vmatprep.subr.mxu0 0.0
    %v150 = vand.u32 %v147, 4294901760
    %151 = vmatpush1.xpose.msra.mxu0 %v150
    %152 = vmatprep.subr.mxu0 0.0
    %153 = vmatpush1.xpose.msra.mxu0 0.0
    %154 = vmatprep.subr.mxu0 0.0
    %155 = vmatpush1.xpose.msra.mxu0 0.0
    %156 = vmatprep.subr.mxu0 0.0
    %157 = vmatpush1.xpose.msra.mxu0 0.0
    %158 = vmatprep.subr.mxu0 0.0
    %159 = vmatpush1.xpose.msra.mxu0 0.0
    %160 = vmatprep.subr.mxu0 0.0
    %161 = vmatpush1.xpose.msra.mxu0 0.0
    %162 = vmatprep.subr.mxu0 0.0
    %163 = vmatpush1.xpose.msra.mxu0 0.0
    %164 = vmatprep.subr.mxu0 0.0
    %165 = vmatpush1.xpose.msra.mxu0 0.0
    %166 = vmatprep.subr.mxu0 0.0
    %167 = vmatpush1.xpose.msra.mxu0 0.0
    %168 = vmatprep.subr.mxu0 0.0
    %169 = vmatpush1.xpose.msra.mxu0 0.0
    %170 = vmatprep.subr.mxu0 0.0
    %171 = vmatpush1.xpose.msra.mxu0 0.0
    %172 = vmatprep.subr.mxu0 0.0
    %173 = vmatpush1.xpose.msra.mxu0 0.0
    %174 = vmatprep.subr.mxu0 0.0
    %175 = vmatpush1.xpose.msra.mxu0 0.0
    %176 = vmatprep.subr.mxu0 0.0
    %177 = vmatpush1.xpose.msra.mxu0 0.0
    %178 = vmatprep.subr.mxu0 0.0
    %179 = vmatpush1.xpose.msra.mxu0 0.0
    %180 = vmatprep.subr.mxu0 0.0
    %181 = vmatpush1.xpose.msra.mxu0 0.0
    %182 = vmatprep.subr.mxu0 0.0
    %183 = vmatpush1.xpose.msra.mxu0 0.0
    %184 = vmatprep.subr.mxu0 0.0
    %185 = vmatpush1.xpose.msra.mxu0 0.0
    %186 = vmatprep.subr.mxu0 0.0
    %187 = vmatpush1.xpose.msra.mxu0 0.0
    %188 = vmatprep.subr.mxu0 0.0
    %189 = vmatpush1.xpose.msra.mxu0 0.0
    %190 = vmatprep.subr.mxu0 0.0
    %191 = vmatpush1.xpose.msra.mxu0 0.0
    %192 = vmatprep.subr.mxu0 0.0
    %193 = vmatpush1.xpose.msra.mxu0 0.0
    %194 = vmatprep.subr.mxu0 0.0
    %195 = vmatpush1.xpose.msra.mxu0 0.0
    %196 = vmatprep.subr.mxu0 0.0
    %197 = vmatpush1.xpose.msra.mxu0 0.0
    %198 = vmatprep.subr.mxu0 0.0
    %199 = vmatpush1.xpose.msra.mxu0 0.0
    %200 = vmatprep.subr.mxu0 0.0
    %201 = vmatpush1.xpose.msra.mxu0 0.0
    %202 = vmatprep.subr.mxu0 0.0
    %203 = vmatpush1.xpose.msra.mxu0 0.0
    %204 = vmatprep.subr.mxu0 0.0
    %205 = vmatpush1.xpose.msra.mxu0 0.0
    %206 = vmatprep.subr.mxu0 0.0
    %207 = vmatpush1.xpose.msra.mxu0 0.0
    %208 = vmatprep.subr.mxu0 0.0
    %209 = vmatpush1.xpose.msra.mxu0 0.0
    %210 = vmatprep.subr.mxu0 0.0
    %211 = vmatpush1.xpose.msra.mxu0 0.0
    %212 = vmatprep.subr.mxu0 0.0
    %213 = vmatpush1.xpose.msra.mxu0 0.0
    %214 = vmatprep.mubr.f32.mxu0 0.0
    %v215 = vand.u32 %v144, 4294901760
    %v216 = vsub.f32 %v144, %v215
    %v217 = vand.u32 %v216, 4294901760
    %v218 = vsub.f32 %v216, %v217
    %v219 = vand.u32 %v218, 4294901760
    %220 = vmatmul.mubr.f32.gmra.mrb[0].mxu0 %v219
    %v221 = vpop.f32.mrb[0].mxu0
    %v222 = vadd.f32 0.0, %v221
    %v223 = vpop.f32.mrb[0].mxu0
    %224 = vdwg.mxu0
    %225 = vmatprep.subr.mxu0 0.0
    %v226 = vand.u32 %v147, 4294901760
    %v227 = vsub.f32 %v147, %v226
    %v228 = vand.u32 %v227, 4294901760
    %v229 = vsub.f32 %v227, %v228
    %v230 = vand.u32 %v229, 4294901760
    %231 = vmatpush1.xpose.msra.mxu0 %v230
    %232 = vmatprep.subr.mxu0 0.0
    %233 = vmatpush1.xpose.msra.mxu0 0.0
    %234 = vmatprep.subr.mxu0 0.0
    %235 = vmatpush1.xpose.msra.mxu0 0.0
    %236 = vmatprep.subr.mxu0 0.0
    %237 = vmatpush1.xpose.msra.mxu0 0.0
    %238 = vmatprep.subr.mxu0 0.0
    %239 = vmatpush1.xpose.msra.mxu0 0.0
    %240 = vmatprep.subr.mxu0 0.0
    %241 = vmatpush1.xpose.msra.mxu0 0.0
    %242 = vmatprep.subr.mxu0 0.0
    %243 = vmatpush1.xpose.msra.mxu0 0.0
    %244 = vmatprep.subr.mxu0 0.0
    %245 = vmatpush1.xpose.msra.mxu0 0.0
    %246 = vmatprep.subr.mxu0 0.0
    %247 = vmatpush1.xpose.msra.mxu0 0.0
    %248 = vmatprep.subr.mxu0 0.0
    %249 = vmatpush1.xpose.msra.mxu0 0.0
    %250 = vmatprep.subr.mxu0 0.0
    %251 = vmatpush1.xpose.msra.mxu0 0.0
    %252 = vmatprep.subr.mxu0 0.0
    %253 = vmatpush1.xpose.msra.mxu0 0.0
    %254 = vmatprep.subr.mxu0 0.0
    %255 = vmatpush1.xpose.msra.mxu0 0.0
    %256 = vmatprep.subr.mxu0 0.0
    %257 = vmatpush1.xpose.msra.mxu0 0.0
    %258 = vmatprep.subr.mxu0 0.0
    %259 = vmatpush1.xpose.msra.mxu0 0.0
    %260 = vmatprep.subr.mxu0 0.0
    %261 = vmatpush1.xpose.msra.mxu0 0.0
    %262 = vmatprep.subr.mxu0 0.0
    %263 = vmatpush1.xpose.msra.mxu0 0.0
    %264 = vmatprep.subr.mxu0 0.0
    %265 = vmatpush1.xpose.msra.mxu0 0.0
    %266 = vmatprep.subr.mxu0 0.0
    %267 = vmatpush1.xpose.msra.mxu0 0.0
    %268 = vmatprep.subr.mxu0 0.0
    %269 = vmatpush1.xpose.msra.mxu0 0.0
    %270 = vmatprep.subr.mxu0 0.0
    %271 = vmatpush1.xpose.msra.mxu0 0.0
    %272 = vmatprep.subr.mxu0 0.0
    %273 = vmatpush1.xpose.msra.mxu0 0.0
    %274 = vmatprep.subr.mxu0 0.0
    %275 = vmatpush1.xpose.msra.mxu0 0.0
    %276 = vmatprep.subr.mxu0 0.0
    %277 = vmatpush1.xpose.msra.mxu0 0.0
    %278 = vmatprep.subr.mxu0 0.0
    %279 = vmatpush1.xpose.msra.mxu0 0.0
    %280 = vmatprep.subr.mxu0 0.0
    %281 = vmatpush1.xpose.msra.mxu0 0.0
    %282 = vmatprep.subr.mxu0 0.0
    %283 = vmatpush1.xpose.msra.mxu0 0.0
    %284 = vmatprep.subr.mxu0 0.0
    %285 = vmatpush1.xpose.msra.mxu0 0.0
    %286 = vmatprep.subr.mxu0 0.0
    %287 = vmatpush1.xpose.msra.mxu0 0.0
    %288 = vmatprep.subr.mxu0 0.0
    %289 = vmatpush1.xpose.msra.mxu0 0.0
    %290 = vmatprep.subr.mxu0 0.0
    %291 = vmatpush1.xpose.msra.mxu0 0.0
    %292 = vmatprep.subr.mxu0 0.0
    %293 = vmatpush1.xpose.msra.mxu0 0.0
    %294 = vmatprep.mubr.f32.mxu0 0.0
    %v295 = vand.u32 %v144, 4294901760
    %296 = vmatmul.mubr.f32.gmra.mrb[0].mxu0 %v295
    %v297 = vpop.f32.mrb[0].mxu0
    %v298 = vadd.f32 %v222, %v297
    %v299 = vpop.f32.mrb[0].mxu0
    %300 = vdwg.mxu0
    %301 = vmatprep.subr.mxu0 0.0
    %v302 = vand.u32 %v147, 4294901760
    %v303 = vsub.f32 %v147, %v302
    %304 = vmatpush1.xpose.msra.mxu0 %v303
    %305 = vmatprep.subr.mxu0 0.0
    %306 = vmatpush1.xpose.msra.mxu0 0.0
    %307 = vmatprep.subr.mxu0 0.0
    %308 = vmatpush1.xpose.msra.mxu0 0.0
    %309 = vmatprep.subr.mxu0 0.0
    %310 = vmatpush1.xpose.msra.mxu0 0.0
    %311 = vmatprep.subr.mxu0 0.0
    %312 = vmatpush1.xpose.msra.mxu0 0.0
    %313 = vmatprep.subr.mxu0 0.0
    %314 = vmatpush1.xpose.msra.mxu0 0.0
    %315 = vmatprep.subr.mxu0 0.0
    %316 = vmatpush1.xpose.msra.mxu0 0.0
    %317 = vmatprep.subr.mxu0 0.0
    %318 = vmatpush1.xpose.msra.mxu0 0.0
    %319 = vmatprep.subr.mxu0 0.0
    %320 = vmatpush1.xpose.msra.mxu0 0.0
    %321 = vmatprep.subr.mxu0 0.0
    %322 = vmatpush1.xpose.msra.mxu0 0.0
    %323 = vmatprep.subr.mxu0 0.0
    %324 = vmatpush1.xpose.msra.mxu0 0.0
    %325 = vmatprep.subr.mxu0 0.0
    %326 = vmatpush1.xpose.msra.mxu0 0.0
    %327 = vmatprep.subr.mxu0 0.0
    %328 = vmatpush1.xpose.msra.mxu0 0.0
    %329 = vmatprep.subr.mxu0 0.0
    %330 = vmatpush1.xpose.msra.mxu0 0.0
    %331 = vmatprep.subr.mxu0 0.0
    %332 = vmatpush1.xpose.msra.mxu0 0.0
    %333 = vmatprep.subr.mxu0 0.0
    %334 = vmatpush1.xpose.msra.mxu0 0.0
    %335 = vmatprep.subr.mxu0 0.0
    %336 = vmatpush1.xpose.msra.mxu0 0.0
    %337 = vmatprep.subr.mxu0 0.0
    %338 = vmatpush1.xpose.msra.mxu0 0.0
    %339 = vmatprep.subr.mxu0 0.0
    %340 = vmatpush1.xpose.msra.mxu0 0.0
    %341 = vmatprep.subr.mxu0 0.0
    %342 = vmatpush1.xpose.msra.mxu0 0.0
    %343 = vmatprep.subr.mxu0 0.0
    %344 = vmatpush1.xpose.msra.mxu0 0.0
    %345 = vmatprep.subr.mxu0 0.0
    %346 = vmatpush1.xpose.msra.mxu0 0.0
    %347 = vmatprep.subr.mxu0 0.0
    %348 = vmatpush1.xpose.msra.mxu0 0.0
    %349 = vmatprep.subr.mxu0 0.0
    %350 = vmatpush1.xpose.msra.mxu0 0.0
    %351 = vmatprep.subr.mxu0 0.0
    %352 = vmatpush1.xpose.msra.mxu0 0.0
    %353 = vmatprep.subr.mxu0 0.0
    %354 = vmatpush1.xpose.msra.mxu0 0.0
    %355 = vmatprep.subr.mxu0 0.0
    %356 = vmatpush1.xpose.msra.mxu0 0.0
    %357 = vmatprep.subr.mxu0 0.0
    %358 = vmatpush1.xpose.msra.mxu0 0.0
    %359 = vmatprep.subr.mxu0 0.0
    %360 = vmatpush1.xpose.msra.mxu0 0.0
    %361 = vmatprep.subr.mxu0 0.0
    %362 = vmatpush1.xpose.msra.mxu0 0.0
    %363 = vmatprep.subr.mxu0 0.0
    %364 = vmatpush1.xpose.msra.mxu0 0.0
    %365 = vmatprep.subr.mxu0 0.0
    %366 = vmatpush1.xpose.msra.mxu0 0.0
    %367 = vmatprep.mubr.f32.mxu0 0.0
    %v368 = vand.u32 %v144, 4294901760
    %v369 = vsub.f32 %v144, %v368
    %370 = vmatmul.mubr.f32.gmra.mrb[0].mxu0 %v369
    %v371 = vpop.f32.mrb[0].mxu0
    %v372 = vadd.f32 %v298, %v371
    %v373 = vpop.f32.mrb[0].mxu0
    %374 = vdwg.mxu0
    %375 = vmatprep.subr.mxu0 0.0
    %v376 = vand.u32 %v147, 4294901760
    %377 = vmatpush1.xpose.msra.mxu0 %v376
    %378 = vmatprep.subr.mxu0 0.0
    %379 = vmatpush1.xpose.msra.mxu0 0.0
    %380 = vmatprep.subr.mxu0 0.0
    %381 = vmatpush1.xpose.msra.mxu0 0.0
    %382 = vmatprep.subr.mxu0 0.0
    %383 = vmatpush1.xpose.msra.mxu0 0.0
    %384 = vmatprep.subr.mxu0 0.0
    %385 = vmatpush1.xpose.msra.mxu0 0.0
    %386 = vmatprep.subr.mxu0 0.0
    %387 = vmatpush1.xpose.msra.mxu0 0.0
    %388 = vmatprep.subr.mxu0 0.0
    %389 = vmatpush1.xpose.msra.mxu0 0.0
    %390 = vmatprep.subr.mxu0 0.0
    %391 = vmatpush1.xpose.msra.mxu0 0.0
    %392 = vmatprep.subr.mxu0 0.0
    %393 = vmatpush1.xpose.msra.mxu0 0.0
    %394 = vmatprep.subr.mxu0 0.0
    %395 = vmatpush1.xpose.msra.mxu0 0.0
    %396 = vmatprep.subr.mxu0 0.0
    %397 = vmatpush1.xpose.msra.mxu0 0.0
    %398 = vmatprep.subr.mxu0 0.0
    %399 = vmatpush1.xpose.msra.mxu0 0.0
    %400 = vmatprep.subr.mxu0 0.0
    %401 = vmatpush1.xpose.msra.mxu0 0.0
    %402 = vmatprep.subr.mxu0 0.0
    %403 = vmatpush1.xpose.msra.mxu0 0.0
    %404 = vmatprep.subr.mxu0 0.0
    %405 = vmatpush1.xpose.msra.mxu0 0.0
    %406 = vmatprep.subr.mxu0 0.0
    %407 = vmatpush1.xpose.msra.mxu0 0.0
    %408 = vmatprep.subr.mxu0 0.0
    %409 = vmatpush1.xpose.msra.mxu0 0.0
    %410 = vmatprep.subr.mxu0 0.0
    %411 = vmatpush1.xpose.msra.mxu0 0.0
    %412 = vmatprep.subr.mxu0 0.0
    %413 = vmatpush1.xpose.msra.mxu0 0.0
    %414 = vmatprep.subr.mxu0 0.0
    %415 = vmatpush1.xpose.msra.mxu0 0.0
    %416 = vmatprep.subr.mxu0 0.0
    %417 = vmatpush1.xpose.msra.mxu0 0.0
    %418 = vmatprep.subr.mxu0 0.0
    %419 = vmatpush1.xpose.msra.mxu0 0.0
    %420 = vmatprep.subr.mxu0 0.0
    %421 = vmatpush1.xpose.msra.mxu0 0.0
    %422 = vmatprep.subr.mxu0 0.0
    %423 = vmatpush1.xpose.msra.mxu0 0.0
    %424 = vmatprep.subr.mxu0 0.0
    %425 = vmatpush1.xpose.msra.mxu0 0.0
    %426 = vmatprep.subr.mxu0 0.0
    %427 = vmatpush1.xpose.msra.mxu0 0.0
    %428 = vmatprep.subr.mxu0 0.0
    %429 = vmatpush1.xpose.msra.mxu0 0.0
    %430 = vmatprep.subr.mxu0 0.0
    %431 = vmatpush1.xpose.msra.mxu0 0.0
    %432 = vmatprep.subr.mxu0 0.0
    %433 = vmatpush1.xpose.msra.mxu0 0.0
    %434 = vmatprep.subr.mxu0 0.0
    %435 = vmatpush1.xpose.msra.mxu0 0.0
    %436 = vmatprep.subr.mxu0 0.0
    %437 = vmatpush1.xpose.msra.mxu0 0.0
    %438 = vmatprep.subr.mxu0 0.0
    %439 = vmatpush1.xpose.msra.mxu0 0.0
    %440 = vmatprep.mubr.f32.mxu0 0.0
    %v441 = vand.u32 %v144, 4294901760
    %v442 = vsub.f32 %v144, %v441
    %v443 = vand.u32 %v442, 4294901760
    %444 = vmatmul.mubr.f32.gmra.mrb[0].mxu0 %v443
    %v445 = vpop.f32.mrb[0].mxu0
    %v446 = vadd.f32 %v372, %v445
    %v447 = vpop.f32.mrb[0].mxu0
    %448 = vdwg.mxu0
    %449 = vmatprep.subr.mxu0 0.0
    %v450 = vand.u32 %v147, 4294901760
    %v451 = vsub.f32 %v147, %v450
    %v452 = vand.u32 %v451, 4294901760
    %453 = vmatpush1.xpose.msra.mxu0 %v452
    %454 = vmatprep.subr.mxu0 0.0
    %455 = vmatpush1.xpose.msra.mxu0 0.0
    %456 = vmatprep.subr.mxu0 0.0
    %457 = vmatpush1.xpose.msra.mxu0 0.0
    %458 = vmatprep.subr.mxu0 0.0
    %459 = vmatpush1.xpose.msra.mxu0 0.0
    %460 = vmatprep.subr.mxu0 0.0
    %461 = vmatpush1.xpose.msra.mxu0 0.0
    %462 = vmatprep.subr.mxu0 0.0
    %463 = vmatpush1.xpose.msra.mxu0 0.0
    %464 = vmatprep.subr.mxu0 0.0
    %465 = vmatpush1.xpose.msra.mxu0 0.0
    %466 = vmatprep.subr.mxu0 0.0
    %467 = vmatpush1.xpose.msra.mxu0 0.0
    %468 = vmatprep.subr.mxu0 0.0
    %469 = vmatpush1.xpose.msra.mxu0 0.0
    %470 = vmatprep.subr.mxu0 0.0
    %471 = vmatpush1.xpose.msra.mxu0 0.0
    %472 = vmatprep.subr.mxu0 0.0
    %473 = vmatpush1.xpose.msra.mxu0 0.0
    %474 = vmatprep.subr.mxu0 0.0
    %475 = vmatpush1.xpose.msra.mxu0 0.0
    %476 = vmatprep.subr.mxu0 0.0
    %477 = vmatpush1.xpose.msra.mxu0 0.0
    %478 = vmatprep.subr.mxu0 0.0
    %479 = vmatpush1.xpose.msra.mxu0 0.0
    %480 = vmatprep.subr.mxu0 0.0
    %481 = vmatpush1.xpose.msra.mxu0 0.0
    %482 = vmatprep.subr.mxu0 0.0
    %483 = vmatpush1.xpose.msra.mxu0 0.0
    %484 = vmatprep.subr.mxu0 0.0
    %485 = vmatpush1.xpose.msra.mxu0 0.0
    %486 = vmatprep.subr.mxu0 0.0
    %487 = vmatpush1.xpose.msra.mxu0 0.0
    %488 = vmatprep.subr.mxu0 0.0
    %489 = vmatpush1.xpose.msra.mxu0 0.0
    %490 = vmatprep.subr.mxu0 0.0
    %491 = vmatpush1.xpose.msra.mxu0 0.0
    %492 = vmatprep.subr.mxu0 0.0
    %493 = vmatpush1.xpose.msra.mxu0 0.0
    %494 = vmatprep.subr.mxu0 0.0
    %495 = vmatpush1.xpose.msra.mxu0 0.0
    %496 = vmatprep.subr.mxu0 0.0
    %497 = vmatpush1.xpose.msra.mxu0 0.0
    %498 = vmatprep.subr.mxu0 0.0
    %499 = vmatpush1.xpose.msra.mxu0 0.0
    %500 = vmatprep.subr.mxu0 0.0
    %501 = vmatpush1.xpose.msra.mxu0 0.0
    %502 = vmatprep.subr.mxu0 0.0
    %503 = vmatpush1.xpose.msra.mxu0 0.0
    %504 = vmatprep.subr.mxu0 0.0
    %505 = vmatpush1.xpose.msra.mxu0 0.0
    %506 = vmatprep.subr.mxu0 0.0
    %507 = vmatpush1.xpose.msra.mxu0 0.0
    %508 = vmatprep.subr.mxu0 0.0
    %509 = vmatpush1.xpose.msra.mxu0 0.0
    %510 = vmatprep.subr.mxu0 0.0
    %511 = vmatpush1.xpose.msra.mxu0 0.0
    %512 = vmatprep.subr.mxu0 0.0
    %513 = vmatpush1.xpose.msra.mxu0 0.0
    %514 = vmatprep.subr.mxu0 0.0
    %515 = vmatpush1.xpose.msra.mxu0 0.0
    %516 = vmatprep.mubr.f32.mxu0 0.0
    %v517 = vand.u32 %v144, 4294901760
    %518 = vmatmul.mubr.f32.gmra.mrb[0].mxu0 %v517
    %v519 = vpop.f32.mrb[0].mxu0
    %v520 = vadd.f32 %v446, %v519
    %v521 = vpop.f32.mrb[0].mxu0
    %522 = vdwg.mxu0
    %523 = vmatprep.subr.mxu0 0.0
    %v524 = vand.u32 %v147, 4294901760
    %525 = vmatpush1.xpose.msra.mxu0 %v524
    %526 = vmatprep.subr.mxu0 0.0
    %527 = vmatpush1.xpose.msra.mxu0 0.0
    %528 = vmatprep.subr.mxu0 0.0
    %529 = vmatpush1.xpose.msra.mxu0 0.0
    %530 = vmatprep.subr.mxu0 0.0
    %531 = vmatpush1.xpose.msra.mxu0 0.0
    %532 = vmatprep.subr.mxu0 0.0
    %533 = vmatpush1.xpose.msra.mxu0 0.0
    %534 = vmatprep.subr.mxu0 0.0
    %535 = vmatpush1.xpose.msra.mxu0 0.0
    %536 = vmatprep.subr.mxu0 0.0
    %537 = vmatpush1.xpose.msra.mxu0 0.0
    %538 = vmatprep.subr.mxu0 0.0
    %539 = vmatpush1.xpose.msra.mxu0 0.0
    %540 = vmatprep.subr.mxu0 0.0
    %541 = vmatpush1.xpose.msra.mxu0 0.0
    %542 = vmatprep.subr.mxu0 0.0
    %543 = vmatpush1.xpose.msra.mxu0 0.0
    %544 = vmatprep.subr.mxu0 0.0
    %545 = vmatpush1.xpose.msra.mxu0 0.0
    %546 = vmatprep.subr.mxu0 0.0
    %547 = vmatpush1.xpose.msra.mxu0 0.0
    %548 = vmatprep.subr.mxu0 0.0
    %549 = vmatpush1.xpose.msra.mxu0 0.0
    %550 = vmatprep.subr.mxu0 0.0
    %551 = vmatpush1.xpose.msra.mxu0 0.0
    %552 = vmatprep.subr.mxu0 0.0
    %553 = vmatpush1.xpose.msra.mxu0 0.0
    %554 = vmatprep.subr.mxu0 0.0
    %555 = vmatpush1.xpose.msra.mxu0 0.0
    %556 = vmatprep.subr.mxu0 0.0
    %557 = vmatpush1.xpose.msra.mxu0 0.0
    %558 = vmatprep.subr.mxu0 0.0
    %559 = vmatpush1.xpose.msra.mxu0 0.0
    %560 = vmatprep.subr.mxu0 0.0
    %561 = vmatpush1.xpose.msra.mxu0 0.0
    %562 = vmatprep.subr.mxu0 0.0
    %563 = vmatpush1.xpose.msra.mxu0 0.0
    %564 = vmatprep.subr.mxu0 0.0
    %565 = vmatpush1.xpose.msra.mxu0 0.0
    %566 = vmatprep.subr.mxu0 0.0
    %567 = vmatpush1.xpose.msra.mxu0 0.0
    %568 = vmatprep.subr.mxu0 0.0
    %569 = vmatpush1.xpose.msra.mxu0 0.0
    %570 = vmatprep.subr.mxu0 0.0
    %571 = vmatpush1.xpose.msra.mxu0 0.0
    %572 = vmatprep.subr.mxu0 0.0
    %573 = vmatpush1.xpose.msra.mxu0 0.0
    %574 = vmatprep.subr.mxu0 0.0
    %575 = vmatpush1.xpose.msra.mxu0 0.0
    %576 = vmatprep.subr.mxu0 0.0
    %577 = vmatpush1.xpose.msra.mxu0 0.0
    %578 = vmatprep.subr.mxu0 0.0
    %579 = vmatpush1.xpose.msra.mxu0 0.0
    %580 = vmatprep.subr.mxu0 0.0
    %581 = vmatpush1.xpose.msra.mxu0 0.0
    %582 = vmatprep.subr.mxu0 0.0
    %583 = vmatpush1.xpose.msra.mxu0 0.0
    %584 = vmatprep.subr.mxu0 0.0
    %585 = vmatpush1.xpose.msra.mxu0 0.0
    %586 = vmatprep.subr.mxu0 0.0
    %587 = vmatpush1.xpose.msra.mxu0 0.0
    %588 = vmatprep.mubr.f32.mxu0 0.0
    %v589 = vand.u32 %v144, 4294901760
    %590 = vmatmul.mubr.f32.gmra.mrb[0].mxu0 %v589
    %v591 = vpop.f32.mrb[0].mxu0
    %v592 = vadd.f32 %v520, %v591
    %v593 = vpop.f32.mrb[0].mxu0
    %594 = vdwg.mxu0
    %v595 = vsel %vm143, %v131, 0
    %v598 = vsel %vm143, %v85, 0
    %600 = vmatprep.subr.mxu0 0.0
    %v601 = vand.u32 %v598, 4294901760
    %602 = vmatpush1.xpose.msra.mxu0 %v601
    %603 = vmatprep.subr.mxu0 0.0
    %604 = vmatpush1.xpose.msra.mxu0 0.0
    %605 = vmatprep.subr.mxu0 0.0
    %606 = vmatpush1.xpose.msra.mxu0 0.0
    %607 = vmatprep.subr.mxu0 0.0
    %608 = vmatpush1.xpose.msra.mxu0 0.0
    %609 = vmatprep.subr.mxu0 0.0
    %610 = vmatpush1.xpose.msra.mxu0 0.0
    %611 = vmatprep.subr.mxu0 0.0
    %612 = vmatpush1.xpose.msra.mxu0 0.0
    %613 = vmatprep.subr.mxu0 0.0
    %614 = vmatpush1.xpose.msra.mxu0 0.0
    %615 = vmatprep.subr.mxu0 0.0
    %616 = vmatpush1.xpose.msra.mxu0 0.0
    %617 = vmatprep.subr.mxu0 0.0
    %618 = vmatpush1.xpose.msra.mxu0 0.0
    %619 = vmatprep.subr.mxu0 0.0
    %620 = vmatpush1.xpose.msra.mxu0 0.0
    %621 = vmatprep.subr.mxu0 0.0
    %622 = vmatpush1.xpose.msra.mxu0 0.0
    %623 = vmatprep.subr.mxu0 0.0
    %624 = vmatpush1.xpose.msra.mxu0 0.0
    %625 = vmatprep.subr.mxu0 0.0
    %626 = vmatpush1.xpose.msra.mxu0 0.0
    %627 = vmatprep.subr.mxu0 0.0
    %628 = vmatpush1.xpose.msra.mxu0 0.0
    %629 = vmatprep.subr.mxu0 0.0
    %630 = vmatpush1.xpose.msra.mxu0 0.0
    %631 = vmatprep.subr.mxu0 0.0
    %632 = vmatpush1.xpose.msra.mxu0 0.0
    %633 = vmatprep.subr.mxu0 0.0
    %634 = vmatpush1.xpose.msra.mxu0 0.0
    %635 = vmatprep.subr.mxu0 0.0
    %636 = vmatpush1.xpose.msra.mxu0 0.0
    %637 = vmatprep.subr.mxu0 0.0
    %638 = vmatpush1.xpose.msra.mxu0 0.0
    %639 = vmatprep.subr.mxu0 0.0
    %640 = vmatpush1.xpose.msra.mxu0 0.0
    %641 = vmatprep.subr.mxu0 0.0
    %642 = vmatpush1.xpose.msra.mxu0 0.0
    %643 = vmatprep.subr.mxu0 0.0
    %644 = vmatpush1.xpose.msra.mxu0 0.0
    %645 = vmatprep.subr.mxu0 0.0
    %646 = vmatpush1.xpose.msra.mxu0 0.0
    %647 = vmatprep.subr.mxu0 0.0
    %648 = vmatpush1.xpose.msra.mxu0 0.0
    %649 = vmatprep.subr.mxu0 0.0
    %650 = vmatpush1.xpose.msra.mxu0 0.0
    %651 = vmatprep.subr.mxu0 0.0
    %652 = vmatpush1.xpose.msra.mxu0 0.0
    %653 = vmatprep.subr.mxu0 0.0
    %654 = vmatpush1.xpose.msra.mxu0 0.0
    %655 = vmatprep.subr.mxu0 0.0
    %656 = vmatpush1.xpose.msra.mxu0 0.0
    %657 = vmatprep.subr.mxu0 0.0
    %658 = vmatpush1.xpose.msra.mxu0 0.0
    %659 = vmatprep.subr.mxu0 0.0
    %660 = vmatpush1.xpose.msra.mxu0 0.0
    %661 = vmatprep.subr.mxu0 0.0
    %662 = vmatpush1.xpose.msra.mxu0 0.0
    %663 = vmatprep.subr.mxu0 0.0
    %664 = vmatpush1.xpose.msra.mxu0 0.0
    %665 = vmatprep.mubr.f32.mxu0 0.0
    %v666 = vand.u32 %v595, 4294901760
    %v667 = vsub.f32 %v595, %v666
    %v668 = vand.u32 %v667, 4294901760
    %v669 = vsub.f32 %v667, %v668
    %v670 = vand.u32 %v669, 4294901760
    %671 = vmatmul.mubr.f32.gmra.mrb[0].mxu0 %v670
    %v672 = vpop.f32.mrb[0].mxu0
    %v673 = vadd.f32 0.0, %v672
    %v674 = vpop.f32.mrb[0].mxu0
    %675 = vdwg.mxu0
    %676 = vmatprep.subr.mxu0 0.0
    %v677 = vand.u32 %v598, 4294901760
    %v678 = vsub.f32 %v598, %v677
    %v679 = vand.u32 %v678, 4294901760
    %v680 = vsub.f32 %v678, %v679
    %v681 = vand.u32 %v680, 4294901760
    %682 = vmatpush1.xpose.msra.mxu0 %v681
    %683 = vmatprep.subr.mxu0 0.0
    %684 = vmatpush1.xpose.msra.mxu0 0.0
    %685 = vmatprep.subr.mxu0 0.0
    %686 = vmatpush1.xpose.msra.mxu0 0.0
    %687 = vmatprep.subr.mxu0 0.0
    %688 = vmatpush1.xpose.msra.mxu0 0.0
    %689 = vmatprep.subr.mxu0 0.0
    %690 = vmatpush1.xpose.msra.mxu0 0.0
    %691 = vmatprep.subr.mxu0 0.0
    %692 = vmatpush1.xpose.msra.mxu0 0.0
    %693 = vmatprep.subr.mxu0 0.0
    %694 = vmatpush1.xpose.msra.mxu0 0.0
    %695 = vmatprep.subr.mxu0 0.0
    %696 = vmatpush1.xpose.msra.mxu0 0.0
    %697 = vmatprep.subr.mxu0 0.0
    %698 = vmatpush1.xpose.msra.mxu0 0.0
    %699 = vmatprep.subr.mxu0 0.0
    %700 = vmatpush1.xpose.msra.mxu0 0.0
    %701 = vmatprep.subr.mxu0 0.0
    %702 = vmatpush1.xpose.msra.mxu0 0.0
    %703 = vmatprep.subr.mxu0 0.0
    %704 = vmatpush1.xpose.msra.mxu0 0.0
    %705 = vmatprep.subr.mxu0 0.0
    %706 = vmatpush1.xpose.msra.mxu0 0.0
    %707 = vmatprep.subr.mxu0 0.0
    %708 = vmatpush1.xpose.msra.mxu0 0.0
    %709 = vmatprep.subr.mxu0 0.0
    %710 = vmatpush1.xpose.msra.mxu0 0.0
    %711 = vmatprep.subr.mxu0 0.0
    %712 = vmatpush1.xpose.msra.mxu0 0.0
    %713 = vmatprep.subr.mxu0 0.0
    %714 = vmatpush1.xpose.msra.mxu0 0.0
    %715 = vmatprep.subr.mxu0 0.0
    %716 = vmatpush1.xpose.msra.mxu0 0.0
    %717 = vmatprep.subr.mxu0 0.0
    %718 = vmatpush1.xpose.msra.mxu0 0.0
    %719 = vmatprep.subr.mxu0 0.0
    %720 = vmatpush1.xpose.msra.mxu0 0.0
    %721 = vmatprep.subr.mxu0 0.0
    %722 = vmatpush1.xpose.msra.mxu0 0.0
    %723 = vmatprep.subr.mxu0 0.0
    %724 = vmatpush1.xpose.msra.mxu0 0.0
    %725 = vmatprep.subr.mxu0 0.0
    %726 = vmatpush1.xpose.msra.mxu0 0.0
    %727 = vmatprep.subr.mxu0 0.0
    %728 = vmatpush1.xpose.msra.mxu0 0.0
    %729 = vmatprep.subr.mxu0 0.0
    %730 = vmatpush1.xpose.msra.mxu0 0.0
    %731 = vmatprep.subr.mxu0 0.0
    %732 = vmatpush1.xpose.msra.mxu0 0.0
    %733 = vmatprep.subr.mxu0 0.0
    %734 = vmatpush1.xpose.msra.mxu0 0.0
    %735 = vmatprep.subr.mxu0 0.0
    %736 = vmatpush1.xpose.msra.mxu0 0.0
    %737 = vmatprep.subr.mxu0 0.0
    %738 = vmatpush1.xpose.msra.mxu0 0.0
    %739 = vmatprep.subr.mxu0 0.0
    %740 = vmatpush1.xpose.msra.mxu0 0.0
    %741 = vmatprep.subr.mxu0 0.0
    %742 = vmatpush1.xpose.msra.mxu0 0.0
    %743 = vmatprep.subr.mxu0 0.0
    %744 = vmatpush1.xpose.msra.mxu0 0.0
    %745 = vmatprep.mubr.f32.mxu0 0.0
    %v746 = vand.u32 %v595, 4294901760
    %747 = vmatmul.mubr.f32.gmra.mrb[0].mxu0 %v746
    %v748 = vpop.f32.mrb[0].mxu0
    %v749 = vadd.f32 %v673, %v748
    %v750 = vpop.f32.mrb[0].mxu0
    %751 = vdwg.mxu0
    %752 = vmatprep.subr.mxu0 0.0
    %v753 = vand.u32 %v598, 4294901760
    %v754 = vsub.f32 %v598, %v753
    %755 = vmatpush1.xpose.msra.mxu0 %v754
    %756 = vmatprep.subr.mxu0 0.0
    %757 = vmatpush1.xpose.msra.mxu0 0.0
    %758 = vmatprep.subr.mxu0 0.0
    %759 = vmatpush1.xpose.msra.mxu0 0.0
    %760 = vmatprep.subr.mxu0 0.0
    %761 = vmatpush1.xpose.msra.mxu0 0.0
    %762 = vmatprep.subr.mxu0 0.0
    %763 = vmatpush1.xpose.msra.mxu0 0.0
    %764 = vmatprep.subr.mxu0 0.0
    %765 = vmatpush1.xpose.msra.mxu0 0.0
    %766 = vmatprep.subr.mxu0 0.0
    %767 = vmatpush1.xpose.msra.mxu0 0.0
    %768 = vmatprep.subr.mxu0 0.0
    %769 = vmatpush1.xpose.msra.mxu0 0.0
    %770 = vmatprep.subr.mxu0 0.0
    %771 = vmatpush1.xpose.msra.mxu0 0.0
    %772 = vmatprep.subr.mxu0 0.0
    %773 = vmatpush1.xpose.msra.mxu0 0.0
    %774 = vmatprep.subr.mxu0 0.0
    %775 = vmatpush1.xpose.msra.mxu0 0.0
    %776 = vmatprep.subr.mxu0 0.0
    %777 = vmatpush1.xpose.msra.mxu0 0.0
    %778 = vmatprep.subr.mxu0 0.0
    %779 = vmatpush1.xpose.msra.mxu0 0.0
    %780 = vmatprep.subr.mxu0 0.0
    %781 = vmatpush1.xpose.msra.mxu0 0.0
    %782 = vmatprep.subr.mxu0 0.0
    %783 = vmatpush1.xpose.msra.mxu0 0.0
    %784 = vmatprep.subr.mxu0 0.0
    %785 = vmatpush1.xpose.msra.mxu0 0.0
    %786 = vmatprep.subr.mxu0 0.0
    %787 = vmatpush1.xpose.msra.mxu0 0.0
    %788 = vmatprep.subr.mxu0 0.0
    %789 = vmatpush1.xpose.msra.mxu0 0.0
    %790 = vmatprep.subr.mxu0 0.0
    %791 = vmatpush1.xpose.msra.mxu0 0.0
    %792 = vmatprep.subr.mxu0 0.0
    %793 = vmatpush1.xpose.msra.mxu0 0.0
    %794 = vmatprep.subr.mxu0 0.0
    %795 = vmatpush1.xpose.msra.mxu0 0.0
    %796 = vmatprep.subr.mxu0 0.0
    %797 = vmatpush1.xpose.msra.mxu0 0.0
    %798 = vmatprep.subr.mxu0 0.0
    %799 = vmatpush1.xpose.msra.mxu0 0.0
    %800 = vmatprep.subr.mxu0 0.0
    %801 = vmatpush1.xpose.msra.mxu0 0.0
    %802 = vmatprep.subr.mxu0 0.0
    %803 = vmatpush1.xpose.msra.mxu0 0.0
    %804 = vmatprep.subr.mxu0 0.0
    %805 = vmatpush1.xpose.msra.mxu0 0.0
    %806 = vmatprep.subr.mxu0 0.0
    %807 = vmatpush1.xpose.msra.mxu0 0.0
    %808 = vmatprep.subr.mxu0 0.0
    %809 = vmatpush1.xpose.msra.mxu0 0.0
    %810 = vmatprep.subr.mxu0 0.0
    %811 = vmatpush1.xpose.msra.mxu0 0.0
    %812 = vmatprep.subr.mxu0 0.0
    %813 = vmatpush1.xpose.msra.mxu0 0.0
    %814 = vmatprep.subr.mxu0 0.0
    %815 = vmatpush1.xpose.msra.mxu0 0.0
    %816 = vmatprep.subr.mxu0 0.0
    %817 = vmatpush1.xpose.msra.mxu0 0.0
    %818 = vmatprep.mubr.f32.mxu0 0.0
    %v819 = vand.u32 %v595, 4294901760
    %v820 = vsub.f32 %v595, %v819
    %821 = vmatmul.mubr.f32.gmra.mrb[0].mxu0 %v820
    %v822 = vpop.f32.mrb[0].mxu0
    %v823 = vadd.f32 %v749, %v822
    %v824 = vpop.f32.mrb[0].mxu0
    %825 = vdwg.mxu0
    %826 = vmatprep.subr.mxu0 0.0
    %v827 = vand.u32 %v598, 4294901760
    %828 = vmatpush1.xpose.msra.mxu0 %v827
    %829 = vmatprep.subr.mxu0 0.0
    %830 = vmatpush1.xpose.msra.mxu0 0.0
    %831 = vmatprep.subr.mxu0 0.0
    %832 = vmatpush1.xpose.msra.mxu0 0.0
    %833 = vmatprep.subr.mxu0 0.0
    %834 = vmatpush1.xpose.msra.mxu0 0.0
    %835 = vmatprep.subr.mxu0 0.0
    %836 = vmatpush1.xpose.msra.mxu0 0.0
    %837 = vmatprep.subr.mxu0 0.0
    %838 = vmatpush1.xpose.msra.mxu0 0.0
    %839 = vmatprep.subr.mxu0 0.0
    %840 = vmatpush1.xpose.msra.mxu0 0.0
    %841 = vmatprep.subr.mxu0 0.0
    %842 = vmatpush1.xpose.msra.mxu0 0.0
    %843 = vmatprep.subr.mxu0 0.0
    %844 = vmatpush1.xpose.msra.mxu0 0.0
    %845 = vmatprep.subr.mxu0 0.0
    %846 = vmatpush1.xpose.msra.mxu0 0.0
    %847 = vmatprep.subr.mxu0 0.0
    %848 = vmatpush1.xpose.msra.mxu0 0.0
    %849 = vmatprep.subr.mxu0 0.0
    %850 = vmatpush1.xpose.msra.mxu0 0.0
    %851 = vmatprep.subr.mxu0 0.0
    %852 = vmatpush1.xpose.msra.mxu0 0.0
    %853 = vmatprep.subr.mxu0 0.0
    %854 = vmatpush1.xpose.msra.mxu0 0.0
    %855 = vmatprep.subr.mxu0 0.0
    %856 = vmatpush1.xpose.msra.mxu0 0.0
    %857 = vmatprep.subr.mxu0 0.0
    %858 = vmatpush1.xpose.msra.mxu0 0.0
    %859 = vmatprep.subr.mxu0 0.0
    %860 = vmatpush1.xpose.msra.mxu0 0.0
    %861 = vmatprep.subr.mxu0 0.0
    %862 = vmatpush1.xpose.msra.mxu0 0.0
    %863 = vmatprep.subr.mxu0 0.0
    %864 = vmatpush1.xpose.msra.mxu0 0.0
    %865 = vmatprep.subr.mxu0 0.0
    %866 = vmatpush1.xpose.msra.mxu0 0.0
    %867 = vmatprep.subr.mxu0 0.0
    %868 = vmatpush1.xpose.msra.mxu0 0.0
    %869 = vmatprep.subr.mxu0 0.0
    %870 = vmatpush1.xpose.msra.mxu0 0.0
    %871 = vmatprep.subr.mxu0 0.0
    %872 = vmatpush1.xpose.msra.mxu0 0.0
    %873 = vmatprep.subr.mxu0 0.0
    %874 = vmatpush1.xpose.msra.mxu0 0.0
    %875 = vmatprep.subr.mxu0 0.0
    %876 = vmatpush1.xpose.msra.mxu0 0.0
    %877 = vmatprep.subr.mxu0 0.0
    %878 = vmatpush1.xpose.msra.mxu0 0.0
    %879 = vmatprep.subr.mxu0 0.0
    %880 = vmatpush1.xpose.msra.mxu0 0.0
    %881 = vmatprep.subr.mxu0 0.0
    %882 = vmatpush1.xpose.msra.mxu0 0.0
    %883 = vmatprep.subr.mxu0 0.0
    %884 = vmatpush1.xpose.msra.mxu0 0.0
    %885 = vmatprep.subr.mxu0 0.0
    %886 = vmatpush1.xpose.msra.mxu0 0.0
    %887 = vmatprep.subr.mxu0 0.0
    %888 = vmatpush1.xpose.msra.mxu0 0.0
    %889 = vmatprep.subr.mxu0 0.0
    %890 = vmatpush1.xpose.msra.mxu0 0.0
    %891 = vmatprep.mubr.f32.mxu0 0.0
    %v892 = vand.u32 %v595, 4294901760
    %v893 = vsub.f32 %v595, %v892
    %v894 = vand.u32 %v893, 4294901760
    %895 = vmatmul.mubr.f32.gmra.mrb[0].mxu0 %v894
    %v896 = vpop.f32.mrb[0].mxu0
    %v897 = vadd.f32 %v823, %v896
    %v898 = vpop.f32.mrb[0].mxu0
    %899 = vdwg.mxu0
    %900 = vmatprep.subr.mxu0 0.0
    %v901 = vand.u32 %v598, 4294901760
    %v902 = vsub.f32 %v598, %v901
    %v903 = vand.u32 %v902, 4294901760
    %904 = vmatpush1.xpose.msra.mxu0 %v903
    %905 = vmatprep.subr.mxu0 0.0
    %906 = vmatpush1.xpose.msra.mxu0 0.0
    %907 = vmatprep.subr.mxu0 0.0
    %908 = vmatpush1.xpose.msra.mxu0 0.0
    %909 = vmatprep.subr.mxu0 0.0
    %910 = vmatpush1.xpose.msra.mxu0 0.0
    %911 = vmatprep.subr.mxu0 0.0
    %912 = vmatpush1.xpose.msra.mxu0 0.0
    %913 = vmatprep.subr.mxu0 0.0
    %914 = vmatpush1.xpose.msra.mxu0 0.0
    %915 = vmatprep.subr.mxu0 0.0
    %916 = vmatpush1.xpose.msra.mxu0 0.0
    %917 = vmatprep.subr.mxu0 0.0
    %918 = vmatpush1.xpose.msra.mxu0 0.0
    %919 = vmatprep.subr.mxu0 0.0
    %920 = vmatpush1.xpose.msra.mxu0 0.0
    %921 = vmatprep.subr.mxu0 0.0
    %922 = vmatpush1.xpose.msra.mxu0 0.0
    %923 = vmatprep.subr.mxu0 0.0
    %924 = vmatpush1.xpose.msra.mxu0 0.0
    %925 = vmatprep.subr.mxu0 0.0
    %926 = vmatpush1.xpose.msra.mxu0 0.0
    %927 = vmatprep.subr.mxu0 0.0
    %928 = vmatpush1.xpose.msra.mxu0 0.0
    %929 = vmatprep.subr.mxu0 0.0
    %930 = vmatpush1.xpose.msra.mxu0 0.0
    %931 = vmatprep.subr.mxu0 0.0
    %932 = vmatpush1.xpose.msra.mxu0 0.0
    %933 = vmatprep.subr.mxu0 0.0
    %934 = vmatpush1.xpose.msra.mxu0 0.0
    %935 = vmatprep.subr.mxu0 0.0
    %936 = vmatpush1.xpose.msra.mxu0 0.0
    %937 = vmatprep.subr.mxu0 0.0
    %938 = vmatpush1.xpose.msra.mxu0 0.0
    %939 = vmatprep.subr.mxu0 0.0
    %940 = vmatpush1.xpose.msra.mxu0 0.0
    %941 = vmatprep.subr.mxu0 0.0
    %942 = vmatpush1.xpose.msra.mxu0 0.0
    %943 = vmatprep.subr.mxu0 0.0
    %944 = vmatpush1.xpose.msra.mxu0 0.0
    %945 = vmatprep.subr.mxu0 0.0
    %946 = vmatpush1.xpose.msra.mxu0 0.0
    %947 = vmatprep.subr.mxu0 0.0
    %948 = vmatpush1.xpose.msra.mxu0 0.0
    %949 = vmatprep.subr.mxu0 0.0
    %950 = vmatpush1.xpose.msra.mxu0 0.0
    %951 = vmatprep.subr.mxu0 0.0
    %952 = vmatpush1.xpose.msra.mxu0 0.0
    %953 = vmatprep.subr.mxu0 0.0
    %954 = vmatpush1.xpose.msra.mxu0 0.0
    %955 = vmatprep.subr.mxu0 0.0
    %956 = vmatpush1.xpose.msra.mxu0 0.0
    %957 = vmatprep.subr.mxu0 0.0
    %958 = vmatpush1.xpose.msra.mxu0 0.0
    %959 = vmatprep.subr.mxu0 0.0
    %960 = vmatpush1.xpose.msra.mxu0 0.0
    %961 = vmatprep.subr.mxu0 0.0
    %962 = vmatpush1.xpose.msra.mxu0 0.0
    %963 = vmatprep.subr.mxu0 0.0
    %964 = vmatpush1.xpose.msra.mxu0 0.0
    %965 = vmatprep.subr.mxu0 0.0
    %966 = vmatpush1.xpose.msra.mxu0 0.0
    %967 = vmatprep.mubr.f32.mxu0 0.0
    %v968 = vand.u32 %v595, 4294901760
    %969 = vmatmul.mubr.f32.gmra.mrb[0].mxu0 %v968
    %v970 = vpop.f32.mrb[0].mxu0
    %v971 = vadd.f32 %v897, %v970
    %v972 = vpop.f32.mrb[0].mxu0
    %973 = vdwg.mxu0
    %974 = vmatprep.subr.mxu0 0.0
    %v975 = vand.u32 %v598, 4294901760
    %976 = vmatpush1.xpose.msra.mxu0 %v975
    %977 = vmatprep.subr.mxu0 0.0
    %978 = vmatpush1.xpose.msra.mxu0 0.0
    %979 = vmatprep.subr.mxu0 0.0
    %980 = vmatpush1.xpose.msra.mxu0 0.0
    %981 = vmatprep.subr.mxu0 0.0
    %982 = vmatpush1.xpose.msra.mxu0 0.0
    %983 = vmatprep.subr.mxu0 0.0
    %984 = vmatpush1.xpose.msra.mxu0 0.0
    %985 = vmatprep.subr.mxu0 0.0
    %986 = vmatpush1.xpose.msra.mxu0 0.0
    %987 = vmatprep.subr.mxu0 0.0
    %988 = vmatpush1.xpose.msra.mxu0 0.0
    %989 = vmatprep.subr.mxu0 0.0
    %990 = vmatpush1.xpose.msra.mxu0 0.0
    %991 = vmatprep.subr.mxu0 0.0
    %992 = vmatpush1.xpose.msra.mxu0 0.0
    %993 = vmatprep.subr.mxu0 0.0
    %994 = vmatpush1.xpose.msra.mxu0 0.0
    %995 = vmatprep.subr.mxu0 0.0
    %996 = vmatpush1.xpose.msra.mxu0 0.0
    %997 = vmatprep.subr.mxu0 0.0
    %998 = vmatpush1.xpose.msra.mxu0 0.0
    %999 = vmatprep.subr.mxu0 0.0
    %1000 = vmatpush1.xpose.msra.mxu0 0.0
    %1001 = vmatprep.subr.mxu0 0.0
    %1002 = vmatpush1.xpose.msra.mxu0 0.0
    %1003 = vmatprep.subr.mxu0 0.0
    %1004 = vmatpush1.xpose.msra.mxu0 0.0
    %1005 = vmatprep.subr.mxu0 0.0
    %1006 = vmatpush1.xpose.msra.mxu0 0.0
    %1007 = vmatprep.subr.mxu0 0.0
    %1008 = vmatpush1.xpose.msra.mxu0 0.0
    %1009 = vmatprep.subr.mxu0 0.0
    %1010 = vmatpush1.xpose.msra.mxu0 0.0
    %1011 = vmatprep.subr.mxu0 0.0
    %1012 = vmatpush1.xpose.msra.mxu0 0.0
    %1013 = vmatprep.subr.mxu0 0.0
    %1014 = vmatpush1.xpose.msra.mxu0 0.0
    %1015 = vmatprep.subr.mxu0 0.0
    %1016 = vmatpush1.xpose.msra.mxu0 0.0
    %1017 = vmatprep.subr.mxu0 0.0
    %1018 = vmatpush1.xpose.msra.mxu0 0.0
    %1019 = vmatprep.subr.mxu0 0.0
    %1020 = vmatpush1.xpose.msra.mxu0 0.0
    %1021 = vmatprep.subr.mxu0 0.0
    %1022 = vmatpush1.xpose.msra.mxu0 0.0
    %1023 = vmatprep.subr.mxu0 0.0
    %1024 = vmatpush1.xpose.msra.mxu0 0.0
    %1025 = vmatprep.subr.mxu0 0.0
    %1026 = vmatpush1.xpose.msra.mxu0 0.0
    %1027 = vmatprep.subr.mxu0 0.0
    %1028 = vmatpush1.xpose.msra.mxu0 0.0
    %1029 = vmatprep.subr.mxu0 0.0
    %1030 = vmatpush1.xpose.msra.mxu0 0.0
    %1031 = vmatprep.subr.mxu0 0.0
    %1032 = vmatpush1.xpose.msra.mxu0 0.0
    %1033 = vmatprep.subr.mxu0 0.0
    %1034 = vmatpush1.xpose.msra.mxu0 0.0
    %1035 = vmatprep.subr.mxu0 0.0
    %1036 = vmatpush1.xpose.msra.mxu0 0.0
    %1037 = vmatprep.subr.mxu0 0.0
    %1038 = vmatpush1.xpose.msra.mxu0 0.0
    %1039 = vmatprep.mubr.f32.mxu0 0.0
    %v1040 = vand.u32 %v595, 4294901760
    %1041 = vmatmul.mubr.f32.gmra.mrb[0].mxu0 %v1040
    %v1042 = vpop.f32.mrb[0].mxu0
    %v1043 = vadd.f32 %v971, %v1042
    %v1044 = vpop.f32.mrb[0].mxu0
    %1045 = vdwg.mxu0
    %v1046 = vsel %vm143, %v139, 0
    %v1049 = vsel %vm143, %v86, 0
    %1051 = vmatprep.subr.mxu0 0.0
    %v1052 = vand.u32 %v1049, 4294901760
    %1053 = vmatpush1.xpose.msra.mxu0 %v1052
    %1054 = vmatprep.subr.mxu0 0.0
    %1055 = vmatpush1.xpose.msra.mxu0 0.0
    %1056 = vmatprep.subr.mxu0 0.0
    %1057 = vmatpush1.xpose.msra.mxu0 0.0
    %1058 = vmatprep.subr.mxu0 0.0
    %1059 = vmatpush1.xpose.msra.mxu0 0.0
    %1060 = vmatprep.subr.mxu0 0.0
    %1061 = vmatpush1.xpose.msra.mxu0 0.0
    %1062 = vmatprep.subr.mxu0 0.0
    %1063 = vmatpush1.xpose.msra.mxu0 0.0
    %1064 = vmatprep.subr.mxu0 0.0
    %1065 = vmatpush1.xpose.msra.mxu0 0.0
    %1066 = vmatprep.subr.mxu0 0.0
    %1067 = vmatpush1.xpose.msra.mxu0 0.0
    %1068 = vmatprep.subr.mxu0 0.0
    %1069 = vmatpush1.xpose.msra.mxu0 0.0
    %1070 = vmatprep.subr.mxu0 0.0
    %1071 = vmatpush1.xpose.msra.mxu0 0.0
    %1072 = vmatprep.subr.mxu0 0.0
    %1073 = vmatpush1.xpose.msra.mxu0 0.0
    %1074 = vmatprep.subr.mxu0 0.0
    %1075 = vmatpush1.xpose.msra.mxu0 0.0
    %1076 = vmatprep.subr.mxu0 0.0
    %1077 = vmatpush1.xpose.msra.mxu0 0.0
    %1078 = vmatprep.subr.mxu0 0.0
    %1079 = vmatpush1.xpose.msra.mxu0 0.0
    %1080 = vmatprep.subr.mxu0 0.0
    %1081 = vmatpush1.xpose.msra.mxu0 0.0
    %1082 = vmatprep.subr.mxu0 0.0
    %1083 = vmatpush1.xpose.msra.mxu0 0.0
    %1084 = vmatprep.subr.mxu0 0.0
    %1085 = vmatpush1.xpose.msra.mxu0 0.0
    %1086 = vmatprep.subr.mxu0 0.0
    %1087 = vmatpush1.xpose.msra.mxu0 0.0
    %1088 = vmatprep.subr.mxu0 0.0
    %1089 = vmatpush1.xpose.msra.mxu0 0.0
    %1090 = vmatprep.subr.mxu0 0.0
    %1091 = vmatpush1.xpose.msra.mxu0 0.0
    %1092 = vmatprep.subr.mxu0 0.0
    %1093 = vmatpush1.xpose.msra.mxu0 0.0
    %1094 = vmatprep.subr.mxu0 0.0
    %1095 = vmatpush1.xpose.msra.mxu0 0.0
    %1096 = vmatprep.subr.mxu0 0.0
    %1097 = vmatpush1.xpose.msra.mxu0 0.0
    %1098 = vmatprep.subr.mxu0 0.0
    %1099 = vmatpush1.xpose.msra.mxu0 0.0
    %1100 = vmatprep.subr.mxu0 0.0
    %1101 = vmatpush1.xpose.msra.mxu0 0.0
    %1102 = vmatprep.subr.mxu0 0.0
    %1103 = vmatpush1.xpose.msra.mxu0 0.0
    %1104 = vmatprep.subr.mxu0 0.0
    %1105 = vmatpush1.xpose.msra.mxu0 0.0
    %1106 = vmatprep.subr.mxu0 0.0
    %1107 = vmatpush1.xpose.msra.mxu0 0.0
    %1108 = vmatprep.subr.mxu0 0.0
    %1109 = vmatpush1.xpose.msra.mxu0 0.0
    %1110 = vmatprep.subr.mxu0 0.0
    %1111 = vmatpush1.xpose.msra.mxu0 0.0
    %1112 = vmatprep.subr.mxu0 0.0
    %1113 = vmatpush1.xpose.msra.mxu0 0.0
    %1114 = vmatprep.subr.mxu0 0.0
    %1115 = vmatpush1.xpose.msra.mxu0 0.0
    %1116 = vmatprep.mubr.f32.mxu0 0.0
    %v1117 = vand.u32 %v1046, 4294901760
    %v1118 = vsub.f32 %v1046, %v1117
    %v1119 = vand.u32 %v1118, 4294901760
    %v1120 = vsub.f32 %v1118, %v1119
    %v1121 = vand.u32 %v1120, 4294901760
    %1122 = vmatmul.mubr.f32.gmra.mrb[0].mxu0 %v1121
    %v1123 = vpop.f32.mrb[0].mxu0
    %v1124 = vadd.f32 0.0, %v1123
    %v1125 = vpop.f32.mrb[0].mxu0
    %1126 = vdwg.mxu0
    %1127 = vmatprep.subr.mxu0 0.0
    %v1128 = vand.u32 %v1049, 4294901760
    %v1129 = vsub.f32 %v1049, %v1128
    %v1130 = vand.u32 %v1129, 4294901760
    %v1131 = vsub.f32 %v1129, %v1130
    %v1132 = vand.u32 %v1131, 4294901760
    %1133 = vmatpush1.xpose.msra.mxu0 %v1132
    %1134 = vmatprep.subr.mxu0 0.0
    %1135 = vmatpush1.xpose.msra.mxu0 0.0
    %1136 = vmatprep.subr.mxu0 0.0
    %1137 = vmatpush1.xpose.msra.mxu0 0.0
    %1138 = vmatprep.subr.mxu0 0.0
    %1139 = vmatpush1.xpose.msra.mxu0 0.0
    %1140 = vmatprep.subr.mxu0 0.0
    %1141 = vmatpush1.xpose.msra.mxu0 0.0
    %1142 = vmatprep.subr.mxu0 0.0
    %1143 = vmatpush1.xpose.msra.mxu0 0.0
    %1144 = vmatprep.subr.mxu0 0.0
    %1145 = vmatpush1.xpose.msra.mxu0 0.0
    %1146 = vmatprep.subr.mxu0 0.0
    %1147 = vmatpush1.xpose.msra.mxu0 0.0
    %1148 = vmatprep.subr.mxu0 0.0
    %1149 = vmatpush1.xpose.msra.mxu0 0.0
    %1150 = vmatprep.subr.mxu0 0.0
    %1151 = vmatpush1.xpose.msra.mxu0 0.0
    %1152 = vmatprep.subr.mxu0 0.0
    %1153 = vmatpush1.xpose.msra.mxu0 0.0
    %1154 = vmatprep.subr.mxu0 0.0
    %1155 = vmatpush1.xpose.msra.mxu0 0.0
    %1156 = vmatprep.subr.mxu0 0.0
    %1157 = vmatpush1.xpose.msra.mxu0 0.0
    %1158 = vmatprep.subr.mxu0 0.0
    %1159 = vmatpush1.xpose.msra.mxu0 0.0
    %1160 = vmatprep.subr.mxu0 0.0
    %1161 = vmatpush1.xpose.msra.mxu0 0.0
    %1162 = vmatprep.subr.mxu0 0.0
    %1163 = vmatpush1.xpose.msra.mxu0 0.0
    %1164 = vmatprep.subr.mxu0 0.0
    %1165 = vmatpush1.xpose.msra.mxu0 0.0
    %1166 = vmatprep.subr.mxu0 0.0
    %1167 = vmatpush1.xpose.msra.mxu0 0.0
    %1168 = vmatprep.subr.mxu0 0.0
    %1169 = vmatpush1.xpose.msra.mxu0 0.0
    %1170 = vmatprep.subr.mxu0 0.0
    %1171 = vmatpush1.xpose.msra.mxu0 0.0
    %1172 = vmatprep.subr.mxu0 0.0
    %1173 = vmatpush1.xpose.msra.mxu0 0.0
    %1174 = vmatprep.subr.mxu0 0.0
    %1175 = vmatpush1.xpose.msra.mxu0 0.0
    %1176 = vmatprep.subr.mxu0 0.0
    %1177 = vmatpush1.xpose.msra.mxu0 0.0
    %1178 = vmatprep.subr.mxu0 0.0
    %1179 = vmatpush1.xpose.msra.mxu0 0.0
    %1180 = vmatprep.subr.mxu0 0.0
    %1181 = vmatpush1.xpose.msra.mxu0 0.0
    %1182 = vmatprep.subr.mxu0 0.0
    %1183 = vmatpush1.xpose.msra.mxu0 0.0
    %1184 = vmatprep.subr.mxu0 0.0
    %1185 = vmatpush1.xpose.msra.mxu0 0.0
    %1186 = vmatprep.subr.mxu0 0.0
    %1187 = vmatpush1.xpose.msra.mxu0 0.0
    %1188 = vmatprep.subr.mxu0 0.0
    %1189 = vmatpush1.xpose.msra.mxu0 0.0
    %1190 = vmatprep.subr.mxu0 0.0
    %1191 = vmatpush1.xpose.msra.mxu0 0.0
    %1192 = vmatprep.subr.mxu0 0.0
    %1193 = vmatpush1.xpose.msra.mxu0 0.0
    %1194 = vmatprep.subr.mxu0 0.0
    %1195 = vmatpush1.xpose.msra.mxu0 0.0
    %1196 = vmatprep.mubr.f32.mxu0 0.0
    %v1197 = vand.u32 %v1046, 4294901760
    %1198 = vmatmul.mubr.f32.gmra.mrb[0].mxu0 %v1197
    %v1199 = vpop.f32.mrb[0].mxu0
    %v1200 = vadd.f32 %v1124, %v1199
    %v1201 = vpop.f32.mrb[0].mxu0
    %1202 = vdwg.mxu0
    %1203 = vmatprep.subr.mxu0 0.0
    %v1204 = vand.u32 %v1049, 4294901760
    %v1205 = vsub.f32 %v1049, %v1204
    %1206 = vmatpush1.xpose.msra.mxu0 %v1205
    %1207 = vmatprep.subr.mxu0 0.0
    %1208 = vmatpush1.xpose.msra.mxu0 0.0
    %1209 = vmatprep.subr.mxu0 0.0
    %1210 = vmatpush1.xpose.msra.mxu0 0.0
    %1211 = vmatprep.subr.mxu0 0.0
    %1212 = vmatpush1.xpose.msra.mxu0 0.0
    %1213 = vmatprep.subr.mxu0 0.0
    %1214 = vmatpush1.xpose.msra.mxu0 0.0
    %1215 = vmatprep.subr.mxu0 0.0
    %1216 = vmatpush1.xpose.msra.mxu0 0.0
    %1217 = vmatprep.subr.mxu0 0.0
    %1218 = vmatpush1.xpose.msra.mxu0 0.0
    %1219 = vmatprep.subr.mxu0 0.0
    %1220 = vmatpush1.xpose.msra.mxu0 0.0
    %1221 = vmatprep.subr.mxu0 0.0
    %1222 = vmatpush1.xpose.msra.mxu0 0.0
    %1223 = vmatprep.subr.mxu0 0.0
    %1224 = vmatpush1.xpose.msra.mxu0 0.0
    %1225 = vmatprep.subr.mxu0 0.0
    %1226 = vmatpush1.xpose.msra.mxu0 0.0
    %1227 = vmatprep.subr.mxu0 0.0
    %1228 = vmatpush1.xpose.msra.mxu0 0.0
    %1229 = vmatprep.subr.mxu0 0.0
    %1230 = vmatpush1.xpose.msra.mxu0 0.0
    %1231 = vmatprep.subr.mxu0 0.0
    %1232 = vmatpush1.xpose.msra.mxu0 0.0
    %1233 = vmatprep.subr.mxu0 0.0
    %1234 = vmatpush1.xpose.msra.mxu0 0.0
    %1235 = vmatprep.subr.mxu0 0.0
    %1236 = vmatpush1.xpose.msra.mxu0 0.0
    %1237 = vmatprep.subr.mxu0 0.0
    %1238 = vmatpush1.xpose.msra.mxu0 0.0
    %1239 = vmatprep.subr.mxu0 0.0
    %1240 = vmatpush1.xpose.msra.mxu0 0.0
    %1241 = vmatprep.subr.mxu0 0.0
    %1242 = vmatpush1.xpose.msra.mxu0 0.0
    %1243 = vmatprep.subr.mxu0 0.0
    %1244 = vmatpush1.xpose.msra.mxu0 0.0
    %1245 = vmatprep.subr.mxu0 0.0
    %1246 = vmatpush1.xpose.msra.mxu0 0.0
    %1247 = vmatprep.subr.mxu0 0.0
    %1248 = vmatpush1.xpose.msra.mxu0 0.0
    %1249 = vmatprep.subr.mxu0 0.0
    %1250 = vmatpush1.xpose.msra.mxu0 0.0
    %1251 = vmatprep.subr.mxu0 0.0
    %1252 = vmatpush1.xpose.msra.mxu0 0.0
    %1253 = vmatprep.subr.mxu0 0.0
    %1254 = vmatpush1.xpose.msra.mxu0 0.0
    %1255 = vmatprep.subr.mxu0 0.0
    %1256 = vmatpush1.xpose.msra.mxu0 0.0
    %1257 = vmatprep.subr.mxu0 0.0
    %1258 = vmatpush1.xpose.msra.mxu0 0.0
    %1259 = vmatprep.subr.mxu0 0.0
    %1260 = vmatpush1.xpose.msra.mxu0 0.0
    %1261 = vmatprep.subr.mxu0 0.0
    %1262 = vmatpush1.xpose.msra.mxu0 0.0
    %1263 = vmatprep.subr.mxu0 0.0
    %1264 = vmatpush1.xpose.msra.mxu0 0.0
    %1265 = vmatprep.subr.mxu0 0.0
    %1266 = vmatpush1.xpose.msra.mxu0 0.0
    %1267 = vmatprep.subr.mxu0 0.0
    %1268 = vmatpush1.xpose.msra.mxu0 0.0
    %1269 = vmatprep.mubr.f32.mxu0 0.0
    %v1270 = vand.u32 %v1046, 4294901760
    %v1271 = vsub.f32 %v1046, %v1270
    %1272 = vmatmul.mubr.f32.gmra.mrb[0].mxu0 %v1271
    %v1273 = vpop.f32.mrb[0].mxu0
    %v1274 = vadd.f32 %v1200, %v1273
    %v1275 = vpop.f32.mrb[0].mxu0
    %1276 = vdwg.mxu0
    %1277 = vmatprep.subr.mxu0 0.0
    %v1278 = vand.u32 %v1049, 4294901760
    %1279 = vmatpush1.xpose.msra.mxu0 %v1278
    %1280 = vmatprep.subr.mxu0 0.0
    %1281 = vmatpush1.xpose.msra.mxu0 0.0
    %1282 = vmatprep.subr.mxu0 0.0
    %1283 = vmatpush1.xpose.msra.mxu0 0.0
    %1284 = vmatprep.subr.mxu0 0.0
    %1285 = vmatpush1.xpose.msra.mxu0 0.0
    %1286 = vmatprep.subr.mxu0 0.0
    %1287 = vmatpush1.xpose.msra.mxu0 0.0
    %1288 = vmatprep.subr.mxu0 0.0
    %1289 = vmatpush1.xpose.msra.mxu0 0.0
    %1290 = vmatprep.subr.mxu0 0.0
    %1291 = vmatpush1.xpose.msra.mxu0 0.0
    %1292 = vmatprep.subr.mxu0 0.0
    %1293 = vmatpush1.xpose.msra.mxu0 0.0
    %1294 = vmatprep.subr.mxu0 0.0
    %1295 = vmatpush1.xpose.msra.mxu0 0.0
    %1296 = vmatprep.subr.mxu0 0.0
    %1297 = vmatpush1.xpose.msra.mxu0 0.0
    %1298 = vmatprep.subr.mxu0 0.0
    %1299 = vmatpush1.xpose.msra.mxu0 0.0
    %1300 = vmatprep.subr.mxu0 0.0
    %1301 = vmatpush1.xpose.msra.mxu0 0.0
    %1302 = vmatprep.subr.mxu0 0.0
    %1303 = vmatpush1.xpose.msra.mxu0 0.0
    %1304 = vmatprep.subr.mxu0 0.0
    %1305 = vmatpush1.xpose.msra.mxu0 0.0
    %1306 = vmatprep.subr.mxu0 0.0
    %1307 = vmatpush1.xpose.msra.mxu0 0.0
    %1308 = vmatprep.subr.mxu0 0.0
    %1309 = vmatpush1.xpose.msra.mxu0 0.0
    %1310 = vmatprep.subr.mxu0 0.0
    %1311 = vmatpush1.xpose.msra.mxu0 0.0
    %1312 = vmatprep.subr.mxu0 0.0
    %1313 = vmatpush1.xpose.msra.mxu0 0.0
    %1314 = vmatprep.subr.mxu0 0.0
    %1315 = vmatpush1.xpose.msra.mxu0 0.0
    %1316 = vmatprep.subr.mxu0 0.0
    %1317 = vmatpush1.xpose.msra.mxu0 0.0
    %1318 = vmatprep.subr.mxu0 0.0
    %1319 = vmatpush1.xpose.msra.mxu0 0.0
    %1320 = vmatprep.subr.mxu0 0.0
    %1321 = vmatpush1.xpose.msra.mxu0 0.0
    %1322 = vmatprep.subr.mxu0 0.0
    %1323 = vmatpush1.xpose.msra.mxu0 0.0
    %1324 = vmatprep.subr.mxu0 0.0
    %1325 = vmatpush1.xpose.msra.mxu0 0.0
    %1326 = vmatprep.subr.mxu0 0.0
    %1327 = vmatpush1.xpose.msra.mxu0 0.0
    %1328 = vmatprep.subr.mxu0 0.0
    %1329 = vmatpush1.xpose.msra.mxu0 0.0
    %1330 = vmatprep.subr.mxu0 0.0
    %1331 = vmatpush1.xpose.msra.mxu0 0.0
    %1332 = vmatprep.subr.mxu0 0.0
    %1333 = vmatpush1.xpose.msra.mxu0 0.0
    %1334 = vmatprep.subr.mxu0 0.0
    %1335 = vmatpush1.xpose.msra.mxu0 0.0
    %1336 = vmatprep.subr.mxu0 0.0
    %1337 = vmatpush1.xpose.msra.mxu0 0.0
    %1338 = vmatprep.subr.mxu0 0.0
    %1339 = vmatpush1.xpose.msra.mxu0 0.0
    %1340 = vmatprep.subr.mxu0 0.0
    %1341 = vmatpush1.xpose.msra.mxu0 0.0
    %1342 = vmatprep.mubr.f32.mxu0 0.0
    %v1343 = vand.u32 %v1046, 4294901760
    %v1344 = vsub.f32 %v1046, %v1343
    %v1345 = vand.u32 %v1344, 4294901760
    %1346 = vmatmul.mubr.f32.gmra.mrb[0].mxu0 %v1345
    %v1347 = vpop.f32.mrb[0].mxu0
    %v1348 = vadd.f32 %v1274, %v1347
    %v1349 = vpop.f32.mrb[0].mxu0
    %1350 = vdwg.mxu0
    %1351 = vmatprep.subr.mxu0 0.0
    %v1352 = vand.u32 %v1049, 4294901760
    %v1353 = vsub.f32 %v1049, %v1352
    %v1354 = vand.u32 %v1353, 4294901760
    %1355 = vmatpush1.xpose.msra.mxu0 %v1354
    %1356 = vmatprep.subr.mxu0 0.0
    %1357 = vmatpush1.xpose.msra.mxu0 0.0
    %1358 = vmatprep.subr.mxu0 0.0
    %1359 = vmatpush1.xpose.msra.mxu0 0.0
    %1360 = vmatprep.subr.mxu0 0.0
    %1361 = vmatpush1.xpose.msra.mxu0 0.0
    %1362 = vmatprep.subr.mxu0 0.0
    %1363 = vmatpush1.xpose.msra.mxu0 0.0
    %1364 = vmatprep.subr.mxu0 0.0
    %1365 = vmatpush1.xpose.msra.mxu0 0.0
    %1366 = vmatprep.subr.mxu0 0.0
    %1367 = vmatpush1.xpose.msra.mxu0 0.0
    %1368 = vmatprep.subr.mxu0 0.0
    %1369 = vmatpush1.xpose.msra.mxu0 0.0
    %1370 = vmatprep.subr.mxu0 0.0
    %1371 = vmatpush1.xpose.msra.mxu0 0.0
    %1372 = vmatprep.subr.mxu0 0.0
    %1373 = vmatpush1.xpose.msra.mxu0 0.0
    %1374 = vmatprep.subr.mxu0 0.0
    %1375 = vmatpush1.xpose.msra.mxu0 0.0
    %1376 = vmatprep.subr.mxu0 0.0
    %1377 = vmatpush1.xpose.msra.mxu0 0.0
    %1378 = vmatprep.subr.mxu0 0.0
    %1379 = vmatpush1.xpose.msra.mxu0 0.0
    %1380 = vmatprep.subr.mxu0 0.0
    %1381 = vmatpush1.xpose.msra.mxu0 0.0
    %1382 = vmatprep.subr.mxu0 0.0
    %1383 = vmatpush1.xpose.msra.mxu0 0.0
    %1384 = vmatprep.subr.mxu0 0.0
    %1385 = vmatpush1.xpose.msra.mxu0 0.0
    %1386 = vmatprep.subr.mxu0 0.0
    %1387 = vmatpush1.xpose.msra.mxu0 0.0
    %1388 = vmatprep.subr.mxu0 0.0
    %1389 = vmatpush1.xpose.msra.mxu0 0.0
    %1390 = vmatprep.subr.mxu0 0.0
    %1391 = vmatpush1.xpose.msra.mxu0 0.0
    %1392 = vmatprep.subr.mxu0 0.0
    %1393 = vmatpush1.xpose.msra.mxu0 0.0
    %1394 = vmatprep.subr.mxu0 0.0
    %1395 = vmatpush1.xpose.msra.mxu0 0.0
    %1396 = vmatprep.subr.mxu0 0.0
    %1397 = vmatpush1.xpose.msra.mxu0 0.0
    %1398 = vmatprep.subr.mxu0 0.0
    %1399 = vmatpush1.xpose.msra.mxu0 0.0
    %1400 = vmatprep.subr.mxu0 0.0
    %1401 = vmatpush1.xpose.msra.mxu0 0.0
    %1402 = vmatprep.subr.mxu0 0.0
    %1403 = vmatpush1.xpose.msra.mxu0 0.0
    %1404 = vmatprep.subr.mxu0 0.0
    %1405 = vmatpush1.xpose.msra.mxu0 0.0
    %1406 = vmatprep.subr.mxu0 0.0
    %1407 = vmatpush1.xpose.msra.mxu0 0.0
    %1408 = vmatprep.subr.mxu0 0.0
    %1409 = vmatpush1.xpose.msra.mxu0 0.0
    %1410 = vmatprep.subr.mxu0 0.0
    %1411 = vmatpush1.xpose.msra.mxu0 0.0
    %1412 = vmatprep.subr.mxu0 0.0
    %1413 = vmatpush1.xpose.msra.mxu0 0.0
    %1414 = vmatprep.subr.mxu0 0.0
    %1415 = vmatpush1.xpose.msra.mxu0 0.0
    %1416 = vmatprep.subr.mxu0 0.0
    %1417 = vmatpush1.xpose.msra.mxu0 0.0
    %1418 = vmatprep.mubr.f32.mxu0 0.0
    %v1419 = vand.u32 %v1046, 4294901760
    %1420 = vmatmul.mubr.f32.gmra.mrb[0].mxu0 %v1419
    %v1421 = vpop.f32.mrb[0].mxu0
    %v1422 = vadd.f32 %v1348, %v1421
    %v1423 = vpop.f32.mrb[0].mxu0
    %1424 = vdwg.mxu0
    %1425 = vmatprep.subr.mxu0 0.0
    %v1426 = vand.u32 %v1049, 4294901760
    %1427 = vmatpush1.xpose.msra.mxu0 %v1426
    %1428 = vmatprep.subr.mxu0 0.0
    %1429 = vmatpush1.xpose.msra.mxu0 0.0
    %1430 = vmatprep.subr.mxu0 0.0
    %1431 = vmatpush1.xpose.msra.mxu0 0.0
    %1432 = vmatprep.subr.mxu0 0.0
    %1433 = vmatpush1.xpose.msra.mxu0 0.0
    %1434 = vmatprep.subr.mxu0 0.0
    %1435 = vmatpush1.xpose.msra.mxu0 0.0
    %1436 = vmatprep.subr.mxu0 0.0
    %1437 = vmatpush1.xpose.msra.mxu0 0.0
    %1438 = vmatprep.subr.mxu0 0.0
    %1439 = vmatpush1.xpose.msra.mxu0 0.0
    %1440 = vmatprep.subr.mxu0 0.0
    %1441 = vmatpush1.xpose.msra.mxu0 0.0
    %1442 = vmatprep.subr.mxu0 0.0
    %1443 = vmatpush1.xpose.msra.mxu0 0.0
    %1444 = vmatprep.subr.mxu0 0.0
    %1445 = vmatpush1.xpose.msra.mxu0 0.0
    %1446 = vmatprep.subr.mxu0 0.0
    %1447 = vmatpush1.xpose.msra.mxu0 0.0
    %1448 = vmatprep.subr.mxu0 0.0
    %1449 = vmatpush1.xpose.msra.mxu0 0.0
    %1450 = vmatprep.subr.mxu0 0.0
    %1451 = vmatpush1.xpose.msra.mxu0 0.0
    %1452 = vmatprep.subr.mxu0 0.0
    %1453 = vmatpush1.xpose.msra.mxu0 0.0
    %1454 = vmatprep.subr.mxu0 0.0
    %1455 = vmatpush1.xpose.msra.mxu0 0.0
    %1456 = vmatprep.subr.mxu0 0.0
    %1457 = vmatpush1.xpose.msra.mxu0 0.0
    %1458 = vmatprep.subr.mxu0 0.0
    %1459 = vmatpush1.xpose.msra.mxu0 0.0
    %1460 = vmatprep.subr.mxu0 0.0
    %1461 = vmatpush1.xpose.msra.mxu0 0.0
    %1462 = vmatprep.subr.mxu0 0.0
    %1463 = vmatpush1.xpose.msra.mxu0 0.0
    %1464 = vmatprep.subr.mxu0 0.0
    %1465 = vmatpush1.xpose.msra.mxu0 0.0
    %1466 = vmatprep.subr.mxu0 0.0
    %1467 = vmatpush1.xpose.msra.mxu0 0.0
    %1468 = vmatprep.subr.mxu0 0.0
    %1469 = vmatpush1.xpose.msra.mxu0 0.0
    %1470 = vmatprep.subr.mxu0 0.0
    %1471 = vmatpush1.xpose.msra.mxu0 0.0
    %1472 = vmatprep.subr.mxu0 0.0
    %1473 = vmatpush1.xpose.msra.mxu0 0.0
    %1474 = vmatprep.subr.mxu0 0.0
    %1475 = vmatpush1.xpose.msra.mxu0 0.0
    %1476 = vmatprep.subr.mxu0 0.0
    %1477 = vmatpush1.xpose.msra.mxu0 0.0
    %1478 = vmatprep.subr.mxu0 0.0
    %1479 = vmatpush1.xpose.msra.mxu0 0.0
    %1480 = vmatprep.subr.mxu0 0.0
    %1481 = vmatpush1.xpose.msra.mxu0 0.0
    %1482 = vmatprep.subr.mxu0 0.0
    %1483 = vmatpush1.xpose.msra.mxu0 0.0
    %1484 = vmatprep.subr.mxu0 0.0
    %1485 = vmatpush1.xpose.msra.mxu0 0.0
    %1486 = vmatprep.subr.mxu0 0.0
    %1487 = vmatpush1.xpose.msra.mxu0 0.0
    %1488 = vmatprep.subr.mxu0 0.0
    %1489 = vmatpush1.xpose.msra.mxu0 0.0
    %1490 = vmatprep.mubr.f32.mxu0 0.0
    %v1491 = vand.u32 %v1046, 4294901760
    %1492 = vmatmul.mubr.f32.gmra.mrb[0].mxu0 %v1491
    %v1493 = vpop.f32.mrb[0].mxu0
    %v1494 = vadd.f32 %v1422, %v1493
    %v1495 = vpop.f32.mrb[0].mxu0
    %1496 = vdwg.mxu0
    %v1497 = vsel %vm143, %v141, 0
    %v1500 = vsel %vm143, %v87, 0
    %1502 = vmatprep.subr.mxu0 0.0
    %v1503 = vand.u32 %v1500, 4294901760
    %1504 = vmatpush1.xpose.msra.mxu0 %v1503
    %1505 = vmatprep.subr.mxu0 0.0
    %1506 = vmatpush1.xpose.msra.mxu0 0.0
    %1507 = vmatprep.subr.mxu0 0.0
    %1508 = vmatpush1.xpose.msra.mxu0 0.0
    %1509 = vmatprep.subr.mxu0 0.0
    %1510 = vmatpush1.xpose.msra.mxu0 0.0
    %1511 = vmatprep.subr.mxu0 0.0
    %1512 = vmatpush1.xpose.msra.mxu0 0.0
    %1513 = vmatprep.subr.mxu0 0.0
    %1514 = vmatpush1.xpose.msra.mxu0 0.0
    %1515 = vmatprep.subr.mxu0 0.0
    %1516 = vmatpush1.xpose.msra.mxu0 0.0
    %1517 = vmatprep.subr.mxu0 0.0
    %1518 = vmatpush1.xpose.msra.mxu0 0.0
    %1519 = vmatprep.subr.mxu0 0.0
    %1520 = vmatpush1.xpose.msra.mxu0 0.0
    %1521 = vmatprep.subr.mxu0 0.0
    %1522 = vmatpush1.xpose.msra.mxu0 0.0
    %1523 = vmatprep.subr.mxu0 0.0
    %1524 = vmatpush1.xpose.msra.mxu0 0.0
    %1525 = vmatprep.subr.mxu0 0.0
    %1526 = vmatpush1.xpose.msra.mxu0 0.0
    %1527 = vmatprep.subr.mxu0 0.0
    %1528 = vmatpush1.xpose.msra.mxu0 0.0
    %1529 = vmatprep.subr.mxu0 0.0
    %1530 = vmatpush1.xpose.msra.mxu0 0.0
    %1531 = vmatprep.subr.mxu0 0.0
    %1532 = vmatpush1.xpose.msra.mxu0 0.0
    %1533 = vmatprep.subr.mxu0 0.0
    %1534 = vmatpush1.xpose.msra.mxu0 0.0
    %1535 = vmatprep.subr.mxu0 0.0
    %1536 = vmatpush1.xpose.msra.mxu0 0.0
    %1537 = vmatprep.subr.mxu0 0.0
    %1538 = vmatpush1.xpose.msra.mxu0 0.0
    %1539 = vmatprep.subr.mxu0 0.0
    %1540 = vmatpush1.xpose.msra.mxu0 0.0
    %1541 = vmatprep.subr.mxu0 0.0
    %1542 = vmatpush1.xpose.msra.mxu0 0.0
    %1543 = vmatprep.subr.mxu0 0.0
    %1544 = vmatpush1.xpose.msra.mxu0 0.0
    %1545 = vmatprep.subr.mxu0 0.0
    %1546 = vmatpush1.xpose.msra.mxu0 0.0
    %1547 = vmatprep.subr.mxu0 0.0
    %1548 = vmatpush1.xpose.msra.mxu0 0.0
    %1549 = vmatprep.subr.mxu0 0.0
    %1550 = vmatpush1.xpose.msra.mxu0 0.0
    %1551 = vmatprep.subr.mxu0 0.0
    %1552 = vmatpush1.xpose.msra.mxu0 0.0
    %1553 = vmatprep.subr.mxu0 0.0
    %1554 = vmatpush1.xpose.msra.mxu0 0.0
    %1555 = vmatprep.subr.mxu0 0.0
    %1556 = vmatpush1.xpose.msra.mxu0 0.0
    %1557 = vmatprep.subr.mxu0 0.0
    %1558 = vmatpush1.xpose.msra.mxu0 0.0
    %1559 = vmatprep.subr.mxu0 0.0
    %1560 = vmatpush1.xpose.msra.mxu0 0.0
    %1561 = vmatprep.subr.mxu0 0.0
    %1562 = vmatpush1.xpose.msra.mxu0 0.0
    %1563 = vmatprep.subr.mxu0 0.0
    %1564 = vmatpush1.xpose.msra.mxu0 0.0
    %1565 = vmatprep.subr.mxu0 0.0
    %1566 = vmatpush1.xpose.msra.mxu0 0.0
    %1567 = vmatprep.mubr.f32.mxu0 0.0
    %v1568 = vand.u32 %v1497, 4294901760
    %v1569 = vsub.f32 %v1497, %v1568
    %v1570 = vand.u32 %v1569, 4294901760
    %v1571 = vsub.f32 %v1569, %v1570
    %v1572 = vand.u32 %v1571, 4294901760
    %1573 = vmatmul.mubr.f32.gmra.mrb[0].mxu0 %v1572
    %v1574 = vpop.f32.mrb[0].mxu0
    %v1575 = vadd.f32 0.0, %v1574
    %v1576 = vpop.f32.mrb[0].mxu0
    %1577 = vdwg.mxu0
    %1578 = vmatprep.subr.mxu0 0.0
    %v1579 = vand.u32 %v1500, 4294901760
    %v1580 = vsub.f32 %v1500, %v1579
    %v1581 = vand.u32 %v1580, 4294901760
    %v1582 = vsub.f32 %v1580, %v1581
    %v1583 = vand.u32 %v1582, 4294901760
    %1584 = vmatpush1.xpose.msra.mxu0 %v1583
    %1585 = vmatprep.subr.mxu0 0.0
    %1586 = vmatpush1.xpose.msra.mxu0 0.0
    %1587 = vmatprep.subr.mxu0 0.0
    %1588 = vmatpush1.xpose.msra.mxu0 0.0
    %1589 = vmatprep.subr.mxu0 0.0
    %1590 = vmatpush1.xpose.msra.mxu0 0.0
    %1591 = vmatprep.subr.mxu0 0.0
    %1592 = vmatpush1.xpose.msra.mxu0 0.0
    %1593 = vmatprep.subr.mxu0 0.0
    %1594 = vmatpush1.xpose.msra.mxu0 0.0
    %1595 = vmatprep.subr.mxu0 0.0
    %1596 = vmatpush1.xpose.msra.mxu0 0.0
    %1597 = vmatprep.subr.mxu0 0.0
    %1598 = vmatpush1.xpose.msra.mxu0 0.0
    %1599 = vmatprep.subr.mxu0 0.0
    %1600 = vmatpush1.xpose.msra.mxu0 0.0
    %1601 = vmatprep.subr.mxu0 0.0
    %1602 = vmatpush1.xpose.msra.mxu0 0.0
    %1603 = vmatprep.subr.mxu0 0.0
    %1604 = vmatpush1.xpose.msra.mxu0 0.0
    %1605 = vmatprep.subr.mxu0 0.0
    %1606 = vmatpush1.xpose.msra.mxu0 0.0
    %1607 = vmatprep.subr.mxu0 0.0
    %1608 = vmatpush1.xpose.msra.mxu0 0.0
    %1609 = vmatprep.subr.mxu0 0.0
    %1610 = vmatpush1.xpose.msra.mxu0 0.0
    %1611 = vmatprep.subr.mxu0 0.0
    %1612 = vmatpush1.xpose.msra.mxu0 0.0
    %1613 = vmatprep.subr.mxu0 0.0
    %1614 = vmatpush1.xpose.msra.mxu0 0.0
    %1615 = vmatprep.subr.mxu0 0.0
    %1616 = vmatpush1.xpose.msra.mxu0 0.0
    %1617 = vmatprep.subr.mxu0 0.0
    %1618 = vmatpush1.xpose.msra.mxu0 0.0
    %1619 = vmatprep.subr.mxu0 0.0
    %1620 = vmatpush1.xpose.msra.mxu0 0.0
    %1621 = vmatprep.subr.mxu0 0.0
    %1622 = vmatpush1.xpose.msra.mxu0 0.0
    %1623 = vmatprep.subr.mxu0 0.0
    %1624 = vmatpush1.xpose.msra.mxu0 0.0
    %1625 = vmatprep.subr.mxu0 0.0
    %1626 = vmatpush1.xpose.msra.mxu0 0.0
    %1627 = vmatprep.subr.mxu0 0.0
    %1628 = vmatpush1.xpose.msra.mxu0 0.0
    %1629 = vmatprep.subr.mxu0 0.0
    %1630 = vmatpush1.xpose.msra.mxu0 0.0
    %1631 = vmatprep.subr.mxu0 0.0
    %1632 = vmatpush1.xpose.msra.mxu0 0.0
    %1633 = vmatprep.subr.mxu0 0.0
    %1634 = vmatpush1.xpose.msra.mxu0 0.0
    %1635 = vmatprep.subr.mxu0 0.0
    %1636 = vmatpush1.xpose.msra.mxu0 0.0
    %1637 = vmatprep.subr.mxu0 0.0
    %1638 = vmatpush1.xpose.msra.mxu0 0.0
    %1639 = vmatprep.subr.mxu0 0.0
    %1640 = vmatpush1.xpose.msra.mxu0 0.0
    %1641 = vmatprep.subr.mxu0 0.0
    %1642 = vmatpush1.xpose.msra.mxu0 0.0
    %1643 = vmatprep.subr.mxu0 0.0
    %1644 = vmatpush1.xpose.msra.mxu0 0.0
    %1645 = vmatprep.subr.mxu0 0.0
    %1646 = vmatpush1.xpose.msra.mxu0 0.0
    %1647 = vmatprep.mubr.f32.mxu0 0.0
    %v1648 = vand.u32 %v1497, 4294901760
    %1649 = vmatmul.mubr.f32.gmra.mrb[0].mxu0 %v1648
    %v1650 = vpop.f32.mrb[0].mxu0
    %v1651 = vadd.f32 %v1575, %v1650
    %v1652 = vpop.f32.mrb[0].mxu0
    %1653 = vdwg.mxu0
    %1654 = vmatprep.subr.mxu0 0.0
    %v1655 = vand.u32 %v1500, 4294901760
    %v1656 = vsub.f32 %v1500, %v1655
    %1657 = vmatpush1.xpose.msra.mxu0 %v1656
    %1658 = vmatprep.subr.mxu0 0.0
    %1659 = vmatpush1.xpose.msra.mxu0 0.0
    %1660 = vmatprep.subr.mxu0 0.0
    %1661 = vmatpush1.xpose.msra.mxu0 0.0
    %1662 = vmatprep.subr.mxu0 0.0
    %1663 = vmatpush1.xpose.msra.mxu0 0.0
    %1664 = vmatprep.subr.mxu0 0.0
    %1665 = vmatpush1.xpose.msra.mxu0 0.0
    %1666 = vmatprep.subr.mxu0 0.0
    %1667 = vmatpush1.xpose.msra.mxu0 0.0
    %1668 = vmatprep.subr.mxu0 0.0
    %1669 = vmatpush1.xpose.msra.mxu0 0.0
    %1670 = vmatprep.subr.mxu0 0.0
    %1671 = vmatpush1.xpose.msra.mxu0 0.0
    %1672 = vmatprep.subr.mxu0 0.0
    %1673 = vmatpush1.xpose.msra.mxu0 0.0
    %1674 = vmatprep.subr.mxu0 0.0
    %1675 = vmatpush1.xpose.msra.mxu0 0.0
    %1676 = vmatprep.subr.mxu0 0.0
    %1677 = vmatpush1.xpose.msra.mxu0 0.0
    %1678 = vmatprep.subr.mxu0 0.0
    %1679 = vmatpush1.xpose.msra.mxu0 0.0
    %1680 = vmatprep.subr.mxu0 0.0
    %1681 = vmatpush1.xpose.msra.mxu0 0.0
    %1682 = vmatprep.subr.mxu0 0.0
    %1683 = vmatpush1.xpose.msra.mxu0 0.0
    %1684 = vmatprep.subr.mxu0 0.0
    %1685 = vmatpush1.xpose.msra.mxu0 0.0
    %1686 = vmatprep.subr.mxu0 0.0
    %1687 = vmatpush1.xpose.msra.mxu0 0.0
    %1688 = vmatprep.subr.mxu0 0.0
    %1689 = vmatpush1.xpose.msra.mxu0 0.0
    %1690 = vmatprep.subr.mxu0 0.0
    %1691 = vmatpush1.xpose.msra.mxu0 0.0
    %1692 = vmatprep.subr.mxu0 0.0
    %1693 = vmatpush1.xpose.msra.mxu0 0.0
    %1694 = vmatprep.subr.mxu0 0.0
    %1695 = vmatpush1.xpose.msra.mxu0 0.0
    %1696 = vmatprep.subr.mxu0 0.0
    %1697 = vmatpush1.xpose.msra.mxu0 0.0
    %1698 = vmatprep.subr.mxu0 0.0
    %1699 = vmatpush1.xpose.msra.mxu0 0.0
    %1700 = vmatprep.subr.mxu0 0.0
    %1701 = vmatpush1.xpose.msra.mxu0 0.0
    %1702 = vmatprep.subr.mxu0 0.0
    %1703 = vmatpush1.xpose.msra.mxu0 0.0
    %1704 = vmatprep.subr.mxu0 0.0
    %1705 = vmatpush1.xpose.msra.mxu0 0.0
    %1706 = vmatprep.subr.mxu0 0.0
    %1707 = vmatpush1.xpose.msra.mxu0 0.0
    %1708 = vmatprep.subr.mxu0 0.0
    %1709 = vmatpush1.xpose.msra.mxu0 0.0
    %1710 = vmatprep.subr.mxu0 0.0
    %1711 = vmatpush1.xpose.msra.mxu0 0.0
    %1712 = vmatprep.subr.mxu0 0.0
    %1713 = vmatpush1.xpose.msra.mxu0 0.0
    %1714 = vmatprep.subr.mxu0 0.0
    %1715 = vmatpush1.xpose.msra.mxu0 0.0
    %1716 = vmatprep.subr.mxu0 0.0
    %1717 = vmatpush1.xpose.msra.mxu0 0.0
    %1718 = vmatprep.subr.mxu0 0.0
    %1719 = vmatpush1.xpose.msra.mxu0 0.0
    %1720 = vmatprep.mubr.f32.mxu0 0.0
    %v1721 = vand.u32 %v1497, 4294901760
    %v1722 = vsub.f32 %v1497, %v1721
    %1723 = vmatmul.mubr.f32.gmra.mrb[0].mxu0 %v1722
    %v1724 = vpop.f32.mrb[0].mxu0
    %v1725 = vadd.f32 %v1651, %v1724
    %v1726 = vpop.f32.mrb[0].mxu0
    %1727 = vdwg.mxu0
    %1728 = vmatprep.subr.mxu0 0.0
    %v1729 = vand.u32 %v1500, 4294901760
    %1730 = vmatpush1.xpose.msra.mxu0 %v1729
    %1731 = vmatprep.subr.mxu0 0.0
    %1732 = vmatpush1.xpose.msra.mxu0 0.0
    %1733 = vmatprep.subr.mxu0 0.0
    %1734 = vmatpush1.xpose.msra.mxu0 0.0
    %1735 = vmatprep.subr.mxu0 0.0
    %1736 = vmatpush1.xpose.msra.mxu0 0.0
    %1737 = vmatprep.subr.mxu0 0.0
    %1738 = vmatpush1.xpose.msra.mxu0 0.0
    %1739 = vmatprep.subr.mxu0 0.0
    %1740 = vmatpush1.xpose.msra.mxu0 0.0
    %1741 = vmatprep.subr.mxu0 0.0
    %1742 = vmatpush1.xpose.msra.mxu0 0.0
    %1743 = vmatprep.subr.mxu0 0.0
    %1744 = vmatpush1.xpose.msra.mxu0 0.0
    %1745 = vmatprep.subr.mxu0 0.0
    %1746 = vmatpush1.xpose.msra.mxu0 0.0
    %1747 = vmatprep.subr.mxu0 0.0
    %1748 = vmatpush1.xpose.msra.mxu0 0.0
    %1749 = vmatprep.subr.mxu0 0.0
    %1750 = vmatpush1.xpose.msra.mxu0 0.0
    %1751 = vmatprep.subr.mxu0 0.0
    %1752 = vmatpush1.xpose.msra.mxu0 0.0
    %1753 = vmatprep.subr.mxu0 0.0
    %1754 = vmatpush1.xpose.msra.mxu0 0.0
    %1755 = vmatprep.subr.mxu0 0.0
    %1756 = vmatpush1.xpose.msra.mxu0 0.0
    %1757 = vmatprep.subr.mxu0 0.0
    %1758 = vmatpush1.xpose.msra.mxu0 0.0
    %1759 = vmatprep.subr.mxu0 0.0
    %1760 = vmatpush1.xpose.msra.mxu0 0.0
    %1761 = vmatprep.subr.mxu0 0.0
    %1762 = vmatpush1.xpose.msra.mxu0 0.0
    %1763 = vmatprep.subr.mxu0 0.0
    %1764 = vmatpush1.xpose.msra.mxu0 0.0
    %1765 = vmatprep.subr.mxu0 0.0
    %1766 = vmatpush1.xpose.msra.mxu0 0.0
    %1767 = vmatprep.subr.mxu0 0.0
    %1768 = vmatpush1.xpose.msra.mxu0 0.0
    %1769 = vmatprep.subr.mxu0 0.0
    %1770 = vmatpush1.xpose.msra.mxu0 0.0
    %1771 = vmatprep.subr.mxu0 0.0
    %1772 = vmatpush1.xpose.msra.mxu0 0.0
    %1773 = vmatprep.subr.mxu0 0.0
    %1774 = vmatpush1.xpose.msra.mxu0 0.0
    %1775 = vmatprep.subr.mxu0 0.0
    %1776 = vmatpush1.xpose.msra.mxu0 0.0
    %1777 = vmatprep.subr.mxu0 0.0
    %1778 = vmatpush1.xpose.msra.mxu0 0.0
    %1779 = vmatprep.subr.mxu0 0.0
    %1780 = vmatpush1.xpose.msra.mxu0 0.0
    %1781 = vmatprep.subr.mxu0 0.0
    %1782 = vmatpush1.xpose.msra.mxu0 0.0
    %1783 = vmatprep.subr.mxu0 0.0
    %1784 = vmatpush1.xpose.msra.mxu0 0.0
    %1785 = vmatprep.subr.mxu0 0.0
    %1786 = vmatpush1.xpose.msra.mxu0 0.0
    %1787 = vmatprep.subr.mxu0 0.0
    %1788 = vmatpush1.xpose.msra.mxu0 0.0
    %1789 = vmatprep.subr.mxu0 0.0
    %1790 = vmatpush1.xpose.msra.mxu0 0.0
    %1791 = vmatprep.subr.mxu0 0.0
    %1792 = vmatpush1.xpose.msra.mxu0 0.0
    %1793 = vmatprep.mubr.f32.mxu0 0.0
    %v1794 = vand.u32 %v1497, 4294901760
    %v1795 = vsub.f32 %v1497, %v1794
    %v1796 = vand.u32 %v1795, 4294901760
    %1797 = vmatmul.mubr.f32.gmra.mrb[0].mxu0 %v1796
    %v1798 = vpop.f32.mrb[0].mxu0
    %v1799 = vadd.f32 %v1725, %v1798
    %v1800 = vpop.f32.mrb[0].mxu0
    %1801 = vdwg.mxu0
    %1802 = vmatprep.subr.mxu0 0.0
    %v1803 = vand.u32 %v1500, 4294901760
    %v1804 = vsub.f32 %v1500, %v1803
    %v1805 = vand.u32 %v1804, 4294901760
    %1806 = vmatpush1.xpose.msra.mxu0 %v1805
    %1807 = vmatprep.subr.mxu0 0.0
    %1808 = vmatpush1.xpose.msra.mxu0 0.0
    %1809 = vmatprep.subr.mxu0 0.0
    %1810 = vmatpush1.xpose.msra.mxu0 0.0
    %1811 = vmatprep.subr.mxu0 0.0
    %1812 = vmatpush1.xpose.msra.mxu0 0.0
    %1813 = vmatprep.subr.mxu0 0.0
    %1814 = vmatpush1.xpose.msra.mxu0 0.0
    %1815 = vmatprep.subr.mxu0 0.0
    %1816 = vmatpush1.xpose.msra.mxu0 0.0
    %1817 = vmatprep.subr.mxu0 0.0
    %1818 = vmatpush1.xpose.msra.mxu0 0.0
    %1819 = vmatprep.subr.mxu0 0.0
    %1820 = vmatpush1.xpose.msra.mxu0 0.0
    %1821 = vmatprep.subr.mxu0 0.0
    %1822 = vmatpush1.xpose.msra.mxu0 0.0
    %1823 = vmatprep.subr.mxu0 0.0
    %1824 = vmatpush1.xpose.msra.mxu0 0.0
    %1825 = vmatprep.subr.mxu0 0.0
    %1826 = vmatpush1.xpose.msra.mxu0 0.0
    %1827 = vmatprep.subr.mxu0 0.0
    %1828 = vmatpush1.xpose.msra.mxu0 0.0
    %1829 = vmatprep.subr.mxu0 0.0
    %1830 = vmatpush1.xpose.msra.mxu0 0.0
    %1831 = vmatprep.subr.mxu0 0.0
    %1832 = vmatpush1.xpose.msra.mxu0 0.0
    %1833 = vmatprep.subr.mxu0 0.0
    %1834 = vmatpush1.xpose.msra.mxu0 0.0
    %1835 = vmatprep.subr.mxu0 0.0
    %1836 = vmatpush1.xpose.msra.mxu0 0.0
    %1837 = vmatprep.subr.mxu0 0.0
    %1838 = vmatpush1.xpose.msra.mxu0 0.0
    %1839 = vmatprep.subr.mxu0 0.0
    %1840 = vmatpush1.xpose.msra.mxu0 0.0
    %1841 = vmatprep.subr.mxu0 0.0
    %1842 = vmatpush1.xpose.msra.mxu0 0.0
    %1843 = vmatprep.subr.mxu0 0.0
    %1844 = vmatpush1.xpose.msra.mxu0 0.0
    %1845 = vmatprep.subr.mxu0 0.0
    %1846 = vmatpush1.xpose.msra.mxu0 0.0
    %1847 = vmatprep.subr.mxu0 0.0
    %1848 = vmatpush1.xpose.msra.mxu0 0.0
    %1849 = vmatprep.subr.mxu0 0.0
    %1850 = vmatpush1.xpose.msra.mxu0 0.0
    %1851 = vmatprep.subr.mxu0 0.0
    %1852 = vmatpush1.xpose.msra.mxu0 0.0
    %1853 = vmatprep.subr.mxu0 0.0
    %1854 = vmatpush1.xpose.msra.mxu0 0.0
    %1855 = vmatprep.subr.mxu0 0.0
    %1856 = vmatpush1.xpose.msra.mxu0 0.0
    %1857 = vmatprep.subr.mxu0 0.0
    %1858 = vmatpush1.xpose.msra.mxu0 0.0
    %1859 = vmatprep.subr.mxu0 0.0
    %1860 = vmatpush1.xpose.msra.mxu0 0.0
    %1861 = vmatprep.subr.mxu0 0.0
    %1862 = vmatpush1.xpose.msra.mxu0 0.0
    %1863 = vmatprep.subr.mxu0 0.0
    %1864 = vmatpush1.xpose.msra.mxu0 0.0
    %1865 = vmatprep.subr.mxu0 0.0
    %1866 = vmatpush1.xpose.msra.mxu0 0.0
    %1867 = vmatprep.subr.mxu0 0.0
    %1868 = vmatpush1.xpose.msra.mxu0 0.0
    %1869 = vmatprep.mubr.f32.mxu0 0.0
    %v1870 = vand.u32 %v1497, 4294901760
    %1871 = vmatmul.mubr.f32.gmra.mrb[0].mxu0 %v1870
    %v1872 = vpop.f32.mrb[0].mxu0
    %v1873 = vadd.f32 %v1799, %v1872
    %v1874 = vpop.f32.mrb[0].mxu0
    %1875 = vdwg.mxu0
    %1876 = vmatprep.subr.mxu0 0.0
    %v1877 = vand.u32 %v1500, 4294901760
    %1878 = vmatpush1.xpose.msra.mxu0 %v1877
    %1879 = vmatprep.subr.mxu0 0.0
    %1880 = vmatpush1.xpose.msra.mxu0 0.0
    %1881 = vmatprep.subr.mxu0 0.0
    %1882 = vmatpush1.xpose.msra.mxu0 0.0
    %1883 = vmatprep.subr.mxu0 0.0
    %1884 = vmatpush1.xpose.msra.mxu0 0.0
    %1885 = vmatprep.subr.mxu0 0.0
    %1886 = vmatpush1.xpose.msra.mxu0 0.0
    %1887 = vmatprep.subr.mxu0 0.0
    %1888 = vmatpush1.xpose.msra.mxu0 0.0
    %1889 = vmatprep.subr.mxu0 0.0
    %1890 = vmatpush1.xpose.msra.mxu0 0.0
    %1891 = vmatprep.subr.mxu0 0.0
    %1892 = vmatpush1.xpose.msra.mxu0 0.0
    %1893 = vmatprep.subr.mxu0 0.0
    %1894 = vmatpush1.xpose.msra.mxu0 0.0
    %1895 = vmatprep.subr.mxu0 0.0
    %1896 = vmatpush1.xpose.msra.mxu0 0.0
    %1897 = vmatprep.subr.mxu0 0.0
    %1898 = vmatpush1.xpose.msra.mxu0 0.0
    %1899 = vmatprep.subr.mxu0 0.0
    %1900 = vmatpush1.xpose.msra.mxu0 0.0
    %1901 = vmatprep.subr.mxu0 0.0
    %1902 = vmatpush1.xpose.msra.mxu0 0.0
    %1903 = vmatprep.subr.mxu0 0.0
    %1904 = vmatpush1.xpose.msra.mxu0 0.0
    %1905 = vmatprep.subr.mxu0 0.0
    %1906 = vmatpush1.xpose.msra.mxu0 0.0
    %1907 = vmatprep.subr.mxu0 0.0
    %1908 = vmatpush1.xpose.msra.mxu0 0.0
    %1909 = vmatprep.subr.mxu0 0.0
    %1910 = vmatpush1.xpose.msra.mxu0 0.0
    %1911 = vmatprep.subr.mxu0 0.0
    %1912 = vmatpush1.xpose.msra.mxu0 0.0
    %1913 = vmatprep.subr.mxu0 0.0
    %1914 = vmatpush1.xpose.msra.mxu0 0.0
    %1915 = vmatprep.subr.mxu0 0.0
    %1916 = vmatpush1.xpose.msra.mxu0 0.0
    %1917 = vmatprep.subr.mxu0 0.0
    %1918 = vmatpush1.xpose.msra.mxu0 0.0
    %1919 = vmatprep.subr.mxu0 0.0
    %1920 = vmatpush1.xpose.msra.mxu0 0.0
    %1921 = vmatprep.subr.mxu0 0.0
    %1922 = vmatpush1.xpose.msra.mxu0 0.0
    %1923 = vmatprep.subr.mxu0 0.0
    %1924 = vmatpush1.xpose.msra.mxu0 0.0
    %1925 = vmatprep.subr.mxu0 0.0
    %1926 = vmatpush1.xpose.msra.mxu0 0.0
    %1927 = vmatprep.subr.mxu0 0.0
    %1928 = vmatpush1.xpose.msra.mxu0 0.0
    %1929 = vmatprep.subr.mxu0 0.0
    %1930 = vmatpush1.xpose.msra.mxu0 0.0
    %1931 = vmatprep.subr.mxu0 0.0
    %1932 = vmatpush1.xpose.msra.mxu0 0.0
    %1933 = vmatprep.subr.mxu0 0.0
    %1934 = vmatpush1.xpose.msra.mxu0 0.0
    %1935 = vmatprep.subr.mxu0 0.0
    %1936 = vmatpush1.xpose.msra.mxu0 0.0
    %1937 = vmatprep.subr.mxu0 0.0
    %1938 = vmatpush1.xpose.msra.mxu0 0.0
    %1939 = vmatprep.subr.mxu0 0.0
    %1940 = vmatpush1.xpose.msra.mxu0 0.0
    %1941 = vmatprep.mubr.f32.mxu0 0.0
    %v1942 = vand.u32 %v1497, 4294901760
    %1943 = vmatmul.mubr.f32.gmra.mrb[0].mxu0 %v1942
    %v1944 = vpop.f32.mrb[0].mxu0
    %v1945 = vadd.f32 %v1873, %v1944
    %v1946 = vpop.f32.mrb[0].mxu0
    %1947 = vdwg.mxu0
    %v1948 = vsel %vm143, %v124, 0
    %v1951 = vsel %vm143, %v88, 0
    %1953 = vmatprep.subr.mxu0 0.0
    %v1954 = vand.u32 %v1951, 4294901760
    %1955 = vmatpush1.xpose.msra.mxu0 %v1954
    %1956 = vmatprep.subr.mxu0 0.0
    %1957 = vmatpush1.xpose.msra.mxu0 0.0
    %1958 = vmatprep.subr.mxu0 0.0
    %1959 = vmatpush1.xpose.msra.mxu0 0.0
    %1960 = vmatprep.subr.mxu0 0.0
    %1961 = vmatpush1.xpose.msra.mxu0 0.0
    %1962 = vmatprep.subr.mxu0 0.0
    %1963 = vmatpush1.xpose.msra.mxu0 0.0
    %1964 = vmatprep.subr.mxu0 0.0
    %1965 = vmatpush1.xpose.msra.mxu0 0.0
    %1966 = vmatprep.subr.mxu0 0.0
    %1967 = vmatpush1.xpose.msra.mxu0 0.0
    %1968 = vmatprep.subr.mxu0 0.0
    %1969 = vmatpush1.xpose.msra.mxu0 0.0
    %1970 = vmatprep.subr.mxu0 0.0
    %1971 = vmatpush1.xpose.msra.mxu0 0.0
    %1972 = vmatprep.subr.mxu0 0.0
    %1973 = vmatpush1.xpose.msra.mxu0 0.0
    %1974 = vmatprep.subr.mxu0 0.0
    %1975 = vmatpush1.xpose.msra.mxu0 0.0
    %1976 = vmatprep.subr.mxu0 0.0
    %1977 = vmatpush1.xpose.msra.mxu0 0.0
    %1978 = vmatprep.subr.mxu0 0.0
    %1979 = vmatpush1.xpose.msra.mxu0 0.0
    %1980 = vmatprep.subr.mxu0 0.0
    %1981 = vmatpush1.xpose.msra.mxu0 0.0
    %1982 = vmatprep.subr.mxu0 0.0
    %1983 = vmatpush1.xpose.msra.mxu0 0.0
    %1984 = vmatprep.subr.mxu0 0.0
    %1985 = vmatpush1.xpose.msra.mxu0 0.0
    %1986 = vmatprep.subr.mxu0 0.0
    %1987 = vmatpush1.xpose.msra.mxu0 0.0
    %1988 = vmatprep.subr.mxu0 0.0
    %1989 = vmatpush1.xpose.msra.mxu0 0.0
    %1990 = vmatprep.subr.mxu0 0.0
    %1991 = vmatpush1.xpose.msra.mxu0 0.0
    %1992 = vmatprep.subr.mxu0 0.0
    %1993 = vmatpush1.xpose.msra.mxu0 0.0
    %1994 = vmatprep.subr.mxu0 0.0
    %1995 = vmatpush1.xpose.msra.mxu0 0.0
    %1996 = vmatprep.subr.mxu0 0.0
    %1997 = vmatpush1.xpose.msra.mxu0 0.0
    %1998 = vmatprep.subr.mxu0 0.0
    %1999 = vmatpush1.xpose.msra.mxu0 0.0
    %2000 = vmatprep.subr.mxu0 0.0
    %2001 = vmatpush1.xpose.msra.mxu0 0.0
    %2002 = vmatprep.subr.mxu0 0.0
    %2003 = vmatpush1.xpose.msra.mxu0 0.0
    %2004 = vmatprep.subr.mxu0 0.0
    %2005 = vmatpush1.xpose.msra.mxu0 0.0
    %2006 = vmatprep.subr.mxu0 0.0
    %2007 = vmatpush1.xpose.msra.mxu0 0.0
    %2008 = vmatprep.subr.mxu0 0.0
    %2009 = vmatpush1.xpose.msra.mxu0 0.0
    %2010 = vmatprep.subr.mxu0 0.0
    %2011 = vmatpush1.xpose.msra.mxu0 0.0
    %2012 = vmatprep.subr.mxu0 0.0
    %2013 = vmatpush1.xpose.msra.mxu0 0.0
    %2014 = vmatprep.subr.mxu0 0.0
    %2015 = vmatpush1.xpose.msra.mxu0 0.0
    %2016 = vmatprep.subr.mxu0 0.0
    %2017 = vmatpush1.xpose.msra.mxu0 0.0
    %2018 = vmatprep.mubr.f32.mxu0 0.0
    %v2019 = vand.u32 %v1948, 4294901760
    %v2020 = vsub.f32 %v1948, %v2019
    %v2021 = vand.u32 %v2020, 4294901760
    %v2022 = vsub.f32 %v2020, %v2021
    %v2023 = vand.u32 %v2022, 4294901760
    %2024 = vmatmul.mubr.f32.gmra.mrb[0].mxu0 %v2023
    %v2025 = vpop.f32.mrb[0].mxu0
    %v2026 = vadd.f32 0.0, %v2025
    %v2027 = vpop.f32.mrb[0].mxu0
    %2028 = vdwg.mxu0
    %2029 = vmatprep.subr.mxu0 0.0
    %v2030 = vand.u32 %v1951, 4294901760
    %v2031 = vsub.f32 %v1951, %v2030
    %v2032 = vand.u32 %v2031, 4294901760
    %v2033 = vsub.f32 %v2031, %v2032
    %v2034 = vand.u32 %v2033, 4294901760
    %2035 = vmatpush1.xpose.msra.mxu0 %v2034
    %2036 = vmatprep.subr.mxu0 0.0
    %2037 = vmatpush1.xpose.msra.mxu0 0.0
    %2038 = vmatprep.subr.mxu0 0.0
    %2039 = vmatpush1.xpose.msra.mxu0 0.0
    %2040 = vmatprep.subr.mxu0 0.0
    %2041 = vmatpush1.xpose.msra.mxu0 0.0
    %2042 = vmatprep.subr.mxu0 0.0
    %2043 = vmatpush1.xpose.msra.mxu0 0.0
    %2044 = vmatprep.subr.mxu0 0.0
    %2045 = vmatpush1.xpose.msra.mxu0 0.0
    %2046 = vmatprep.subr.mxu0 0.0
    %2047 = vmatpush1.xpose.msra.mxu0 0.0
    %2048 = vmatprep.subr.mxu0 0.0
    %2049 = vmatpush1.xpose.msra.mxu0 0.0
    %2050 = vmatprep.subr.mxu0 0.0
    %2051 = vmatpush1.xpose.msra.mxu0 0.0
    %2052 = vmatprep.subr.mxu0 0.0
    %2053 = vmatpush1.xpose.msra.mxu0 0.0
    %2054 = vmatprep.subr.mxu0 0.0
    %2055 = vmatpush1.xpose.msra.mxu0 0.0
    %2056 = vmatprep.subr.mxu0 0.0
    %2057 = vmatpush1.xpose.msra.mxu0 0.0
    %2058 = vmatprep.subr.mxu0 0.0
    %2059 = vmatpush1.xpose.msra.mxu0 0.0
    %2060 = vmatprep.subr.mxu0 0.0
    %2061 = vmatpush1.xpose.msra.mxu0 0.0
    %2062 = vmatprep.subr.mxu0 0.0
    %2063 = vmatpush1.xpose.msra.mxu0 0.0
    %2064 = vmatprep.subr.mxu0 0.0
    %2065 = vmatpush1.xpose.msra.mxu0 0.0
    %2066 = vmatprep.subr.mxu0 0.0
    %2067 = vmatpush1.xpose.msra.mxu0 0.0
    %2068 = vmatprep.subr.mxu0 0.0
    %2069 = vmatpush1.xpose.msra.mxu0 0.0
    %2070 = vmatprep.subr.mxu0 0.0
    %2071 = vmatpush1.xpose.msra.mxu0 0.0
    %2072 = vmatprep.subr.mxu0 0.0
    %2073 = vmatpush1.xpose.msra.mxu0 0.0
    %2074 = vmatprep.subr.mxu0 0.0
    %2075 = vmatpush1.xpose.msra.mxu0 0.0
    %2076 = vmatprep.subr.mxu0 0.0
    %2077 = vmatpush1.xpose.msra.mxu0 0.0
    %2078 = vmatprep.subr.mxu0 0.0
    %2079 = vmatpush1.xpose.msra.mxu0 0.0
    %2080 = vmatprep.subr.mxu0 0.0
    %2081 = vmatpush1.xpose.msra.mxu0 0.0
    %2082 = vmatprep.subr.mxu0 0.0
    %2083 = vmatpush1.xpose.msra.mxu0 0.0
    %2084 = vmatprep.subr.mxu0 0.0
    %2085 = vmatpush1.xpose.msra.mxu0 0.0
    %2086 = vmatprep.subr.mxu0 0.0
    %2087 = vmatpush1.xpose.msra.mxu0 0.0
    %2088 = vmatprep.subr.mxu0 0.0
    %2089 = vmatpush1.xpose.msra.mxu0 0.0
    %2090 = vmatprep.subr.mxu0 0.0
    %2091 = vmatpush1.xpose.msra.mxu0 0.0
    %2092 = vmatprep.subr.mxu0 0.0
    %2093 = vmatpush1.xpose.msra.mxu0 0.0
    %2094 = vmatprep.subr.mxu0 0.0
    %2095 = vmatpush1.xpose.msra.mxu0 0.0
    %2096 = vmatprep.subr.mxu0 0.0
    %2097 = vmatpush1.xpose.msra.mxu0 0.0
    %2098 = vmatprep.mubr.f32.mxu0 0.0
    %v2099 = vand.u32 %v1948, 4294901760
    %2100 = vmatmul.mubr.f32.gmra.mrb[0].mxu0 %v2099
    %v2101 = vpop.f32.mrb[0].mxu0
    %v2102 = vadd.f32 %v2026, %v2101
    %v2103 = vpop.f32.mrb[0].mxu0
    %2104 = vdwg.mxu0
    %2105 = vmatprep.subr.mxu0 0.0
    %v2106 = vand.u32 %v1951, 4294901760
    %v2107 = vsub.f32 %v1951, %v2106
    %2108 = vmatpush1.xpose.msra.mxu0 %v2107
    %2109 = vmatprep.subr.mxu0 0.0
    %2110 = vmatpush1.xpose.msra.mxu0 0.0
    %2111 = vmatprep.subr.mxu0 0.0
    %2112 = vmatpush1.xpose.msra.mxu0 0.0
    %2113 = vmatprep.subr.mxu0 0.0
    %2114 = vmatpush1.xpose.msra.mxu0 0.0
    %2115 = vmatprep.subr.mxu0 0.0
    %2116 = vmatpush1.xpose.msra.mxu0 0.0
    %2117 = vmatprep.subr.mxu0 0.0
    %2118 = vmatpush1.xpose.msra.mxu0 0.0
    %2119 = vmatprep.subr.mxu0 0.0
    %2120 = vmatpush1.xpose.msra.mxu0 0.0
    %2121 = vmatprep.subr.mxu0 0.0
    %2122 = vmatpush1.xpose.msra.mxu0 0.0
    %2123 = vmatprep.subr.mxu0 0.0
    %2124 = vmatpush1.xpose.msra.mxu0 0.0
    %2125 = vmatprep.subr.mxu0 0.0
    %2126 = vmatpush1.xpose.msra.mxu0 0.0
    %2127 = vmatprep.subr.mxu0 0.0
    %2128 = vmatpush1.xpose.msra.mxu0 0.0
    %2129 = vmatprep.subr.mxu0 0.0
    %2130 = vmatpush1.xpose.msra.mxu0 0.0
    %2131 = vmatprep.subr.mxu0 0.0
    %2132 = vmatpush1.xpose.msra.mxu0 0.0
    %2133 = vmatprep.subr.mxu0 0.0
    %2134 = vmatpush1.xpose.msra.mxu0 0.0
    %2135 = vmatprep.subr.mxu0 0.0
    %2136 = vmatpush1.xpose.msra.mxu0 0.0
    %2137 = vmatprep.subr.mxu0 0.0
    %2138 = vmatpush1.xpose.msra.mxu0 0.0
    %2139 = vmatprep.subr.mxu0 0.0
    %2140 = vmatpush1.xpose.msra.mxu0 0.0
    %2141 = vmatprep.subr.mxu0 0.0
    %2142 = vmatpush1.xpose.msra.mxu0 0.0
    %2143 = vmatprep.subr.mxu0 0.0
    %2144 = vmatpush1.xpose.msra.mxu0 0.0
    %2145 = vmatprep.subr.mxu0 0.0
    %2146 = vmatpush1.xpose.msra.mxu0 0.0
    %2147 = vmatprep.subr.mxu0 0.0
    %2148 = vmatpush1.xpose.msra.mxu0 0.0
    %2149 = vmatprep.subr.mxu0 0.0
    %2150 = vmatpush1.xpose.msra.mxu0 0.0
    %2151 = vmatprep.subr.mxu0 0.0
    %2152 = vmatpush1.xpose.msra.mxu0 0.0
    %2153 = vmatprep.subr.mxu0 0.0
    %2154 = vmatpush1.xpose.msra.mxu0 0.0
    %2155 = vmatprep.subr.mxu0 0.0
    %2156 = vmatpush1.xpose.msra.mxu0 0.0
    %2157 = vmatprep.subr.mxu0 0.0
    %2158 = vmatpush1.xpose.msra.mxu0 0.0
    %2159 = vmatprep.subr.mxu0 0.0
    %2160 = vmatpush1.xpose.msra.mxu0 0.0
    %2161 = vmatprep.subr.mxu0 0.0
    %2162 = vmatpush1.xpose.msra.mxu0 0.0
    %2163 = vmatprep.subr.mxu0 0.0
    %2164 = vmatpush1.xpose.msra.mxu0 0.0
    %2165 = vmatprep.subr.mxu0 0.0
    %2166 = vmatpush1.xpose.msra.mxu0 0.0
    %2167 = vmatprep.subr.mxu0 0.0
    %2168 = vmatpush1.xpose.msra.mxu0 0.0
    %2169 = vmatprep.subr.mxu0 0.0
    %2170 = vmatpush1.xpose.msra.mxu0 0.0
    %2171 = vmatprep.mubr.f32.mxu0 0.0
    %v2172 = vand.u32 %v1948, 4294901760
    %v2173 = vsub.f32 %v1948, %v2172
    %2174 = vmatmul.mubr.f32.gmra.mrb[0].mxu0 %v2173
    %v2175 = vpop.f32.mrb[0].mxu0
    %v2176 = vadd.f32 %v2102, %v2175
    %v2177 = vpop.f32.mrb[0].mxu0
    %2178 = vdwg.mxu0
    %2179 = vmatprep.subr.mxu0 0.0
    %v2180 = vand.u32 %v1951, 4294901760
    %2181 = vmatpush1.xpose.msra.mxu0 %v2180
    %2182 = vmatprep.subr.mxu0 0.0
    %2183 = vmatpush1.xpose.msra.mxu0 0.0
    %2184 = vmatprep.subr.mxu0 0.0
    %2185 = vmatpush1.xpose.msra.mxu0 0.0
    %2186 = vmatprep.subr.mxu0 0.0
    %2187 = vmatpush1.xpose.msra.mxu0 0.0
    %2188 = vmatprep.subr.mxu0 0.0
    %2189 = vmatpush1.xpose.msra.mxu0 0.0
    %2190 = vmatprep.subr.mxu0 0.0
    %2191 = vmatpush1.xpose.msra.mxu0 0.0
    %2192 = vmatprep.subr.mxu0 0.0
    %2193 = vmatpush1.xpose.msra.mxu0 0.0
    %2194 = vmatprep.subr.mxu0 0.0
    %2195 = vmatpush1.xpose.msra.mxu0 0.0
    %2196 = vmatprep.subr.mxu0 0.0
    %2197 = vmatpush1.xpose.msra.mxu0 0.0
    %2198 = vmatprep.subr.mxu0 0.0
    %2199 = vmatpush1.xpose.msra.mxu0 0.0
    %2200 = vmatprep.subr.mxu0 0.0
    %2201 = vmatpush1.xpose.msra.mxu0 0.0
    %2202 = vmatprep.subr.mxu0 0.0
    %2203 = vmatpush1.xpose.msra.mxu0 0.0
    %2204 = vmatprep.subr.mxu0 0.0
    %2205 = vmatpush1.xpose.msra.mxu0 0.0
    %2206 = vmatprep.subr.mxu0 0.0
    %2207 = vmatpush1.xpose.msra.mxu0 0.0
    %2208 = vmatprep.subr.mxu0 0.0
    %2209 = vmatpush1.xpose.msra.mxu0 0.0
    %2210 = vmatprep.subr.mxu0 0.0
    %2211 = vmatpush1.xpose.msra.mxu0 0.0
    %2212 = vmatprep.subr.mxu0 0.0
    %2213 = vmatpush1.xpose.msra.mxu0 0.0
    %2214 = vmatprep.subr.mxu0 0.0
    %2215 = vmatpush1.xpose.msra.mxu0 0.0
    %2216 = vmatprep.subr.mxu0 0.0
    %2217 = vmatpush1.xpose.msra.mxu0 0.0
    %2218 = vmatprep.subr.mxu0 0.0
    %2219 = vmatpush1.xpose.msra.mxu0 0.0
    %2220 = vmatprep.subr.mxu0 0.0
    %2221 = vmatpush1.xpose.msra.mxu0 0.0
    %2222 = vmatprep.subr.mxu0 0.0
    %2223 = vmatpush1.xpose.msra.mxu0 0.0
    %2224 = vmatprep.subr.mxu0 0.0
    %2225 = vmatpush1.xpose.msra.mxu0 0.0
    %2226 = vmatprep.subr.mxu0 0.0
    %2227 = vmatpush1.xpose.msra.mxu0 0.0
    %2228 = vmatprep.subr.mxu0 0.0
    %2229 = vmatpush1.xpose.msra.mxu0 0.0
    %2230 = vmatprep.subr.mxu0 0.0
    %2231 = vmatpush1.xpose.msra.mxu0 0.0
    %2232 = vmatprep.subr.mxu0 0.0
    %2233 = vmatpush1.xpose.msra.mxu0 0.0
    %2234 = vmatprep.subr.mxu0 0.0
    %2235 = vmatpush1.xpose.msra.mxu0 0.0
    %2236 = vmatprep.subr.mxu0 0.0
    %2237 = vmatpush1.xpose.msra.mxu0 0.0
    %2238 = vmatprep.subr.mxu0 0.0
    %2239 = vmatpush1.xpose.msra.mxu0 0.0
    %2240 = vmatprep.subr.mxu0 0.0
    %2241 = vmatpush1.xpose.msra.mxu0 0.0
    %2242 = vmatprep.subr.mxu0 0.0
    %2243 = vmatpush1.xpose.msra.mxu0 0.0
    %2244 = vmatprep.mubr.f32.mxu0 0.0
    %v2245 = vand.u32 %v1948, 4294901760
    %v2246 = vsub.f32 %v1948, %v2245
    %v2247 = vand.u32 %v2246, 4294901760
    %2248 = vmatmul.mubr.f32.gmra.mrb[0].mxu0 %v2247
    %v2249 = vpop.f32.mrb[0].mxu0
    %v2250 = vadd.f32 %v2176, %v2249
    %v2251 = vpop.f32.mrb[0].mxu0
    %2252 = vdwg.mxu0
    %2253 = vmatprep.subr.mxu0 0.0
    %v2254 = vand.u32 %v1951, 4294901760
    %v2255 = vsub.f32 %v1951, %v2254
    %v2256 = vand.u32 %v2255, 4294901760
    %2257 = vmatpush1.xpose.msra.mxu0 %v2256
    %2258 = vmatprep.subr.mxu0 0.0
    %2259 = vmatpush1.xpose.msra.mxu0 0.0
    %2260 = vmatprep.subr.mxu0 0.0
    %2261 = vmatpush1.xpose.msra.mxu0 0.0
    %2262 = vmatprep.subr.mxu0 0.0
    %2263 = vmatpush1.xpose.msra.mxu0 0.0
    %2264 = vmatprep.subr.mxu0 0.0
    %2265 = vmatpush1.xpose.msra.mxu0 0.0
    %2266 = vmatprep.subr.mxu0 0.0
    %2267 = vmatpush1.xpose.msra.mxu0 0.0
    %2268 = vmatprep.subr.mxu0 0.0
    %2269 = vmatpush1.xpose.msra.mxu0 0.0
    %2270 = vmatprep.subr.mxu0 0.0
    %2271 = vmatpush1.xpose.msra.mxu0 0.0
    %2272 = vmatprep.subr.mxu0 0.0
    %2273 = vmatpush1.xpose.msra.mxu0 0.0
    %2274 = vmatprep.subr.mxu0 0.0
    %2275 = vmatpush1.xpose.msra.mxu0 0.0
    %2276 = vmatprep.subr.mxu0 0.0
    %2277 = vmatpush1.xpose.msra.mxu0 0.0
    %2278 = vmatprep.subr.mxu0 0.0
    %2279 = vmatpush1.xpose.msra.mxu0 0.0
    %2280 = vmatprep.subr.mxu0 0.0
    %2281 = vmatpush1.xpose.msra.mxu0 0.0
    %2282 = vmatprep.subr.mxu0 0.0
    %2283 = vmatpush1.xpose.msra.mxu0 0.0
    %2284 = vmatprep.subr.mxu0 0.0
    %2285 = vmatpush1.xpose.msra.mxu0 0.0
    %2286 = vmatprep.subr.mxu0 0.0
    %2287 = vmatpush1.xpose.msra.mxu0 0.0
    %2288 = vmatprep.subr.mxu0 0.0
    %2289 = vmatpush1.xpose.msra.mxu0 0.0
    %2290 = vmatprep.subr.mxu0 0.0
    %2291 = vmatpush1.xpose.msra.mxu0 0.0
    %2292 = vmatprep.subr.mxu0 0.0
    %2293 = vmatpush1.xpose.msra.mxu0 0.0
    %2294 = vmatprep.subr.mxu0 0.0
    %2295 = vmatpush1.xpose.msra.mxu0 0.0
    %2296 = vmatprep.subr.mxu0 0.0
    %2297 = vmatpush1.xpose.msra.mxu0 0.0
    %2298 = vmatprep.subr.mxu0 0.0
    %2299 = vmatpush1.xpose.msra.mxu0 0.0
    %2300 = vmatprep.subr.mxu0 0.0
    %2301 = vmatpush1.xpose.msra.mxu0 0.0
    %2302 = vmatprep.subr.mxu0 0.0
    %2303 = vmatpush1.xpose.msra.mxu0 0.0
    %2304 = vmatprep.subr.mxu0 0.0
    %2305 = vmatpush1.xpose.msra.mxu0 0.0
    %2306 = vmatprep.subr.mxu0 0.0
    %2307 = vmatpush1.xpose.msra.mxu0 0.0
    %2308 = vmatprep.subr.mxu0 0.0
    %2309 = vmatpush1.xpose.msra.mxu0 0.0
    %2310 = vmatprep.subr.mxu0 0.0
    %2311 = vmatpush1.xpose.msra.mxu0 0.0
    %2312 = vmatprep.subr.mxu0 0.0
    %2313 = vmatpush1.xpose.msra.mxu0 0.0
    %2314 = vmatprep.subr.mxu0 0.0
    %2315 = vmatpush1.xpose.msra.mxu0 0.0
    %2316 = vmatprep.subr.mxu0 0.0
    %2317 = vmatpush1.xpose.msra.mxu0 0.0
    %2318 = vmatprep.subr.mxu0 0.0
    %2319 = vmatpush1.xpose.msra.mxu0 0.0
    %2320 = vmatprep.mubr.f32.mxu0 0.0
    %v2321 = vand.u32 %v1948, 4294901760
    %2322 = vmatmul.mubr.f32.gmra.mrb[0].mxu0 %v2321
    %v2323 = vpop.f32.mrb[0].mxu0
    %v2324 = vadd.f32 %v2250, %v2323
    %v2325 = vpop.f32.mrb[0].mxu0
    %2326 = vdwg.mxu0
    %2327 = vmatprep.subr.mxu0 0.0
    %v2328 = vand.u32 %v1951, 4294901760
    %2329 = vmatpush1.xpose.msra.mxu0 %v2328
    %2330 = vmatprep.subr.mxu0 0.0
    %2331 = vmatpush1.xpose.msra.mxu0 0.0
    %2332 = vmatprep.subr.mxu0 0.0
    %2333 = vmatpush1.xpose.msra.mxu0 0.0
    %2334 = vmatprep.subr.mxu0 0.0
    %2335 = vmatpush1.xpose.msra.mxu0 0.0
    %2336 = vmatprep.subr.mxu0 0.0
    %2337 = vmatpush1.xpose.msra.mxu0 0.0
    %2338 = vmatprep.subr.mxu0 0.0
    %2339 = vmatpush1.xpose.msra.mxu0 0.0
    %2340 = vmatprep.subr.mxu0 0.0
    %2341 = vmatpush1.xpose.msra.mxu0 0.0
    %2342 = vmatprep.subr.mxu0 0.0
    %2343 = vmatpush1.xpose.msra.mxu0 0.0
    %2344 = vmatprep.subr.mxu0 0.0
    %2345 = vmatpush1.xpose.msra.mxu0 0.0
    %2346 = vmatprep.subr.mxu0 0.0
    %2347 = vmatpush1.xpose.msra.mxu0 0.0
    %2348 = vmatprep.subr.mxu0 0.0
    %2349 = vmatpush1.xpose.msra.mxu0 0.0
    %2350 = vmatprep.subr.mxu0 0.0
    %2351 = vmatpush1.xpose.msra.mxu0 0.0
    %2352 = vmatprep.subr.mxu0 0.0
    %2353 = vmatpush1.xpose.msra.mxu0 0.0
    %2354 = vmatprep.subr.mxu0 0.0
    %2355 = vmatpush1.xpose.msra.mxu0 0.0
    %2356 = vmatprep.subr.mxu0 0.0
    %2357 = vmatpush1.xpose.msra.mxu0 0.0
    %2358 = vmatprep.subr.mxu0 0.0
    %2359 = vmatpush1.xpose.msra.mxu0 0.0
    %2360 = vmatprep.subr.mxu0 0.0
    %2361 = vmatpush1.xpose.msra.mxu0 0.0
    %2362 = vmatprep.subr.mxu0 0.0
    %2363 = vmatpush1.xpose.msra.mxu0 0.0
    %2364 = vmatprep.subr.mxu0 0.0
    %2365 = vmatpush1.xpose.msra.mxu0 0.0
    %2366 = vmatprep.subr.mxu0 0.0
    %2367 = vmatpush1.xpose.msra.mxu0 0.0
    %2368 = vmatprep.subr.mxu0 0.0
    %2369 = vmatpush1.xpose.msra.mxu0 0.0
    %2370 = vmatprep.subr.mxu0 0.0
    %2371 = vmatpush1.xpose.msra.mxu0 0.0
    %2372 = vmatprep.subr.mxu0 0.0
    %2373 = vmatpush1.xpose.msra.mxu0 0.0
    %2374 = vmatprep.subr.mxu0 0.0
    %2375 = vmatpush1.xpose.msra.mxu0 0.0
    %2376 = vmatprep.subr.mxu0 0.0
    %2377 = vmatpush1.xpose.msra.mxu0 0.0
    %2378 = vmatprep.subr.mxu0 0.0
    %2379 = vmatpush1.xpose.msra.mxu0 0.0
    %2380 = vmatprep.subr.mxu0 0.0
    %2381 = vmatpush1.xpose.msra.mxu0 0.0
    %2382 = vmatprep.subr.mxu0 0.0
    %2383 = vmatpush1.xpose.msra.mxu0 0.0
    %2384 = vmatprep.subr.mxu0 0.0
    %2385 = vmatpush1.xpose.msra.mxu0 0.0
    %2386 = vmatprep.subr.mxu0 0.0
    %2387 = vmatpush1.xpose.msra.mxu0 0.0
    %2388 = vmatprep.subr.mxu0 0.0
    %2389 = vmatpush1.xpose.msra.mxu0 0.0
    %2390 = vmatprep.subr.mxu0 0.0
    %2391 = vmatpush1.xpose.msra.mxu0 0.0
    %2392 = vmatprep.mubr.f32.mxu0 0.0
    %v2393 = vand.u32 %v1948, 4294901760
    %2394 = vmatmul.mubr.f32.gmra.mrb[0].mxu0 %v2393
    %v2395 = vpop.f32.mrb[0].mxu0
    %v2396 = vadd.f32 %v2324, %v2395
    %v2397 = vpop.f32.mrb[0].mxu0
    %2398 = vdwg.mxu0
    %v2399 = vsel %vm143, %v138, 0
    %v2402 = vsel %vm143, %v89, 0
    %2404 = vmatprep.subr.mxu0 0.0
    %v2405 = vand.u32 %v2402, 4294901760
    %2406 = vmatpush1.xpose.msra.mxu0 %v2405
    %2407 = vmatprep.subr.mxu0 0.0
    %2408 = vmatpush1.xpose.msra.mxu0 0.0
    %2409 = vmatprep.subr.mxu0 0.0
    %2410 = vmatpush1.xpose.msra.mxu0 0.0
    %2411 = vmatprep.subr.mxu0 0.0
    %2412 = vmatpush1.xpose.msra.mxu0 0.0
    %2413 = vmatprep.subr.mxu0 0.0
    %2414 = vmatpush1.xpose.msra.mxu0 0.0
    %2415 = vmatprep.subr.mxu0 0.0
    %2416 = vmatpush1.xpose.msra.mxu0 0.0
    %2417 = vmatprep.subr.mxu0 0.0
    %2418 = vmatpush1.xpose.msra.mxu0 0.0
    %2419 = vmatprep.subr.mxu0 0.0
    %2420 = vmatpush1.xpose.msra.mxu0 0.0
    %2421 = vmatprep.subr.mxu0 0.0
    %2422 = vmatpush1.xpose.msra.mxu0 0.0
    %2423 = vmatprep.subr.mxu0 0.0
    %2424 = vmatpush1.xpose.msra.mxu0 0.0
    %2425 = vmatprep.subr.mxu0 0.0
    %2426 = vmatpush1.xpose.msra.mxu0 0.0
    %2427 = vmatprep.subr.mxu0 0.0
    %2428 = vmatpush1.xpose.msra.mxu0 0.0
    %2429 = vmatprep.subr.mxu0 0.0
    %2430 = vmatpush1.xpose.msra.mxu0 0.0
    %2431 = vmatprep.subr.mxu0 0.0
    %2432 = vmatpush1.xpose.msra.mxu0 0.0
    %2433 = vmatprep.subr.mxu0 0.0
    %2434 = vmatpush1.xpose.msra.mxu0 0.0
    %2435 = vmatprep.subr.mxu0 0.0
    %2436 = vmatpush1.xpose.msra.mxu0 0.0
    %2437 = vmatprep.subr.mxu0 0.0
    %2438 = vmatpush1.xpose.msra.mxu0 0.0
    %2439 = vmatprep.subr.mxu0 0.0
    %2440 = vmatpush1.xpose.msra.mxu0 0.0
    %2441 = vmatprep.subr.mxu0 0.0
    %2442 = vmatpush1.xpose.msra.mxu0 0.0
    %2443 = vmatprep.subr.mxu0 0.0
    %2444 = vmatpush1.xpose.msra.mxu0 0.0
    %2445 = vmatprep.subr.mxu0 0.0
    %2446 = vmatpush1.xpose.msra.mxu0 0.0
    %2447 = vmatprep.subr.mxu0 0.0
    %2448 = vmatpush1.xpose.msra.mxu0 0.0
    %2449 = vmatprep.subr.mxu0 0.0
    %2450 = vmatpush1.xpose.msra.mxu0 0.0
    %2451 = vmatprep.subr.mxu0 0.0
    %2452 = vmatpush1.xpose.msra.mxu0 0.0
    %2453 = vmatprep.subr.mxu0 0.0
    %2454 = vmatpush1.xpose.msra.mxu0 0.0
    %2455 = vmatprep.subr.mxu0 0.0
    %2456 = vmatpush1.xpose.msra.mxu0 0.0
    %2457 = vmatprep.subr.mxu0 0.0
    %2458 = vmatpush1.xpose.msra.mxu0 0.0
    %2459 = vmatprep.subr.mxu0 0.0
    %2460 = vmatpush1.xpose.msra.mxu0 0.0
    %2461 = vmatprep.subr.mxu0 0.0
    %2462 = vmatpush1.xpose.msra.mxu0 0.0
    %2463 = vmatprep.subr.mxu0 0.0
    %2464 = vmatpush1.xpose.msra.mxu0 0.0
    %2465 = vmatprep.subr.mxu0 0.0
    %2466 = vmatpush1.xpose.msra.mxu0 0.0
    %2467 = vmatprep.subr.mxu0 0.0
    %2468 = vmatpush1.xpose.msra.mxu0 0.0
    %2469 = vmatprep.mubr.f32.mxu0 0.0
    %v2470 = vand.u32 %v2399, 4294901760
    %v2471 = vsub.f32 %v2399, %v2470
    %v2472 = vand.u32 %v2471, 4294901760
    %v2473 = vsub.f32 %v2471, %v2472
    %v2474 = vand.u32 %v2473, 4294901760
    %2475 = vmatmul.mubr.f32.gmra.mrb[0].mxu0 %v2474
    %v2476 = vpop.f32.mrb[0].mxu0
    %v2477 = vadd.f32 0.0, %v2476
    %v2478 = vpop.f32.mrb[0].mxu0
    %2479 = vdwg.mxu0
    %2480 = vmatprep.subr.mxu0 0.0
    %v2481 = vand.u32 %v2402, 4294901760
    %v2482 = vsub.f32 %v2402, %v2481
    %v2483 = vand.u32 %v2482, 4294901760
    %v2484 = vsub.f32 %v2482, %v2483
    %v2485 = vand.u32 %v2484, 4294901760
    %2486 = vmatpush1.xpose.msra.mxu0 %v2485
    %2487 = vmatprep.subr.mxu0 0.0
    %2488 = vmatpush1.xpose.msra.mxu0 0.0
    %2489 = vmatprep.subr.mxu0 0.0
    %2490 = vmatpush1.xpose.msra.mxu0 0.0
    %2491 = vmatprep.subr.mxu0 0.0
    %2492 = vmatpush1.xpose.msra.mxu0 0.0
    %2493 = vmatprep.subr.mxu0 0.0
    %2494 = vmatpush1.xpose.msra.mxu0 0.0
    %2495 = vmatprep.subr.mxu0 0.0
    %2496 = vmatpush1.xpose.msra.mxu0 0.0
    %2497 = vmatprep.subr.mxu0 0.0
    %2498 = vmatpush1.xpose.msra.mxu0 0.0
    %2499 = vmatprep.subr.mxu0 0.0
    %2500 = vmatpush1.xpose.msra.mxu0 0.0
    %2501 = vmatprep.subr.mxu0 0.0
    %2502 = vmatpush1.xpose.msra.mxu0 0.0
    %2503 = vmatprep.subr.mxu0 0.0
    %2504 = vmatpush1.xpose.msra.mxu0 0.0
    %2505 = vmatprep.subr.mxu0 0.0
    %2506 = vmatpush1.xpose.msra.mxu0 0.0
    %2507 = vmatprep.subr.mxu0 0.0
    %2508 = vmatpush1.xpose.msra.mxu0 0.0
    %2509 = vmatprep.subr.mxu0 0.0
    %2510 = vmatpush1.xpose.msra.mxu0 0.0
    %2511 = vmatprep.subr.mxu0 0.0
    %2512 = vmatpush1.xpose.msra.mxu0 0.0
    %2513 = vmatprep.subr.mxu0 0.0
    %2514 = vmatpush1.xpose.msra.mxu0 0.0
    %2515 = vmatprep.subr.mxu0 0.0
    %2516 = vmatpush1.xpose.msra.mxu0 0.0
    %2517 = vmatprep.subr.mxu0 0.0
    %2518 = vmatpush1.xpose.msra.mxu0 0.0
    %2519 = vmatprep.subr.mxu0 0.0
    %2520 = vmatpush1.xpose.msra.mxu0 0.0
    %2521 = vmatprep.subr.mxu0 0.0
    %2522 = vmatpush1.xpose.msra.mxu0 0.0
    %2523 = vmatprep.subr.mxu0 0.0
    %2524 = vmatpush1.xpose.msra.mxu0 0.0
    %2525 = vmatprep.subr.mxu0 0.0
    %2526 = vmatpush1.xpose.msra.mxu0 0.0
    %2527 = vmatprep.subr.mxu0 0.0
    %2528 = vmatpush1.xpose.msra.mxu0 0.0
    %2529 = vmatprep.subr.mxu0 0.0
    %2530 = vmatpush1.xpose.msra.mxu0 0.0
    %2531 = vmatprep.subr.mxu0 0.0
    %2532 = vmatpush1.xpose.msra.mxu0 0.0
    %2533 = vmatprep.subr.mxu0 0.0
    %2534 = vmatpush1.xpose.msra.mxu0 0.0
    %2535 = vmatprep.subr.mxu0 0.0
    %2536 = vmatpush1.xpose.msra.mxu0 0.0
    %2537 = vmatprep.subr.mxu0 0.0
    %2538 = vmatpush1.xpose.msra.mxu0 0.0
    %2539 = vmatprep.subr.mxu0 0.0
    %2540 = vmatpush1.xpose.msra.mxu0 0.0
    %2541 = vmatprep.subr.mxu0 0.0
    %2542 = vmatpush1.xpose.msra.mxu0 0.0
    %2543 = vmatprep.subr.mxu0 0.0
    %2544 = vmatpush1.xpose.msra.mxu0 0.0
    %2545 = vmatprep.subr.mxu0 0.0
    %2546 = vmatpush1.xpose.msra.mxu0 0.0
    %2547 = vmatprep.subr.mxu0 0.0
    %2548 = vmatpush1.xpose.msra.mxu0 0.0
    %2549 = vmatprep.mubr.f32.mxu0 0.0
    %v2550 = vand.u32 %v2399, 4294901760
    %2551 = vmatmul.mubr.f32.gmra.mrb[0].mxu0 %v2550
    %v2552 = vpop.f32.mrb[0].mxu0
    %v2553 = vadd.f32 %v2477, %v2552
    %v2554 = vpop.f32.mrb[0].mxu0
    %2555 = vdwg.mxu0
    %2556 = vmatprep.subr.mxu0 0.0
    %v2557 = vand.u32 %v2402, 4294901760
    %v2558 = vsub.f32 %v2402, %v2557
    %2559 = vmatpush1.xpose.msra.mxu0 %v2558
    %2560 = vmatprep.subr.mxu0 0.0
    %2561 = vmatpush1.xpose.msra.mxu0 0.0
    %2562 = vmatprep.subr.mxu0 0.0
    %2563 = vmatpush1.xpose.msra.mxu0 0.0
    %2564 = vmatprep.subr.mxu0 0.0
    %2565 = vmatpush1.xpose.msra.mxu0 0.0
    %2566 = vmatprep.subr.mxu0 0.0
    %2567 = vmatpush1.xpose.msra.mxu0 0.0
    %2568 = vmatprep.subr.mxu0 0.0
    %2569 = vmatpush1.xpose.msra.mxu0 0.0
    %2570 = vmatprep.subr.mxu0 0.0
    %2571 = vmatpush1.xpose.msra.mxu0 0.0
    %2572 = vmatprep.subr.mxu0 0.0
    %2573 = vmatpush1.xpose.msra.mxu0 0.0
    %2574 = vmatprep.subr.mxu0 0.0
    %2575 = vmatpush1.xpose.msra.mxu0 0.0
    %2576 = vmatprep.subr.mxu0 0.0
    %2577 = vmatpush1.xpose.msra.mxu0 0.0
    %2578 = vmatprep.subr.mxu0 0.0
    %2579 = vmatpush1.xpose.msra.mxu0 0.0
    %2580 = vmatprep.subr.mxu0 0.0
    %2581 = vmatpush1.xpose.msra.mxu0 0.0
    %2582 = vmatprep.subr.mxu0 0.0
    %2583 = vmatpush1.xpose.msra.mxu0 0.0
    %2584 = vmatprep.subr.mxu0 0.0
    %2585 = vmatpush1.xpose.msra.mxu0 0.0
    %2586 = vmatprep.subr.mxu0 0.0
    %2587 = vmatpush1.xpose.msra.mxu0 0.0
    %2588 = vmatprep.subr.mxu0 0.0
    %2589 = vmatpush1.xpose.msra.mxu0 0.0
    %2590 = vmatprep.subr.mxu0 0.0
    %2591 = vmatpush1.xpose.msra.mxu0 0.0
    %2592 = vmatprep.subr.mxu0 0.0
    %2593 = vmatpush1.xpose.msra.mxu0 0.0
    %2594 = vmatprep.subr.mxu0 0.0
    %2595 = vmatpush1.xpose.msra.mxu0 0.0
    %2596 = vmatprep.subr.mxu0 0.0
    %2597 = vmatpush1.xpose.msra.mxu0 0.0
    %2598 = vmatprep.subr.mxu0 0.0
    %2599 = vmatpush1.xpose.msra.mxu0 0.0
    %2600 = vmatprep.subr.mxu0 0.0
    %2601 = vmatpush1.xpose.msra.mxu0 0.0
    %2602 = vmatprep.subr.mxu0 0.0
    %2603 = vmatpush1.xpose.msra.mxu0 0.0
    %2604 = vmatprep.subr.mxu0 0.0
    %2605 = vmatpush1.xpose.msra.mxu0 0.0
    %2606 = vmatprep.subr.mxu0 0.0
    %2607 = vmatpush1.xpose.msra.mxu0 0.0
    %2608 = vmatprep.subr.mxu0 0.0
    %2609 = vmatpush1.xpose.msra.mxu0 0.0
    %2610 = vmatprep.subr.mxu0 0.0
    %2611 = vmatpush1.xpose.msra.mxu0 0.0
    %2612 = vmatprep.subr.mxu0 0.0
    %2613 = vmatpush1.xpose.msra.mxu0 0.0
    %2614 = vmatprep.subr.mxu0 0.0
    %2615 = vmatpush1.xpose.msra.mxu0 0.0
    %2616 = vmatprep.subr.mxu0 0.0
    %2617 = vmatpush1.xpose.msra.mxu0 0.0
    %2618 = vmatprep.subr.mxu0 0.0
    %2619 = vmatpush1.xpose.msra.mxu0 0.0
    %2620 = vmatprep.subr.mxu0 0.0
    %2621 = vmatpush1.xpose.msra.mxu0 0.0
    %2622 = vmatprep.mubr.f32.mxu0 0.0
    %v2623 = vand.u32 %v2399, 4294901760
    %v2624 = vsub.f32 %v2399, %v2623
    %2625 = vmatmul.mubr.f32.gmra.mrb[0].mxu0 %v2624
    %v2626 = vpop.f32.mrb[0].mxu0
    %v2627 = vadd.f32 %v2553, %v2626
    %v2628 = vpop.f32.mrb[0].mxu0
    %2629 = vdwg.mxu0
    %2630 = vmatprep.subr.mxu0 0.0
    %v2631 = vand.u32 %v2402, 4294901760
    %2632 = vmatpush1.xpose.msra.mxu0 %v2631
    %2633 = vmatprep.subr.mxu0 0.0
    %2634 = vmatpush1.xpose.msra.mxu0 0.0
    %2635 = vmatprep.subr.mxu0 0.0
    %2636 = vmatpush1.xpose.msra.mxu0 0.0
    %2637 = vmatprep.subr.mxu0 0.0
    %2638 = vmatpush1.xpose.msra.mxu0 0.0
    %2639 = vmatprep.subr.mxu0 0.0
    %2640 = vmatpush1.xpose.msra.mxu0 0.0
    %2641 = vmatprep.subr.mxu0 0.0
    %2642 = vmatpush1.xpose.msra.mxu0 0.0
    %2643 = vmatprep.subr.mxu0 0.0
    %2644 = vmatpush1.xpose.msra.mxu0 0.0
    %2645 = vmatprep.subr.mxu0 0.0
    %2646 = vmatpush1.xpose.msra.mxu0 0.0
    %2647 = vmatprep.subr.mxu0 0.0
    %2648 = vmatpush1.xpose.msra.mxu0 0.0
    %2649 = vmatprep.subr.mxu0 0.0
    %2650 = vmatpush1.xpose.msra.mxu0 0.0
    %2651 = vmatprep.subr.mxu0 0.0
    %2652 = vmatpush1.xpose.msra.mxu0 0.0
    %2653 = vmatprep.subr.mxu0 0.0
    %2654 = vmatpush1.xpose.msra.mxu0 0.0
    %2655 = vmatprep.subr.mxu0 0.0
    %2656 = vmatpush1.xpose.msra.mxu0 0.0
    %2657 = vmatprep.subr.mxu0 0.0
    %2658 = vmatpush1.xpose.msra.mxu0 0.0
    %2659 = vmatprep.subr.mxu0 0.0
    %2660 = vmatpush1.xpose.msra.mxu0 0.0
    %2661 = vmatprep.subr.mxu0 0.0
    %2662 = vmatpush1.xpose.msra.mxu0 0.0
    %2663 = vmatprep.subr.mxu0 0.0
    %2664 = vmatpush1.xpose.msra.mxu0 0.0
    %2665 = vmatprep.subr.mxu0 0.0
    %2666 = vmatpush1.xpose.msra.mxu0 0.0
    %2667 = vmatprep.subr.mxu0 0.0
    %2668 = vmatpush1.xpose.msra.mxu0 0.0
    %2669 = vmatprep.subr.mxu0 0.0
    %2670 = vmatpush1.xpose.msra.mxu0 0.0
    %2671 = vmatprep.subr.mxu0 0.0
    %2672 = vmatpush1.xpose.msra.mxu0 0.0
    %2673 = vmatprep.subr.mxu0 0.0
    %2674 = vmatpush1.xpose.msra.mxu0 0.0
    %2675 = vmatprep.subr.mxu0 0.0
    %2676 = vmatpush1.xpose.msra.mxu0 0.0
    %2677 = vmatprep.subr.mxu0 0.0
    %2678 = vmatpush1.xpose.msra.mxu0 0.0
    %2679 = vmatprep.subr.mxu0 0.0
    %2680 = vmatpush1.xpose.msra.mxu0 0.0
    %2681 = vmatprep.subr.mxu0 0.0
    %2682 = vmatpush1.xpose.msra.mxu0 0.0
    %2683 = vmatprep.subr.mxu0 0.0
    %2684 = vmatpush1.xpose.msra.mxu0 0.0
    %2685 = vmatprep.subr.mxu0 0.0
    %2686 = vmatpush1.xpose.msra.mxu0 0.0
    %2687 = vmatprep.subr.mxu0 0.0
    %2688 = vmatpush1.xpose.msra.mxu0 0.0
    %2689 = vmatprep.subr.mxu0 0.0
    %2690 = vmatpush1.xpose.msra.mxu0 0.0
    %2691 = vmatprep.subr.mxu0 0.0
    %2692 = vmatpush1.xpose.msra.mxu0 0.0
    %2693 = vmatprep.subr.mxu0 0.0
    %2694 = vmatpush1.xpose.msra.mxu0 0.0
    %2695 = vmatprep.mubr.f32.mxu0 0.0
    %v2696 = vand.u32 %v2399, 4294901760
    %v2697 = vsub.f32 %v2399, %v2696
    %v2698 = vand.u32 %v2697, 4294901760
    %2699 = vmatmul.mubr.f32.gmra.mrb[0].mxu0 %v2698
    %v2700 = vpop.f32.mrb[0].mxu0
    %v2701 = vadd.f32 %v2627, %v2700
    %v2702 = vpop.f32.mrb[0].mxu0
    %2703 = vdwg.mxu0
    %2704 = vmatprep.subr.mxu0 0.0
    %v2705 = vand.u32 %v2402, 4294901760
    %v2706 = vsub.f32 %v2402, %v2705
    %v2707 = vand.u32 %v2706, 4294901760
    %2708 = vmatpush1.xpose.msra.mxu0 %v2707
    %2709 = vmatprep.subr.mxu0 0.0
    %2710 = vmatpush1.xpose.msra.mxu0 0.0
    %2711 = vmatprep.subr.mxu0 0.0
    %2712 = vmatpush1.xpose.msra.mxu0 0.0
    %2713 = vmatprep.subr.mxu0 0.0
    %2714 = vmatpush1.xpose.msra.mxu0 0.0
    %2715 = vmatprep.subr.mxu0 0.0
    %2716 = vmatpush1.xpose.msra.mxu0 0.0
    %2717 = vmatprep.subr.mxu0 0.0
    %2718 = vmatpush1.xpose.msra.mxu0 0.0
    %2719 = vmatprep.subr.mxu0 0.0
    %2720 = vmatpush1.xpose.msra.mxu0 0.0
    %2721 = vmatprep.subr.mxu0 0.0
    %2722 = vmatpush1.xpose.msra.mxu0 0.0
    %2723 = vmatprep.subr.mxu0 0.0
    %2724 = vmatpush1.xpose.msra.mxu0 0.0
    %2725 = vmatprep.subr.mxu0 0.0
    %2726 = vmatpush1.xpose.msra.mxu0 0.0
    %2727 = vmatprep.subr.mxu0 0.0
    %2728 = vmatpush1.xpose.msra.mxu0 0.0
    %2729 = vmatprep.subr.mxu0 0.0
    %2730 = vmatpush1.xpose.msra.mxu0 0.0
    %2731 = vmatprep.subr.mxu0 0.0
    %2732 = vmatpush1.xpose.msra.mxu0 0.0
    %2733 = vmatprep.subr.mxu0 0.0
    %2734 = vmatpush1.xpose.msra.mxu0 0.0
    %2735 = vmatprep.subr.mxu0 0.0
    %2736 = vmatpush1.xpose.msra.mxu0 0.0
    %2737 = vmatprep.subr.mxu0 0.0
    %2738 = vmatpush1.xpose.msra.mxu0 0.0
    %2739 = vmatprep.subr.mxu0 0.0
    %2740 = vmatpush1.xpose.msra.mxu0 0.0
    %2741 = vmatprep.subr.mxu0 0.0
    %2742 = vmatpush1.xpose.msra.mxu0 0.0
    %2743 = vmatprep.subr.mxu0 0.0
    %2744 = vmatpush1.xpose.msra.mxu0 0.0
    %2745 = vmatprep.subr.mxu0 0.0
    %2746 = vmatpush1.xpose.msra.mxu0 0.0
    %2747 = vmatprep.subr.mxu0 0.0
    %2748 = vmatpush1.xpose.msra.mxu0 0.0
    %2749 = vmatprep.subr.mxu0 0.0
    %2750 = vmatpush1.xpose.msra.mxu0 0.0
    %2751 = vmatprep.subr.mxu0 0.0
    %2752 = vmatpush1.xpose.msra.mxu0 0.0
    %2753 = vmatprep.subr.mxu0 0.0
    %2754 = vmatpush1.xpose.msra.mxu0 0.0
    %2755 = vmatprep.subr.mxu0 0.0
    %2756 = vmatpush1.xpose.msra.mxu0 0.0
    %2757 = vmatprep.subr.mxu0 0.0
    %2758 = vmatpush1.xpose.msra.mxu0 0.0
    %2759 = vmatprep.subr.mxu0 0.0
    %2760 = vmatpush1.xpose.msra.mxu0 0.0
    %2761 = vmatprep.subr.mxu0 0.0
    %2762 = vmatpush1.xpose.msra.mxu0 0.0
    %2763 = vmatprep.subr.mxu0 0.0
    %2764 = vmatpush1.xpose.msra.mxu0 0.0
    %2765 = vmatprep.subr.mxu0 0.0
    %2766 = vmatpush1.xpose.msra.mxu0 0.0
    %2767 = vmatprep.subr.mxu0 0.0
    %2768 = vmatpush1.xpose.msra.mxu0 0.0
    %2769 = vmatprep.subr.mxu0 0.0
    %2770 = vmatpush1.xpose.msra.mxu0 0.0
    %2771 = vmatprep.mubr.f32.mxu0 0.0
    %v2772 = vand.u32 %v2399, 4294901760
    %2773 = vmatmul.mubr.f32.gmra.mrb[0].mxu0 %v2772
    %v2774 = vpop.f32.mrb[0].mxu0
    %v2775 = vadd.f32 %v2701, %v2774
    %v2776 = vpop.f32.mrb[0].mxu0
    %2777 = vdwg.mxu0
    %2778 = vmatprep.subr.mxu0 0.0
    %v2779 = vand.u32 %v2402, 4294901760
    %2780 = vmatpush1.xpose.msra.mxu0 %v2779
    %2781 = vmatprep.subr.mxu0 0.0
    %2782 = vmatpush1.xpose.msra.mxu0 0.0
    %2783 = vmatprep.subr.mxu0 0.0
    %2784 = vmatpush1.xpose.msra.mxu0 0.0
    %2785 = vmatprep.subr.mxu0 0.0
    %2786 = vmatpush1.xpose.msra.mxu0 0.0
    %2787 = vmatprep.subr.mxu0 0.0
    %2788 = vmatpush1.xpose.msra.mxu0 0.0
    %2789 = vmatprep.subr.mxu0 0.0
    %2790 = vmatpush1.xpose.msra.mxu0 0.0
    %2791 = vmatprep.subr.mxu0 0.0
    %2792 = vmatpush1.xpose.msra.mxu0 0.0
    %2793 = vmatprep.subr.mxu0 0.0
    %2794 = vmatpush1.xpose.msra.mxu0 0.0
    %2795 = vmatprep.subr.mxu0 0.0
    %2796 = vmatpush1.xpose.msra.mxu0 0.0
    %2797 = vmatprep.subr.mxu0 0.0
    %2798 = vmatpush1.xpose.msra.mxu0 0.0
    %2799 = vmatprep.subr.mxu0 0.0
    %2800 = vmatpush1.xpose.msra.mxu0 0.0
    %2801 = vmatprep.subr.mxu0 0.0
    %2802 = vmatpush1.xpose.msra.mxu0 0.0
    %2803 = vmatprep.subr.mxu0 0.0
    %2804 = vmatpush1.xpose.msra.mxu0 0.0
    %2805 = vmatprep.subr.mxu0 0.0
    %2806 = vmatpush1.xpose.msra.mxu0 0.0
    %2807 = vmatprep.subr.mxu0 0.0
    %2808 = vmatpush1.xpose.msra.mxu0 0.0
    %2809 = vmatprep.subr.mxu0 0.0
    %2810 = vmatpush1.xpose.msra.mxu0 0.0
    %2811 = vmatprep.subr.mxu0 0.0
    %2812 = vmatpush1.xpose.msra.mxu0 0.0
    %2813 = vmatprep.subr.mxu0 0.0
    %2814 = vmatpush1.xpose.msra.mxu0 0.0
    %2815 = vmatprep.subr.mxu0 0.0
    %2816 = vmatpush1.xpose.msra.mxu0 0.0
    %2817 = vmatprep.subr.mxu0 0.0
    %2818 = vmatpush1.xpose.msra.mxu0 0.0
    %2819 = vmatprep.subr.mxu0 0.0
    %2820 = vmatpush1.xpose.msra.mxu0 0.0
    %2821 = vmatprep.subr.mxu0 0.0
    %2822 = vmatpush1.xpose.msra.mxu0 0.0
    %2823 = vmatprep.subr.mxu0 0.0
    %2824 = vmatpush1.xpose.msra.mxu0 0.0
    %2825 = vmatprep.subr.mxu0 0.0
    %2826 = vmatpush1.xpose.msra.mxu0 0.0
    %2827 = vmatprep.subr.mxu0 0.0
    %2828 = vmatpush1.xpose.msra.mxu0 0.0
    %2829 = vmatprep.subr.mxu0 0.0
    %2830 = vmatpush1.xpose.msra.mxu0 0.0
    %2831 = vmatprep.subr.mxu0 0.0
    %2832 = vmatpush1.xpose.msra.mxu0 0.0
    %2833 = vmatprep.subr.mxu0 0.0
    %2834 = vmatpush1.xpose.msra.mxu0 0.0
    %2835 = vmatprep.subr.mxu0 0.0
    %2836 = vmatpush1.xpose.msra.mxu0 0.0
    %2837 = vmatprep.subr.mxu0 0.0
    %2838 = vmatpush1.xpose.msra.mxu0 0.0
    %2839 = vmatprep.subr.mxu0 0.0
    %2840 = vmatpush1.xpose.msra.mxu0 0.0
    %2841 = vmatprep.subr.mxu0 0.0
    %2842 = vmatpush1.xpose.msra.mxu0 0.0
    %2843 = vmatprep.mubr.f32.mxu0 0.0
    %v2844 = vand.u32 %v2399, 4294901760
    %2845 = vmatmul.mubr.f32.gmra.mrb[0].mxu0 %v2844
    %v2846 = vpop.f32.mrb[0].mxu0
    %v2847 = vadd.f32 %v2775, %v2846
    %v2848 = vpop.f32.mrb[0].mxu0
    %2849 = vdwg.mxu0
    %v2850 = vsel %vm143, %v140, 0
    %v2853 = vsel %vm143, %v90, 0
    %2855 = vmatprep.subr.mxu0 0.0
    %v2856 = vand.u32 %v2853, 4294901760
    %2857 = vmatpush1.xpose.msra.mxu0 %v2856
    %2858 = vmatprep.subr.mxu0 0.0
    %2859 = vmatpush1.xpose.msra.mxu0 0.0
    %2860 = vmatprep.subr.mxu0 0.0
    %2861 = vmatpush1.xpose.msra.mxu0 0.0
    %2862 = vmatprep.subr.mxu0 0.0
    %2863 = vmatpush1.xpose.msra.mxu0 0.0
    %2864 = vmatprep.subr.mxu0 0.0
    %2865 = vmatpush1.xpose.msra.mxu0 0.0
    %2866 = vmatprep.subr.mxu0 0.0
    %2867 = vmatpush1.xpose.msra.mxu0 0.0
    %2868 = vmatprep.subr.mxu0 0.0
    %2869 = vmatpush1.xpose.msra.mxu0 0.0
    %2870 = vmatprep.subr.mxu0 0.0
    %2871 = vmatpush1.xpose.msra.mxu0 0.0
    %2872 = vmatprep.subr.mxu0 0.0
    %2873 = vmatpush1.xpose.msra.mxu0 0.0
    %2874 = vmatprep.subr.mxu0 0.0
    %2875 = vmatpush1.xpose.msra.mxu0 0.0
    %2876 = vmatprep.subr.mxu0 0.0
    %2877 = vmatpush1.xpose.msra.mxu0 0.0
    %2878 = vmatprep.subr.mxu0 0.0
    %2879 = vmatpush1.xpose.msra.mxu0 0.0
    %2880 = vmatprep.subr.mxu0 0.0
    %2881 = vmatpush1.xpose.msra.mxu0 0.0
    %2882 = vmatprep.subr.mxu0 0.0
    %2883 = vmatpush1.xpose.msra.mxu0 0.0
    %2884 = vmatprep.subr.mxu0 0.0
    %2885 = vmatpush1.xpose.msra.mxu0 0.0
    %2886 = vmatprep.subr.mxu0 0.0
    %2887 = vmatpush1.xpose.msra.mxu0 0.0
    %2888 = vmatprep.subr.mxu0 0.0
    %2889 = vmatpush1.xpose.msra.mxu0 0.0
    %2890 = vmatprep.subr.mxu0 0.0
    %2891 = vmatpush1.xpose.msra.mxu0 0.0
    %2892 = vmatprep.subr.mxu0 0.0
    %2893 = vmatpush1.xpose.msra.mxu0 0.0
    %2894 = vmatprep.subr.mxu0 0.0
    %2895 = vmatpush1.xpose.msra.mxu0 0.0
    %2896 = vmatprep.subr.mxu0 0.0
    %2897 = vmatpush1.xpose.msra.mxu0 0.0
    %2898 = vmatprep.subr.mxu0 0.0
    %2899 = vmatpush1.xpose.msra.mxu0 0.0
    %2900 = vmatprep.subr.mxu0 0.0
    %2901 = vmatpush1.xpose.msra.mxu0 0.0
    %2902 = vmatprep.subr.mxu0 0.0
    %2903 = vmatpush1.xpose.msra.mxu0 0.0
    %2904 = vmatprep.subr.mxu0 0.0
    %2905 = vmatpush1.xpose.msra.mxu0 0.0
    %2906 = vmatprep.subr.mxu0 0.0
    %2907 = vmatpush1.xpose.msra.mxu0 0.0
    %2908 = vmatprep.subr.mxu0 0.0
    %2909 = vmatpush1.xpose.msra.mxu0 0.0
    %2910 = vmatprep.subr.mxu0 0.0
    %2911 = vmatpush1.xpose.msra.mxu0 0.0
    %2912 = vmatprep.subr.mxu0 0.0
    %2913 = vmatpush1.xpose.msra.mxu0 0.0
    %2914 = vmatprep.subr.mxu0 0.0
    %2915 = vmatpush1.xpose.msra.mxu0 0.0
    %2916 = vmatprep.subr.mxu0 0.0
    %2917 = vmatpush1.xpose.msra.mxu0 0.0
    %2918 = vmatprep.subr.mxu0 0.0
    %2919 = vmatpush1.xpose.msra.mxu0 0.0
    %2920 = vmatprep.mubr.f32.mxu0 0.0
    %v2921 = vand.u32 %v2850, 4294901760
    %v2922 = vsub.f32 %v2850, %v2921
    %v2923 = vand.u32 %v2922, 4294901760
    %v2924 = vsub.f32 %v2922, %v2923
    %v2925 = vand.u32 %v2924, 4294901760
    %2926 = vmatmul.mubr.f32.gmra.mrb[0].mxu0 %v2925
    %v2927 = vpop.f32.mrb[0].mxu0
    %v2928 = vadd.f32 0.0, %v2927
    %v2929 = vpop.f32.mrb[0].mxu0
    %2930 = vdwg.mxu0
    %2931 = vmatprep.subr.mxu0 0.0
    %v2932 = vand.u32 %v2853, 4294901760
    %v2933 = vsub.f32 %v2853, %v2932
    %v2934 = vand.u32 %v2933, 4294901760
    %v2935 = vsub.f32 %v2933, %v2934
    %v2936 = vand.u32 %v2935, 4294901760
    %2937 = vmatpush1.xpose.msra.mxu0 %v2936
    %2938 = vmatprep.subr.mxu0 0.0
    %2939 = vmatpush1.xpose.msra.mxu0 0.0
    %2940 = vmatprep.subr.mxu0 0.0
    %2941 = vmatpush1.xpose.msra.mxu0 0.0
    %2942 = vmatprep.subr.mxu0 0.0
    %2943 = vmatpush1.xpose.msra.mxu0 0.0
    %2944 = vmatprep.subr.mxu0 0.0
    %2945 = vmatpush1.xpose.msra.mxu0 0.0
    %2946 = vmatprep.subr.mxu0 0.0
    %2947 = vmatpush1.xpose.msra.mxu0 0.0
    %2948 = vmatprep.subr.mxu0 0.0
    %2949 = vmatpush1.xpose.msra.mxu0 0.0
    %2950 = vmatprep.subr.mxu0 0.0
    %2951 = vmatpush1.xpose.msra.mxu0 0.0
    %2952 = vmatprep.subr.mxu0 0.0
    %2953 = vmatpush1.xpose.msra.mxu0 0.0
    %2954 = vmatprep.subr.mxu0 0.0
    %2955 = vmatpush1.xpose.msra.mxu0 0.0
    %2956 = vmatprep.subr.mxu0 0.0
    %2957 = vmatpush1.xpose.msra.mxu0 0.0
    %2958 = vmatprep.subr.mxu0 0.0
    %2959 = vmatpush1.xpose.msra.mxu0 0.0
    %2960 = vmatprep.subr.mxu0 0.0
    %2961 = vmatpush1.xpose.msra.mxu0 0.0
    %2962 = vmatprep.subr.mxu0 0.0
    %2963 = vmatpush1.xpose.msra.mxu0 0.0
    %2964 = vmatprep.subr.mxu0 0.0
    %2965 = vmatpush1.xpose.msra.mxu0 0.0
    %2966 = vmatprep.subr.mxu0 0.0
    %2967 = vmatpush1.xpose.msra.mxu0 0.0
    %2968 = vmatprep.subr.mxu0 0.0
    %2969 = vmatpush1.xpose.msra.mxu0 0.0
    %2970 = vmatprep.subr.mxu0 0.0
    %2971 = vmatpush1.xpose.msra.mxu0 0.0
    %2972 = vmatprep.subr.mxu0 0.0
    %2973 = vmatpush1.xpose.msra.mxu0 0.0
    %2974 = vmatprep.subr.mxu0 0.0
    %2975 = vmatpush1.xpose.msra.mxu0 0.0
    %2976 = vmatprep.subr.mxu0 0.0
    %2977 = vmatpush1.xpose.msra.mxu0 0.0
    %2978 = vmatprep.subr.mxu0 0.0
    %2979 = vmatpush1.xpose.msra.mxu0 0.0
    %2980 = vmatprep.subr.mxu0 0.0
    %2981 = vmatpush1.xpose.msra.mxu0 0.0
    %2982 = vmatprep.subr.mxu0 0.0
    %2983 = vmatpush1.xpose.msra.mxu0 0.0
    %2984 = vmatprep.subr.mxu0 0.0
    %2985 = vmatpush1.xpose.msra.mxu0 0.0
    %2986 = vmatprep.subr.mxu0 0.0
    %2987 = vmatpush1.xpose.msra.mxu0 0.0
    %2988 = vmatprep.subr.mxu0 0.0
    %2989 = vmatpush1.xpose.msra.mxu0 0.0
    %2990 = vmatprep.subr.mxu0 0.0
    %2991 = vmatpush1.xpose.msra.mxu0 0.0
    %2992 = vmatprep.subr.mxu0 0.0
    %2993 = vmatpush1.xpose.msra.mxu0 0.0
    %2994 = vmatprep.subr.mxu0 0.0
    %2995 = vmatpush1.xpose.msra.mxu0 0.0
    %2996 = vmatprep.subr.mxu0 0.0
    %2997 = vmatpush1.xpose.msra.mxu0 0.0
    %2998 = vmatprep.subr.mxu0 0.0
    %2999 = vmatpush1.xpose.msra.mxu0 0.0
    %3000 = vmatprep.mubr.f32.mxu0 0.0
    %v3001 = vand.u32 %v2850, 4294901760
    %3002 = vmatmul.mubr.f32.gmra.mrb[0].mxu0 %v3001
    %v3003 = vpop.f32.mrb[0].mxu0
    %v3004 = vadd.f32 %v2928, %v3003
    %v3005 = vpop.f32.mrb[0].mxu0
    %3006 = vdwg.mxu0
    %3007 = vmatprep.subr.mxu0 0.0
    %v3008 = vand.u32 %v2853, 4294901760
    %v3009 = vsub.f32 %v2853, %v3008
    %3010 = vmatpush1.xpose.msra.mxu0 %v3009
    %3011 = vmatprep.subr.mxu0 0.0
    %3012 = vmatpush1.xpose.msra.mxu0 0.0
    %3013 = vmatprep.subr.mxu0 0.0
    %3014 = vmatpush1.xpose.msra.mxu0 0.0
    %3015 = vmatprep.subr.mxu0 0.0
    %3016 = vmatpush1.xpose.msra.mxu0 0.0
    %3017 = vmatprep.subr.mxu0 0.0
    %3018 = vmatpush1.xpose.msra.mxu0 0.0
    %3019 = vmatprep.subr.mxu0 0.0
    %3020 = vmatpush1.xpose.msra.mxu0 0.0
    %3021 = vmatprep.subr.mxu0 0.0
    %3022 = vmatpush1.xpose.msra.mxu0 0.0
    %3023 = vmatprep.subr.mxu0 0.0
    %3024 = vmatpush1.xpose.msra.mxu0 0.0
    %3025 = vmatprep.subr.mxu0 0.0
    %3026 = vmatpush1.xpose.msra.mxu0 0.0
    %3027 = vmatprep.subr.mxu0 0.0
    %3028 = vmatpush1.xpose.msra.mxu0 0.0
    %3029 = vmatprep.subr.mxu0 0.0
    %3030 = vmatpush1.xpose.msra.mxu0 0.0
    %3031 = vmatprep.subr.mxu0 0.0
    %3032 = vmatpush1.xpose.msra.mxu0 0.0
    %3033 = vmatprep.subr.mxu0 0.0
    %3034 = vmatpush1.xpose.msra.mxu0 0.0
    %3035 = vmatprep.subr.mxu0 0.0
    %3036 = vmatpush1.xpose.msra.mxu0 0.0
    %3037 = vmatprep.subr.mxu0 0.0
    %3038 = vmatpush1.xpose.msra.mxu0 0.0
    %3039 = vmatprep.subr.mxu0 0.0
    %3040 = vmatpush1.xpose.msra.mxu0 0.0
    %3041 = vmatprep.subr.mxu0 0.0
    %3042 = vmatpush1.xpose.msra.mxu0 0.0
    %3043 = vmatprep.subr.mxu0 0.0
    %3044 = vmatpush1.xpose.msra.mxu0 0.0
    %3045 = vmatprep.subr.mxu0 0.0
    %3046 = vmatpush1.xpose.msra.mxu0 0.0
    %3047 = vmatprep.subr.mxu0 0.0
    %3048 = vmatpush1.xpose.msra.mxu0 0.0
    %3049 = vmatprep.subr.mxu0 0.0
    %3050 = vmatpush1.xpose.msra.mxu0 0.0
    %3051 = vmatprep.subr.mxu0 0.0
    %3052 = vmatpush1.xpose.msra.mxu0 0.0
    %3053 = vmatprep.subr.mxu0 0.0
    %3054 = vmatpush1.xpose.msra.mxu0 0.0
    %3055 = vmatprep.subr.mxu0 0.0
    %3056 = vmatpush1.xpose.msra.mxu0 0.0
    %3057 = vmatprep.subr.mxu0 0.0
    %3058 = vmatpush1.xpose.msra.mxu0 0.0
    %3059 = vmatprep.subr.mxu0 0.0
    %3060 = vmatpush1.xpose.msra.mxu0 0.0
    %3061 = vmatprep.subr.mxu0 0.0
    %3062 = vmatpush1.xpose.msra.mxu0 0.0
    %3063 = vmatprep.subr.mxu0 0.0
    %3064 = vmatpush1.xpose.msra.mxu0 0.0
    %3065 = vmatprep.subr.mxu0 0.0
    %3066 = vmatpush1.xpose.msra.mxu0 0.0
    %3067 = vmatprep.subr.mxu0 0.0
    %3068 = vmatpush1.xpose.msra.mxu0 0.0
    %3069 = vmatprep.subr.mxu0 0.0
    %3070 = vmatpush1.xpose.msra.mxu0 0.0
    %3071 = vmatprep.subr.mxu0 0.0
    %3072 = vmatpush1.xpose.msra.mxu0 0.0
    %3073 = vmatprep.mubr.f32.mxu0 0.0
    %v3074 = vand.u32 %v2850, 4294901760
    %v3075 = vsub.f32 %v2850, %v3074
    %3076 = vmatmul.mubr.f32.gmra.mrb[0].mxu0 %v3075
    %v3077 = vpop.f32.mrb[0].mxu0
    %v3078 = vadd.f32 %v3004, %v3077
    %v3079 = vpop.f32.mrb[0].mxu0
    %3080 = vdwg.mxu0
    %3081 = vmatprep.subr.mxu0 0.0
    %v3082 = vand.u32 %v2853, 4294901760
    %3083 = vmatpush1.xpose.msra.mxu0 %v3082
    %3084 = vmatprep.subr.mxu0 0.0
    %3085 = vmatpush1.xpose.msra.mxu0 0.0
    %3086 = vmatprep.subr.mxu0 0.0
    %3087 = vmatpush1.xpose.msra.mxu0 0.0
    %3088 = vmatprep.subr.mxu0 0.0
    %3089 = vmatpush1.xpose.msra.mxu0 0.0
    %3090 = vmatprep.subr.mxu0 0.0
    %3091 = vmatpush1.xpose.msra.mxu0 0.0
    %3092 = vmatprep.subr.mxu0 0.0
    %3093 = vmatpush1.xpose.msra.mxu0 0.0
    %3094 = vmatprep.subr.mxu0 0.0
    %3095 = vmatpush1.xpose.msra.mxu0 0.0
    %3096 = vmatprep.subr.mxu0 0.0
    %3097 = vmatpush1.xpose.msra.mxu0 0.0
    %3098 = vmatprep.subr.mxu0 0.0
    %3099 = vmatpush1.xpose.msra.mxu0 0.0
    %3100 = vmatprep.subr.mxu0 0.0
    %3101 = vmatpush1.xpose.msra.mxu0 0.0
    %3102 = vmatprep.subr.mxu0 0.0
    %3103 = vmatpush1.xpose.msra.mxu0 0.0
    %3104 = vmatprep.subr.mxu0 0.0
    %3105 = vmatpush1.xpose.msra.mxu0 0.0
    %3106 = vmatprep.subr.mxu0 0.0
    %3107 = vmatpush1.xpose.msra.mxu0 0.0
    %3108 = vmatprep.subr.mxu0 0.0
    %3109 = vmatpush1.xpose.msra.mxu0 0.0
    %3110 = vmatprep.subr.mxu0 0.0
    %3111 = vmatpush1.xpose.msra.mxu0 0.0
    %3112 = vmatprep.subr.mxu0 0.0
    %3113 = vmatpush1.xpose.msra.mxu0 0.0
    %3114 = vmatprep.subr.mxu0 0.0
    %3115 = vmatpush1.xpose.msra.mxu0 0.0
    %3116 = vmatprep.subr.mxu0 0.0
    %3117 = vmatpush1.xpose.msra.mxu0 0.0
    %3118 = vmatprep.subr.mxu0 0.0
    %3119 = vmatpush1.xpose.msra.mxu0 0.0
    %3120 = vmatprep.subr.mxu0 0.0
    %3121 = vmatpush1.xpose.msra.mxu0 0.0
    %3122 = vmatprep.subr.mxu0 0.0
    %3123 = vmatpush1.xpose.msra.mxu0 0.0
    %3124 = vmatprep.subr.mxu0 0.0
    %3125 = vmatpush1.xpose.msra.mxu0 0.0
    %3126 = vmatprep.subr.mxu0 0.0
    %3127 = vmatpush1.xpose.msra.mxu0 0.0
    %3128 = vmatprep.subr.mxu0 0.0
    %3129 = vmatpush1.xpose.msra.mxu0 0.0
    %3130 = vmatprep.subr.mxu0 0.0
    %3131 = vmatpush1.xpose.msra.mxu0 0.0
    %3132 = vmatprep.subr.mxu0 0.0
    %3133 = vmatpush1.xpose.msra.mxu0 0.0
    %3134 = vmatprep.subr.mxu0 0.0
    %3135 = vmatpush1.xpose.msra.mxu0 0.0
    %3136 = vmatprep.subr.mxu0 0.0
    %3137 = vmatpush1.xpose.msra.mxu0 0.0
    %3138 = vmatprep.subr.mxu0 0.0
    %3139 = vmatpush1.xpose.msra.mxu0 0.0
    %3140 = vmatprep.subr.mxu0 0.0
    %3141 = vmatpush1.xpose.msra.mxu0 0.0
    %3142 = vmatprep.subr.mxu0 0.0
    %3143 = vmatpush1.xpose.msra.mxu0 0.0
    %3144 = vmatprep.subr.mxu0 0.0
    %3145 = vmatpush1.xpose.msra.mxu0 0.0
    %3146 = vmatprep.mubr.f32.mxu0 0.0
    %v3147 = vand.u32 %v2850, 4294901760
    %v3148 = vsub.f32 %v2850, %v3147
    %v3149 = vand.u32 %v3148, 4294901760
    %3150 = vmatmul.mubr.f32.gmra.mrb[0].mxu0 %v3149
    %v3151 = vpop.f32.mrb[0].mxu0
    %v3152 = vadd.f32 %v3078, %v3151
    %v3153 = vpop.f32.mrb[0].mxu0
    %3154 = vdwg.mxu0
    %3155 = vmatprep.subr.mxu0 0.0
    %v3156 = vand.u32 %v2853, 4294901760
    %v3157 = vsub.f32 %v2853, %v3156
    %v3158 = vand.u32 %v3157, 4294901760
    %3159 = vmatpush1.xpose.msra.mxu0 %v3158
    %3160 = vmatprep.subr.mxu0 0.0
    %3161 = vmatpush1.xpose.msra.mxu0 0.0
    %3162 = vmatprep.subr.mxu0 0.0
    %3163 = vmatpush1.xpose.msra.mxu0 0.0
    %3164 = vmatprep.subr.mxu0 0.0
    %3165 = vmatpush1.xpose.msra.mxu0 0.0
    %3166 = vmatprep.subr.mxu0 0.0
    %3167 = vmatpush1.xpose.msra.mxu0 0.0
    %3168 = vmatprep.subr.mxu0 0.0
    %3169 = vmatpush1.xpose.msra.mxu0 0.0
    %3170 = vmatprep.subr.mxu0 0.0
    %3171 = vmatpush1.xpose.msra.mxu0 0.0
    %3172 = vmatprep.subr.mxu0 0.0
    %3173 = vmatpush1.xpose.msra.mxu0 0.0
    %3174 = vmatprep.subr.mxu0 0.0
    %3175 = vmatpush1.xpose.msra.mxu0 0.0
    %3176 = vmatprep.subr.mxu0 0.0
    %3177 = vmatpush1.xpose.msra.mxu0 0.0
    %3178 = vmatprep.subr.mxu0 0.0
    %3179 = vmatpush1.xpose.msra.mxu0 0.0
    %3180 = vmatprep.subr.mxu0 0.0
    %3181 = vmatpush1.xpose.msra.mxu0 0.0
    %3182 = vmatprep.subr.mxu0 0.0
    %3183 = vmatpush1.xpose.msra.mxu0 0.0
    %3184 = vmatprep.subr.mxu0 0.0
    %3185 = vmatpush1.xpose.msra.mxu0 0.0
    %3186 = vmatprep.subr.mxu0 0.0
    %3187 = vmatpush1.xpose.msra.mxu0 0.0
    %3188 = vmatprep.subr.mxu0 0.0
    %3189 = vmatpush1.xpose.msra.mxu0 0.0
    %3190 = vmatprep.subr.mxu0 0.0
    %3191 = vmatpush1.xpose.msra.mxu0 0.0
    %3192 = vmatprep.subr.mxu0 0.0
    %3193 = vmatpush1.xpose.msra.mxu0 0.0
    %3194 = vmatprep.subr.mxu0 0.0
    %3195 = vmatpush1.xpose.msra.mxu0 0.0
    %3196 = vmatprep.subr.mxu0 0.0
    %3197 = vmatpush1.xpose.msra.mxu0 0.0
    %3198 = vmatprep.subr.mxu0 0.0
    %3199 = vmatpush1.xpose.msra.mxu0 0.0
    %3200 = vmatprep.subr.mxu0 0.0
    %3201 = vmatpush1.xpose.msra.mxu0 0.0
    %3202 = vmatprep.subr.mxu0 0.0
    %3203 = vmatpush1.xpose.msra.mxu0 0.0
    %3204 = vmatprep.subr.mxu0 0.0
    %3205 = vmatpush1.xpose.msra.mxu0 0.0
    %3206 = vmatprep.subr.mxu0 0.0
    %3207 = vmatpush1.xpose.msra.mxu0 0.0
    %3208 = vmatprep.subr.mxu0 0.0
    %3209 = vmatpush1.xpose.msra.mxu0 0.0
    %3210 = vmatprep.subr.mxu0 0.0
    %3211 = vmatpush1.xpose.msra.mxu0 0.0
    %3212 = vmatprep.subr.mxu0 0.0
    %3213 = vmatpush1.xpose.msra.mxu0 0.0
    %3214 = vmatprep.subr.mxu0 0.0
    %3215 = vmatpush1.xpose.msra.mxu0 0.0
    %3216 = vmatprep.subr.mxu0 0.0
    %3217 = vmatpush1.xpose.msra.mxu0 0.0
    %3218 = vmatprep.subr.mxu0 0.0
    %3219 = vmatpush1.xpose.msra.mxu0 0.0
    %3220 = vmatprep.subr.mxu0 0.0
    %3221 = vmatpush1.xpose.msra.mxu0 0.0
    %3222 = vmatprep.mubr.f32.mxu0 0.0
    %v3223 = vand.u32 %v2850, 4294901760
    %3224 = vmatmul.mubr.f32.gmra.mrb[0].mxu0 %v3223
    %v3225 = vpop.f32.mrb[0].mxu0
    %v3226 = vadd.f32 %v3152, %v3225
    %v3227 = vpop.f32.mrb[0].mxu0
    %3228 = vdwg.mxu0
    %3229 = vmatprep.subr.mxu0 0.0
    %v3230 = vand.u32 %v2853, 4294901760
    %3231 = vmatpush1.xpose.msra.mxu0 %v3230
    %3232 = vmatprep.subr.mxu0 0.0
    %3233 = vmatpush1.xpose.msra.mxu0 0.0
    %3234 = vmatprep.subr.mxu0 0.0
    %3235 = vmatpush1.xpose.msra.mxu0 0.0
    %3236 = vmatprep.subr.mxu0 0.0
    %3237 = vmatpush1.xpose.msra.mxu0 0.0
    %3238 = vmatprep.subr.mxu0 0.0
    %3239 = vmatpush1.xpose.msra.mxu0 0.0
    %3240 = vmatprep.subr.mxu0 0.0
    %3241 = vmatpush1.xpose.msra.mxu0 0.0
    %3242 = vmatprep.subr.mxu0 0.0
    %3243 = vmatpush1.xpose.msra.mxu0 0.0
    %3244 = vmatprep.subr.mxu0 0.0
    %3245 = vmatpush1.xpose.msra.mxu0 0.0
    %3246 = vmatprep.subr.mxu0 0.0
    %3247 = vmatpush1.xpose.msra.mxu0 0.0
    %3248 = vmatprep.subr.mxu0 0.0
    %3249 = vmatpush1.xpose.msra.mxu0 0.0
    %3250 = vmatprep.subr.mxu0 0.0
    %3251 = vmatpush1.xpose.msra.mxu0 0.0
    %3252 = vmatprep.subr.mxu0 0.0
    %3253 = vmatpush1.xpose.msra.mxu0 0.0
    %3254 = vmatprep.subr.mxu0 0.0
    %3255 = vmatpush1.xpose.msra.mxu0 0.0
    %3256 = vmatprep.subr.mxu0 0.0
    %3257 = vmatpush1.xpose.msra.mxu0 0.0
    %3258 = vmatprep.subr.mxu0 0.0
    %3259 = vmatpush1.xpose.msra.mxu0 0.0
    %3260 = vmatprep.subr.mxu0 0.0
    %3261 = vmatpush1.xpose.msra.mxu0 0.0
    %3262 = vmatprep.subr.mxu0 0.0
    %3263 = vmatpush1.xpose.msra.mxu0 0.0
    %3264 = vmatprep.subr.mxu0 0.0
    %3265 = vmatpush1.xpose.msra.mxu0 0.0
    %3266 = vmatprep.subr.mxu0 0.0
    %3267 = vmatpush1.xpose.msra.mxu0 0.0
    %3268 = vmatprep.subr.mxu0 0.0
    %3269 = vmatpush1.xpose.msra.mxu0 0.0
    %3270 = vmatprep.subr.mxu0 0.0
    %3271 = vmatpush1.xpose.msra.mxu0 0.0
    %3272 = vmatprep.subr.mxu0 0.0
    %3273 = vmatpush1.xpose.msra.mxu0 0.0
    %3274 = vmatprep.subr.mxu0 0.0
    %3275 = vmatpush1.xpose.msra.mxu0 0.0
    %3276 = vmatprep.subr.mxu0 0.0
    %3277 = vmatpush1.xpose.msra.mxu0 0.0
    %3278 = vmatprep.subr.mxu0 0.0
    %3279 = vmatpush1.xpose.msra.mxu0 0.0
    %3280 = vmatprep.subr.mxu0 0.0
    %3281 = vmatpush1.xpose.msra.mxu0 0.0
    %3282 = vmatprep.subr.mxu0 0.0
    %3283 = vmatpush1.xpose.msra.mxu0 0.0
    %3284 = vmatprep.subr.mxu0 0.0
    %3285 = vmatpush1.xpose.msra.mxu0 0.0
    %3286 = vmatprep.subr.mxu0 0.0
    %3287 = vmatpush1.xpose.msra.mxu0 0.0
    %3288 = vmatprep.subr.mxu0 0.0
    %3289 = vmatpush1.xpose.msra.mxu0 0.0
    %3290 = vmatprep.subr.mxu0 0.0
    %3291 = vmatpush1.xpose.msra.mxu0 0.0
    %3292 = vmatprep.subr.mxu0 0.0
    %3293 = vmatpush1.xpose.msra.mxu0 0.0
    %3294 = vmatprep.mubr.f32.mxu0 0.0
    %v3295 = vand.u32 %v2850, 4294901760
    %3296 = vmatmul.mubr.f32.gmra.mrb[0].mxu0 %v3295
    %v3297 = vpop.f32.mrb[0].mxu0
    %v3298 = vadd.f32 %v3226, %v3297
    %v3299 = vpop.f32.mrb[0].mxu0
    %3300 = vdwg.mxu0
    %v3301 = vsel %vm143, %v142, 0
    %v3304 = vsel %vm143, %v91, 0
    %3306 = vmatprep.subr.mxu0 0.0
    %v3307 = vand.u32 %v3304, 4294901760
    %3308 = vmatpush1.xpose.msra.mxu0 %v3307
    %3309 = vmatprep.subr.mxu0 0.0
    %3310 = vmatpush1.xpose.msra.mxu0 0.0
    %3311 = vmatprep.subr.mxu0 0.0
    %3312 = vmatpush1.xpose.msra.mxu0 0.0
    %3313 = vmatprep.subr.mxu0 0.0
    %3314 = vmatpush1.xpose.msra.mxu0 0.0
    %3315 = vmatprep.subr.mxu0 0.0
    %3316 = vmatpush1.xpose.msra.mxu0 0.0
    %3317 = vmatprep.subr.mxu0 0.0
    %3318 = vmatpush1.xpose.msra.mxu0 0.0
    %3319 = vmatprep.subr.mxu0 0.0
    %3320 = vmatpush1.xpose.msra.mxu0 0.0
    %3321 = vmatprep.subr.mxu0 0.0
    %3322 = vmatpush1.xpose.msra.mxu0 0.0
    %3323 = vmatprep.subr.mxu0 0.0
    %3324 = vmatpush1.xpose.msra.mxu0 0.0
    %3325 = vmatprep.subr.mxu0 0.0
    %3326 = vmatpush1.xpose.msra.mxu0 0.0
    %3327 = vmatprep.subr.mxu0 0.0
    %3328 = vmatpush1.xpose.msra.mxu0 0.0
    %3329 = vmatprep.subr.mxu0 0.0
    %3330 = vmatpush1.xpose.msra.mxu0 0.0
    %3331 = vmatprep.subr.mxu0 0.0
    %3332 = vmatpush1.xpose.msra.mxu0 0.0
    %3333 = vmatprep.subr.mxu0 0.0
    %3334 = vmatpush1.xpose.msra.mxu0 0.0
    %3335 = vmatprep.subr.mxu0 0.0
    %3336 = vmatpush1.xpose.msra.mxu0 0.0
    %3337 = vmatprep.subr.mxu0 0.0
    %3338 = vmatpush1.xpose.msra.mxu0 0.0
    %3339 = vmatprep.subr.mxu0 0.0
    %3340 = vmatpush1.xpose.msra.mxu0 0.0
    %3341 = vmatprep.subr.mxu0 0.0
    %3342 = vmatpush1.xpose.msra.mxu0 0.0
    %3343 = vmatprep.subr.mxu0 0.0
    %3344 = vmatpush1.xpose.msra.mxu0 0.0
    %3345 = vmatprep.subr.mxu0 0.0
    %3346 = vmatpush1.xpose.msra.mxu0 0.0
    %3347 = vmatprep.subr.mxu0 0.0
    %3348 = vmatpush1.xpose.msra.mxu0 0.0
    %3349 = vmatprep.subr.mxu0 0.0
    %3350 = vmatpush1.xpose.msra.mxu0 0.0
    %3351 = vmatprep.subr.mxu0 0.0
    %3352 = vmatpush1.xpose.msra.mxu0 0.0
    %3353 = vmatprep.subr.mxu0 0.0
    %3354 = vmatpush1.xpose.msra.mxu0 0.0
    %3355 = vmatprep.subr.mxu0 0.0
    %3356 = vmatpush1.xpose.msra.mxu0 0.0
    %3357 = vmatprep.subr.mxu0 0.0
    %3358 = vmatpush1.xpose.msra.mxu0 0.0
    %3359 = vmatprep.subr.mxu0 0.0
    %3360 = vmatpush1.xpose.msra.mxu0 0.0
    %3361 = vmatprep.subr.mxu0 0.0
    %3362 = vmatpush1.xpose.msra.mxu0 0.0
    %3363 = vmatprep.subr.mxu0 0.0
    %3364 = vmatpush1.xpose.msra.mxu0 0.0
    %3365 = vmatprep.subr.mxu0 0.0
    %3366 = vmatpush1.xpose.msra.mxu0 0.0
    %3367 = vmatprep.subr.mxu0 0.0
    %3368 = vmatpush1.xpose.msra.mxu0 0.0
    %3369 = vmatprep.subr.mxu0 0.0
    %3370 = vmatpush1.xpose.msra.mxu0 0.0
    %3371 = vmatprep.mubr.f32.mxu0 0.0
    %v3372 = vand.u32 %v3301, 4294901760
    %v3373 = vsub.f32 %v3301, %v3372
    %v3374 = vand.u32 %v3373, 4294901760
    %v3375 = vsub.f32 %v3373, %v3374
    %v3376 = vand.u32 %v3375, 4294901760
    %3377 = vmatmul.mubr.f32.gmra.mrb[0].mxu0 %v3376
    %v3378 = vpop.f32.mrb[0].mxu0
    %v3379 = vadd.f32 0.0, %v3378
    %v3380 = vpop.f32.mrb[0].mxu0
    %3381 = vdwg.mxu0
    %3382 = vmatprep.subr.mxu0 0.0
    %v3383 = vand.u32 %v3304, 4294901760
    %v3384 = vsub.f32 %v3304, %v3383
    %v3385 = vand.u32 %v3384, 4294901760
    %v3386 = vsub.f32 %v3384, %v3385
    %v3387 = vand.u32 %v3386, 4294901760
    %3388 = vmatpush1.xpose.msra.mxu0 %v3387
    %3389 = vmatprep.subr.mxu0 0.0
    %3390 = vmatpush1.xpose.msra.mxu0 0.0
    %3391 = vmatprep.subr.mxu0 0.0
    %3392 = vmatpush1.xpose.msra.mxu0 0.0
    %3393 = vmatprep.subr.mxu0 0.0
    %3394 = vmatpush1.xpose.msra.mxu0 0.0
    %3395 = vmatprep.subr.mxu0 0.0
    %3396 = vmatpush1.xpose.msra.mxu0 0.0
    %3397 = vmatprep.subr.mxu0 0.0
    %3398 = vmatpush1.xpose.msra.mxu0 0.0
    %3399 = vmatprep.subr.mxu0 0.0
    %3400 = vmatpush1.xpose.msra.mxu0 0.0
    %3401 = vmatprep.subr.mxu0 0.0
    %3402 = vmatpush1.xpose.msra.mxu0 0.0
    %3403 = vmatprep.subr.mxu0 0.0
    %3404 = vmatpush1.xpose.msra.mxu0 0.0
    %3405 = vmatprep.subr.mxu0 0.0
    %3406 = vmatpush1.xpose.msra.mxu0 0.0
    %3407 = vmatprep.subr.mxu0 0.0
    %3408 = vmatpush1.xpose.msra.mxu0 0.0
    %3409 = vmatprep.subr.mxu0 0.0
    %3410 = vmatpush1.xpose.msra.mxu0 0.0
    %3411 = vmatprep.subr.mxu0 0.0
    %3412 = vmatpush1.xpose.msra.mxu0 0.0
    %3413 = vmatprep.subr.mxu0 0.0
    %3414 = vmatpush1.xpose.msra.mxu0 0.0
    %3415 = vmatprep.subr.mxu0 0.0
    %3416 = vmatpush1.xpose.msra.mxu0 0.0
    %3417 = vmatprep.subr.mxu0 0.0
    %3418 = vmatpush1.xpose.msra.mxu0 0.0
    %3419 = vmatprep.subr.mxu0 0.0
    %3420 = vmatpush1.xpose.msra.mxu0 0.0
    %3421 = vmatprep.subr.mxu0 0.0
    %3422 = vmatpush1.xpose.msra.mxu0 0.0
    %3423 = vmatprep.subr.mxu0 0.0
    %3424 = vmatpush1.xpose.msra.mxu0 0.0
    %3425 = vmatprep.subr.mxu0 0.0
    %3426 = vmatpush1.xpose.msra.mxu0 0.0
    %3427 = vmatprep.subr.mxu0 0.0
    %3428 = vmatpush1.xpose.msra.mxu0 0.0
    %3429 = vmatprep.subr.mxu0 0.0
    %3430 = vmatpush1.xpose.msra.mxu0 0.0
    %3431 = vmatprep.subr.mxu0 0.0
    %3432 = vmatpush1.xpose.msra.mxu0 0.0
    %3433 = vmatprep.subr.mxu0 0.0
    %3434 = vmatpush1.xpose.msra.mxu0 0.0
    %3435 = vmatprep.subr.mxu0 0.0
    %3436 = vmatpush1.xpose.msra.mxu0 0.0
    %3437 = vmatprep.subr.mxu0 0.0
    %3438 = vmatpush1.xpose.msra.mxu0 0.0
    %3439 = vmatprep.subr.mxu0 0.0
    %3440 = vmatpush1.xpose.msra.mxu0 0.0
    %3441 = vmatprep.subr.mxu0 0.0
    %3442 = vmatpush1.xpose.msra.mxu0 0.0
    %3443 = vmatprep.subr.mxu0 0.0
    %3444 = vmatpush1.xpose.msra.mxu0 0.0
    %3445 = vmatprep.subr.mxu0 0.0
    %3446 = vmatpush1.xpose.msra.mxu0 0.0
    %3447 = vmatprep.subr.mxu0 0.0
    %3448 = vmatpush1.xpose.msra.mxu0 0.0
    %3449 = vmatprep.subr.mxu0 0.0
    %3450 = vmatpush1.xpose.msra.mxu0 0.0
    %3451 = vmatprep.mubr.f32.mxu0 0.0
    %v3452 = vand.u32 %v3301, 4294901760
    %3453 = vmatmul.mubr.f32.gmra.mrb[0].mxu0 %v3452
    %v3454 = vpop.f32.mrb[0].mxu0
    %v3455 = vadd.f32 %v3379, %v3454
    %v3456 = vpop.f32.mrb[0].mxu0
    %3457 = vdwg.mxu0
    %3458 = vmatprep.subr.mxu0 0.0
    %v3459 = vand.u32 %v3304, 4294901760
    %v3460 = vsub.f32 %v3304, %v3459
    %3461 = vmatpush1.xpose.msra.mxu0 %v3460
    %3462 = vmatprep.subr.mxu0 0.0
    %3463 = vmatpush1.xpose.msra.mxu0 0.0
    %3464 = vmatprep.subr.mxu0 0.0
    %3465 = vmatpush1.xpose.msra.mxu0 0.0
    %3466 = vmatprep.subr.mxu0 0.0
    %3467 = vmatpush1.xpose.msra.mxu0 0.0
    %3468 = vmatprep.subr.mxu0 0.0
    %3469 = vmatpush1.xpose.msra.mxu0 0.0
    %3470 = vmatprep.subr.mxu0 0.0
    %3471 = vmatpush1.xpose.msra.mxu0 0.0
    %3472 = vmatprep.subr.mxu0 0.0
    %3473 = vmatpush1.xpose.msra.mxu0 0.0
    %3474 = vmatprep.subr.mxu0 0.0
    %3475 = vmatpush1.xpose.msra.mxu0 0.0
    %3476 = vmatprep.subr.mxu0 0.0
    %3477 = vmatpush1.xpose.msra.mxu0 0.0
    %3478 = vmatprep.subr.mxu0 0.0
    %3479 = vmatpush1.xpose.msra.mxu0 0.0
    %3480 = vmatprep.subr.mxu0 0.0
    %3481 = vmatpush1.xpose.msra.mxu0 0.0
    %3482 = vmatprep.subr.mxu0 0.0
    %3483 = vmatpush1.xpose.msra.mxu0 0.0
    %3484 = vmatprep.subr.mxu0 0.0
    %3485 = vmatpush1.xpose.msra.mxu0 0.0
    %3486 = vmatprep.subr.mxu0 0.0
    %3487 = vmatpush1.xpose.msra.mxu0 0.0
    %3488 = vmatprep.subr.mxu0 0.0
    %3489 = vmatpush1.xpose.msra.mxu0 0.0
    %3490 = vmatprep.subr.mxu0 0.0
    %3491 = vmatpush1.xpose.msra.mxu0 0.0
    %3492 = vmatprep.subr.mxu0 0.0
    %3493 = vmatpush1.xpose.msra.mxu0 0.0
    %3494 = vmatprep.subr.mxu0 0.0
    %3495 = vmatpush1.xpose.msra.mxu0 0.0
    %3496 = vmatprep.subr.mxu0 0.0
    %3497 = vmatpush1.xpose.msra.mxu0 0.0
    %3498 = vmatprep.subr.mxu0 0.0
    %3499 = vmatpush1.xpose.msra.mxu0 0.0
    %3500 = vmatprep.subr.mxu0 0.0
    %3501 = vmatpush1.xpose.msra.mxu0 0.0
    %3502 = vmatprep.subr.mxu0 0.0
    %3503 = vmatpush1.xpose.msra.mxu0 0.0
    %3504 = vmatprep.subr.mxu0 0.0
    %3505 = vmatpush1.xpose.msra.mxu0 0.0
    %3506 = vmatprep.subr.mxu0 0.0
    %3507 = vmatpush1.xpose.msra.mxu0 0.0
    %3508 = vmatprep.subr.mxu0 0.0
    %3509 = vmatpush1.xpose.msra.mxu0 0.0
    %3510 = vmatprep.subr.mxu0 0.0
    %3511 = vmatpush1.xpose.msra.mxu0 0.0
    %3512 = vmatprep.subr.mxu0 0.0
    %3513 = vmatpush1.xpose.msra.mxu0 0.0
    %3514 = vmatprep.subr.mxu0 0.0
    %3515 = vmatpush1.xpose.msra.mxu0 0.0
    %3516 = vmatprep.subr.mxu0 0.0
    %3517 = vmatpush1.xpose.msra.mxu0 0.0
    %3518 = vmatprep.subr.mxu0 0.0
    %3519 = vmatpush1.xpose.msra.mxu0 0.0
    %3520 = vmatprep.subr.mxu0 0.0
    %3521 = vmatpush1.xpose.msra.mxu0 0.0
    %3522 = vmatprep.subr.mxu0 0.0
    %3523 = vmatpush1.xpose.msra.mxu0 0.0
    %3524 = vmatprep.mubr.f32.mxu0 0.0
    %v3525 = vand.u32 %v3301, 4294901760
    %v3526 = vsub.f32 %v3301, %v3525
    %3527 = vmatmul.mubr.f32.gmra.mrb[0].mxu0 %v3526
    %v3528 = vpop.f32.mrb[0].mxu0
    %v3529 = vadd.f32 %v3455, %v3528
    %v3530 = vpop.f32.mrb[0].mxu0
    %3531 = vdwg.mxu0
    %3532 = vmatprep.subr.mxu0 0.0
    %v3533 = vand.u32 %v3304, 4294901760
    %3534 = vmatpush1.xpose.msra.mxu0 %v3533
    %3535 = vmatprep.subr.mxu0 0.0
    %3536 = vmatpush1.xpose.msra.mxu0 0.0
    %3537 = vmatprep.subr.mxu0 0.0
    %3538 = vmatpush1.xpose.msra.mxu0 0.0
    %3539 = vmatprep.subr.mxu0 0.0
    %3540 = vmatpush1.xpose.msra.mxu0 0.0
    %3541 = vmatprep.subr.mxu0 0.0
    %3542 = vmatpush1.xpose.msra.mxu0 0.0
    %3543 = vmatprep.subr.mxu0 0.0
    %3544 = vmatpush1.xpose.msra.mxu0 0.0
    %3545 = vmatprep.subr.mxu0 0.0
    %3546 = vmatpush1.xpose.msra.mxu0 0.0
    %3547 = vmatprep.subr.mxu0 0.0
    %3548 = vmatpush1.xpose.msra.mxu0 0.0
    %3549 = vmatprep.subr.mxu0 0.0
    %3550 = vmatpush1.xpose.msra.mxu0 0.0
    %3551 = vmatprep.subr.mxu0 0.0
    %3552 = vmatpush1.xpose.msra.mxu0 0.0
    %3553 = vmatprep.subr.mxu0 0.0
    %3554 = vmatpush1.xpose.msra.mxu0 0.0
    %3555 = vmatprep.subr.mxu0 0.0
    %3556 = vmatpush1.xpose.msra.mxu0 0.0
    %3557 = vmatprep.subr.mxu0 0.0
    %3558 = vmatpush1.xpose.msra.mxu0 0.0
    %3559 = vmatprep.subr.mxu0 0.0
    %3560 = vmatpush1.xpose.msra.mxu0 0.0
    %3561 = vmatprep.subr.mxu0 0.0
    %3562 = vmatpush1.xpose.msra.mxu0 0.0
    %3563 = vmatprep.subr.mxu0 0.0
    %3564 = vmatpush1.xpose.msra.mxu0 0.0
    %3565 = vmatprep.subr.mxu0 0.0
    %3566 = vmatpush1.xpose.msra.mxu0 0.0
    %3567 = vmatprep.subr.mxu0 0.0
    %3568 = vmatpush1.xpose.msra.mxu0 0.0
    %3569 = vmatprep.subr.mxu0 0.0
    %3570 = vmatpush1.xpose.msra.mxu0 0.0
    %3571 = vmatprep.subr.mxu0 0.0
    %3572 = vmatpush1.xpose.msra.mxu0 0.0
    %3573 = vmatprep.subr.mxu0 0.0
    %3574 = vmatpush1.xpose.msra.mxu0 0.0
    %3575 = vmatprep.subr.mxu0 0.0
    %3576 = vmatpush1.xpose.msra.mxu0 0.0
    %3577 = vmatprep.subr.mxu0 0.0
    %3578 = vmatpush1.xpose.msra.mxu0 0.0
    %3579 = vmatprep.subr.mxu0 0.0
    %3580 = vmatpush1.xpose.msra.mxu0 0.0
    %3581 = vmatprep.subr.mxu0 0.0
    %3582 = vmatpush1.xpose.msra.mxu0 0.0
    %3583 = vmatprep.subr.mxu0 0.0
    %3584 = vmatpush1.xpose.msra.mxu0 0.0
    %3585 = vmatprep.subr.mxu0 0.0
    %3586 = vmatpush1.xpose.msra.mxu0 0.0
    %3587 = vmatprep.subr.mxu0 0.0
    %3588 = vmatpush1.xpose.msra.mxu0 0.0
    %3589 = vmatprep.subr.mxu0 0.0
    %3590 = vmatpush1.xpose.msra.mxu0 0.0
    %3591 = vmatprep.subr.mxu0 0.0
    %3592 = vmatpush1.xpose.msra.mxu0 0.0
    %3593 = vmatprep.subr.mxu0 0.0
    %3594 = vmatpush1.xpose.msra.mxu0 0.0
    %3595 = vmatprep.subr.mxu0 0.0
    %3596 = vmatpush1.xpose.msra.mxu0 0.0
    %3597 = vmatprep.mubr.f32.mxu0 0.0
    %v3598 = vand.u32 %v3301, 4294901760
    %v3599 = vsub.f32 %v3301, %v3598
    %v3600 = vand.u32 %v3599, 4294901760
    %3601 = vmatmul.mubr.f32.gmra.mrb[0].mxu0 %v3600
    %v3602 = vpop.f32.mrb[0].mxu0
    %v3603 = vadd.f32 %v3529, %v3602
    %v3604 = vpop.f32.mrb[0].mxu0
    %3605 = vdwg.mxu0
    %3606 = vmatprep.subr.mxu0 0.0
    %v3607 = vand.u32 %v3304, 4294901760
    %v3608 = vsub.f32 %v3304, %v3607
    %v3609 = vand.u32 %v3608, 4294901760
    %3610 = vmatpush1.xpose.msra.mxu0 %v3609
    %3611 = vmatprep.subr.mxu0 0.0
    %3612 = vmatpush1.xpose.msra.mxu0 0.0
    %3613 = vmatprep.subr.mxu0 0.0
    %3614 = vmatpush1.xpose.msra.mxu0 0.0
    %3615 = vmatprep.subr.mxu0 0.0
    %3616 = vmatpush1.xpose.msra.mxu0 0.0
    %3617 = vmatprep.subr.mxu0 0.0
    %3618 = vmatpush1.xpose.msra.mxu0 0.0
    %3619 = vmatprep.subr.mxu0 0.0
    %3620 = vmatpush1.xpose.msra.mxu0 0.0
    %3621 = vmatprep.subr.mxu0 0.0
    %3622 = vmatpush1.xpose.msra.mxu0 0.0
    %3623 = vmatprep.subr.mxu0 0.0
    %3624 = vmatpush1.xpose.msra.mxu0 0.0
    %3625 = vmatprep.subr.mxu0 0.0
    %3626 = vmatpush1.xpose.msra.mxu0 0.0
    %3627 = vmatprep.subr.mxu0 0.0
    %3628 = vmatpush1.xpose.msra.mxu0 0.0
    %3629 = vmatprep.subr.mxu0 0.0
    %3630 = vmatpush1.xpose.msra.mxu0 0.0
    %3631 = vmatprep.subr.mxu0 0.0
    %3632 = vmatpush1.xpose.msra.mxu0 0.0
    %3633 = vmatprep.subr.mxu0 0.0
    %3634 = vmatpush1.xpose.msra.mxu0 0.0
    %3635 = vmatprep.subr.mxu0 0.0
    %3636 = vmatpush1.xpose.msra.mxu0 0.0
    %3637 = vmatprep.subr.mxu0 0.0
    %3638 = vmatpush1.xpose.msra.mxu0 0.0
    %3639 = vmatprep.subr.mxu0 0.0
    %3640 = vmatpush1.xpose.msra.mxu0 0.0
    %3641 = vmatprep.subr.mxu0 0.0
    %3642 = vmatpush1.xpose.msra.mxu0 0.0
    %3643 = vmatprep.subr.mxu0 0.0
    %3644 = vmatpush1.xpose.msra.mxu0 0.0
    %3645 = vmatprep.subr.mxu0 0.0
    %3646 = vmatpush1.xpose.msra.mxu0 0.0
    %3647 = vmatprep.subr.mxu0 0.0
    %3648 = vmatpush1.xpose.msra.mxu0 0.0
    %3649 = vmatprep.subr.mxu0 0.0
    %3650 = vmatpush1.xpose.msra.mxu0 0.0
    %3651 = vmatprep.subr.mxu0 0.0
    %3652 = vmatpush1.xpose.msra.mxu0 0.0
    %3653 = vmatprep.subr.mxu0 0.0
    %3654 = vmatpush1.xpose.msra.mxu0 0.0
    %3655 = vmatprep.subr.mxu0 0.0
    %3656 = vmatpush1.xpose.msra.mxu0 0.0
    %3657 = vmatprep.subr.mxu0 0.0
    %3658 = vmatpush1.xpose.msra.mxu0 0.0
    %3659 = vmatprep.subr.mxu0 0.0
    %3660 = vmatpush1.xpose.msra.mxu0 0.0
    %3661 = vmatprep.subr.mxu0 0.0
    %3662 = vmatpush1.xpose.msra.mxu0 0.0
    %3663 = vmatprep.subr.mxu0 0.0
    %3664 = vmatpush1.xpose.msra.mxu0 0.0
    %3665 = vmatprep.subr.mxu0 0.0
    %3666 = vmatpush1.xpose.msra.mxu0 0.0
    %3667 = vmatprep.subr.mxu0 0.0
    %3668 = vmatpush1.xpose.msra.mxu0 0.0
    %3669 = vmatprep.subr.mxu0 0.0
    %3670 = vmatpush1.xpose.msra.mxu0 0.0
    %3671 = vmatprep.subr.mxu0 0.0
    %3672 = vmatpush1.xpose.msra.mxu0 0.0
    %3673 = vmatprep.mubr.f32.mxu0 0.0
    %v3674 = vand.u32 %v3301, 4294901760
    %3675 = vmatmul.mubr.f32.gmra.mrb[0].mxu0 %v3674
    %v3676 = vpop.f32.mrb[0].mxu0
    %v3677 = vadd.f32 %v3603, %v3676
    %v3678 = vpop.f32.mrb[0].mxu0
    %3679 = vdwg.mxu0
    %3680 = vmatprep.subr.mxu0 0.0
    %v3681 = vand.u32 %v3304, 4294901760
    %3682 = vmatpush1.xpose.msra.mxu0 %v3681
    %3683 = vmatprep.subr.mxu0 0.0
    %3684 = vmatpush1.xpose.msra.mxu0 0.0
    %3685 = vmatprep.subr.mxu0 0.0
    %3686 = vmatpush1.xpose.msra.mxu0 0.0
    %3687 = vmatprep.subr.mxu0 0.0
    %3688 = vmatpush1.xpose.msra.mxu0 0.0
    %3689 = vmatprep.subr.mxu0 0.0
    %3690 = vmatpush1.xpose.msra.mxu0 0.0
    %3691 = vmatprep.subr.mxu0 0.0
    %3692 = vmatpush1.xpose.msra.mxu0 0.0
    %3693 = vmatprep.subr.mxu0 0.0
    %3694 = vmatpush1.xpose.msra.mxu0 0.0
    %3695 = vmatprep.subr.mxu0 0.0
    %3696 = vmatpush1.xpose.msra.mxu0 0.0
    %3697 = vmatprep.subr.mxu0 0.0
    %3698 = vmatpush1.xpose.msra.mxu0 0.0
    %3699 = vmatprep.subr.mxu0 0.0
    %3700 = vmatpush1.xpose.msra.mxu0 0.0
    %3701 = vmatprep.subr.mxu0 0.0
    %3702 = vmatpush1.xpose.msra.mxu0 0.0
    %3703 = vmatprep.subr.mxu0 0.0
    %3704 = vmatpush1.xpose.msra.mxu0 0.0
    %3705 = vmatprep.subr.mxu0 0.0
    %3706 = vmatpush1.xpose.msra.mxu0 0.0
    %3707 = vmatprep.subr.mxu0 0.0
    %3708 = vmatpush1.xpose.msra.mxu0 0.0
    %3709 = vmatprep.subr.mxu0 0.0
    %3710 = vmatpush1.xpose.msra.mxu0 0.0
    %3711 = vmatprep.subr.mxu0 0.0
    %3712 = vmatpush1.xpose.msra.mxu0 0.0
    %3713 = vmatprep.subr.mxu0 0.0
    %3714 = vmatpush1.xpose.msra.mxu0 0.0
    %3715 = vmatprep.subr.mxu0 0.0
    %3716 = vmatpush1.xpose.msra.mxu0 0.0
    %3717 = vmatprep.subr.mxu0 0.0
    %3718 = vmatpush1.xpose.msra.mxu0 0.0
    %3719 = vmatprep.subr.mxu0 0.0
    %3720 = vmatpush1.xpose.msra.mxu0 0.0
    %3721 = vmatprep.subr.mxu0 0.0
    %3722 = vmatpush1.xpose.msra.mxu0 0.0
    %3723 = vmatprep.subr.mxu0 0.0
    %3724 = vmatpush1.xpose.msra.mxu0 0.0
    %3725 = vmatprep.subr.mxu0 0.0
    %3726 = vmatpush1.xpose.msra.mxu0 0.0
    %3727 = vmatprep.subr.mxu0 0.0
    %3728 = vmatpush1.xpose.msra.mxu0 0.0
    %3729 = vmatprep.subr.mxu0 0.0
    %3730 = vmatpush1.xpose.msra.mxu0 0.0
    %3731 = vmatprep.subr.mxu0 0.0
    %3732 = vmatpush1.xpose.msra.mxu0 0.0
    %3733 = vmatprep.subr.mxu0 0.0
    %3734 = vmatpush1.xpose.msra.mxu0 0.0
    %3735 = vmatprep.subr.mxu0 0.0
    %3736 = vmatpush1.xpose.msra.mxu0 0.0
    %3737 = vmatprep.subr.mxu0 0.0
    %3738 = vmatpush1.xpose.msra.mxu0 0.0
    %3739 = vmatprep.subr.mxu0 0.0
    %3740 = vmatpush1.xpose.msra.mxu0 0.0
    %3741 = vmatprep.subr.mxu0 0.0
    %3742 = vmatpush1.xpose.msra.mxu0 0.0
    %3743 = vmatprep.subr.mxu0 0.0
    %3744 = vmatpush1.xpose.msra.mxu0 0.0
    %3745 = vmatprep.mubr.f32.mxu0 0.0
    %v3746 = vand.u32 %v3301, 4294901760
    %3747 = vmatmul.mubr.f32.gmra.mrb[0].mxu0 %v3746
    %v3748 = vpop.f32.mrb[0].mxu0
    %v3749 = vadd.f32 %v3677, %v3748
    %v3750 = vpop.f32.mrb[0].mxu0
    %3751 = vdwg.mxu0
    %v3752 = vmul.f32 %v84, %v84
    %v3753 = vmul.f32 %v85, %v85
    %v3754 = vmul.f32 %v86, %v86
    %v3755 = vmul.f32 %v87, %v87
    %v3756 = vmul.f32 %v88, %v88
    %v3757 = vmul.f32 %v89, %v89
    %v3758 = vmul.f32 %v90, %v90
    %v3759 = vmul.f32 %v91, %v91
    %v3760 = vsel %vm143, %v3752, 0.0
    %3761 = vadd.xlane.f32.xlu0 %v3760
    %v3762 = vpop.xlane.xlu0 %3761
    %v3763 = vsel %vm143, %v3753, 0.0
    %3764 = vadd.xlane.f32.xlu0 %v3763
    %v3765 = vpop.xlane.xlu0 %3764
    %v3766 = vsel %vm143, %v3754, 0.0
    %3767 = vadd.xlane.f32.xlu0 %v3766
    %v3768 = vpop.xlane.xlu0 %3767
    %v3769 = vsel %vm143, %v3755, 0.0
    %3770 = vadd.xlane.f32.xlu0 %v3769
    %v3771 = vpop.xlane.xlu0 %3770
    %v3772 = vsel %vm143, %v3756, 0.0
    %3773 = vadd.xlane.f32.xlu0 %v3772
    %v3774 = vpop.xlane.xlu0 %3773
    %v3775 = vsel %vm143, %v3757, 0.0
    %3776 = vadd.xlane.f32.xlu0 %v3775
    %v3777 = vpop.xlane.xlu0 %3776
    %v3778 = vsel %vm143, %v3758, 0.0
    %3779 = vadd.xlane.f32.xlu0 %v3778
    %v3780 = vpop.xlane.xlu0 %3779
    %v3781 = vsel %vm143, %v3759, 0.0
    %3782 = vadd.xlane.f32.xlu0 %v3781
    %v3783 = vpop.xlane.xlu0 %3782
    %v3784 = vmax.f32 %v3762, 1e-24
    %v3785 = vmax.f32 %v3765, 1e-24
    %v3786 = vmax.f32 %v3768, 1e-24
    %v3787 = vmax.f32 %v3771, 1e-24
    %v3788 = vmax.f32 %v3774, 1e-24
    %v3789 = vmax.f32 %v3777, 1e-24
    %v3790 = vmax.f32 %v3780, 1e-24
    %v3791 = vmax.f32 %v3783, 1e-24
    %v3792 = vrsqrt.pop %v3784
    %v3793 = vrsqrt.pop %v3785
    %v3794 = vrsqrt.pop %v3786
    %v3795 = vrsqrt.pop %v3787
    %v3796 = vrsqrt.pop %v3788
    %v3797 = vrsqrt.pop %v3789
    %v3798 = vrsqrt.pop %v3790
    %v3799 = vrsqrt.pop %v3791
    %v3808 = vlaneseq
    %v3809 = vand.u32 %v3808, 127
    %v3810 = vlaneseq
    %v3811 = vshrl.u32 %v3810, 7
    %v3812 = vsub.s32 %v3809, %v3811
    %v3813 = vrot.slane %v3792, %v3812
    %v3814 = vlaneseq
    %v3815 = vshrl.u32 %v3814, 7
    %v3816 = vsub.s32 %v3809, %v3815
    %v3817 = vrot.slane %v3793, %v3816
    %v3818 = vlaneseq
    %v3819 = vshrl.u32 %v3818, 7
    %v3820 = vsub.s32 %v3809, %v3819
    %v3821 = vrot.slane %v3794, %v3820
    %v3822 = vlaneseq
    %v3823 = vshrl.u32 %v3822, 7
    %v3824 = vsub.s32 %v3809, %v3823
    %v3825 = vrot.slane %v3795, %v3824
    %v3826 = vlaneseq
    %v3827 = vshrl.u32 %v3826, 7
    %v3828 = vsub.s32 %v3809, %v3827
    %v3829 = vrot.slane %v3796, %v3828
    %v3830 = vlaneseq
    %v3831 = vshrl.u32 %v3830, 7
    %v3832 = vsub.s32 %v3809, %v3831
    %v3833 = vrot.slane %v3797, %v3832
    %v3834 = vlaneseq
    %v3835 = vshrl.u32 %v3834, 7
    %v3836 = vsub.s32 %v3809, %v3835
    %v3837 = vrot.slane %v3798, %v3836
    %v3838 = vlaneseq
    %v3839 = vshrl.u32 %v3838, 7
    %v3840 = vsub.s32 %v3809, %v3839
    %v3841 = vrot.slane %v3799, %v3840
    %v3850 = vmul.f32 %v592, %v3813
    %v3851 = vmul.f32 %v1043, %v3817
    %v3852 = vmul.f32 %v1494, %v3821
    %v3853 = vmul.f32 %v1945, %v3825
    %v3854 = vmul.f32 %v2396, %v3829
    %v3855 = vmul.f32 %v2847, %v3833
    %v3856 = vmul.f32 %v3298, %v3837
    %v3857 = vmul.f32 %v3749, %v3841
    %v3858 = vld [vmem:[#allocation5] sm:$0xff]
    %3860 = vset.pattern.permute.xlu0 0
    %3861 = vperm.xlu0 %3860, %v3858
    %v3862 = vpop.permute.xlu0 %3861
    %v3863 = vrot.slane %v3862, 1
    %v3864 = vrot.slane %v3862, 2
    %v3865 = vrot.slane %v3862, 3
    %v3866 = vrot.slane %v3862, 4
    %v3867 = vrot.slane %v3862, 5
    %v3868 = vrot.slane %v3862, 6
    %v3869 = vrot.slane %v3862, 7
    %v3878 = vmul.f32 %v3850, %v3862
    %v3879 = vmul.f32 %v3851, %v3863
    %v3880 = vmul.f32 %v3852, %v3864
    %v3881 = vmul.f32 %v3853, %v3865
    %v3882 = vmul.f32 %v3854, %v3866
    %v3883 = vmul.f32 %v3855, %v3867
    %v3884 = vmul.f32 %v3856, %v3868
    %v3885 = vmul.f32 %v3857, %v3869
    %v3886 = vld [vmem:[#allocation2] sm:$0xff]
    %v3895 = vrot.slane %v3879, 7
    %vm3896 = vcmask 1041409
    %v3897 = vsel %vm3896, %v3895, %v3878
    %v3898 = vrot.slane %v3880, 6
    %vm3899 = vcmask 1042434
    %v3900 = vsel %vm3899, %v3898, %v3897
    %v3901 = vrot.slane %v3881, 5
    %vm3902 = vcmask 1043459
    %v3903 = vsel %vm3902, %v3901, %v3900
    %v3904 = vrot.slane %v3882, 4
    %vm3905 = vcmask 1044484
    %v3906 = vsel %vm3905, %v3904, %v3903
    %v3907 = vrot.slane %v3883, 3
    %vm3908 = vcmask 1045509
    %v3909 = vsel %vm3908, %v3907, %v3906
    %v3910 = vrot.slane %v3884, 2
    %vm3911 = vcmask 1046534
    %v3912 = vsel %vm3911, %v3910, %v3909
    %v3913 = vrot.slane %v3885, 1
    %vm3914 = vcmask 1047559
    %v3915 = vsel %vm3914, %v3913, %v3912
    %vm3917 = vcmask 64512
    %v3918 = vsel %vm3917, %v3915, -inf
    %3919 = vmax.xlane.f32.xlu0 %v3918
    %v3920 = vpop.xlane.xlu0 %3919
    %v3921 = vmax.f32 %v3886, %v3920
    %v3922 = vld [vmem:[#allocation3] sm:$0xff]
    %v3923 = vsub.f32 %v3886, %v3921
    %v3924 = vmul.f32 %v3923, 1.442695
    %v3925 = vpow.pop %v3924
    %v3926 = vmul.f32 %v3922, %v3925
    %3928 = vset.pattern.permute.xlu0 0
    %3929 = vperm.xlu0 %3928, %v3921
    %v3930 = vpop.permute.xlu0 %3929
    %v3931 = vrot.slane %v3930, 1
    %v3932 = vrot.slane %v3930, 2
    %v3933 = vrot.slane %v3930, 3
    %v3934 = vrot.slane %v3930, 4
    %v3935 = vrot.slane %v3930, 5
    %v3936 = vrot.slane %v3930, 6
    %v3937 = vrot.slane %v3930, 7
    %v3946 = vsub.f32 %v3878, %v3930
    %v3947 = vsub.f32 %v3879, %v3931
    %v3948 = vsub.f32 %v3880, %v3932
    %v3949 = vsub.f32 %v3881, %v3933
    %v3950 = vsub.f32 %v3882, %v3934
    %v3951 = vsub.f32 %v3883, %v3935
    %v3952 = vsub.f32 %v3884, %v3936
    %v3953 = vsub.f32 %v3885, %v3937
    %v3954 = vmul.f32 %v3946, 1.442695
    %v3955 = vpow.pop %v3954
    %v3956 = vmul.f32 %v3947, 1.442695
    %v3957 = vpow.pop %v3956
    %v3958 = vmul.f32 %v3948, 1.442695
    %v3959 = vpow.pop %v3958
    %v3960 = vmul.f32 %v3949, 1.442695
    %v3961 = vpow.pop %v3960
    %v3962 = vmul.f32 %v3950, 1.442695
    %v3963 = vpow.pop %v3962
    %v3964 = vmul.f32 %v3951, 1.442695
    %v3965 = vpow.pop %v3964
    %v3966 = vmul.f32 %v3952, 1.442695
    %v3967 = vpow.pop %v3966
    %v3968 = vmul.f32 %v3953, 1.442695
    %v3969 = vpow.pop %v3968
    %v3978 = vrot.slane %v3957, 7
    %v3979 = vsel %vm3896, %v3978, %v3955
    %v3980 = vrot.slane %v3959, 6
    %v3981 = vsel %vm3899, %v3980, %v3979
    %v3982 = vrot.slane %v3961, 5
    %v3983 = vsel %vm3902, %v3982, %v3981
    %v3984 = vrot.slane %v3963, 4
    %v3985 = vsel %vm3905, %v3984, %v3983
    %v3986 = vrot.slane %v3965, 3
    %v3987 = vsel %vm3908, %v3986, %v3985
    %v3988 = vrot.slane %v3967, 2
    %v3989 = vsel %vm3911, %v3988, %v3987
    %v3990 = vrot.slane %v3969, 1
    %v3991 = vsel %vm3914, %v3990, %v3989
    %v3993 = vsel %vm3917, %v3991, 0.0
    %3994 = vadd.xlane.f32.xlu0 %v3993
    %v3995 = vpop.xlane.xlu0 %3994
    %v3996 = vadd.f32 %v3926, %v3995
    %vm3997 = vcmask 7168
    %3998 = vst.msk [vmem:[#allocation3] sm:$0xff] %vm3997, %v3996
    %3999 = vst.msk [vmem:[#allocation2] sm:$0xff] %vm3997, %v3921
    // Predicated region
    $region30: #{tpu_custom_call.1} parent=1 // pred_check
      %p4000 = pneg %p52
    $region31: #{tpu_custom_call.1} parent=1 // pred_check_branch
      %4002 = sbr.rel (%p4000) target = $region33
    $region32: #{tpu_custom_call.1} parent=1 // pred_region
      %v4003 = vld [vmem:[#allocation2] sm:$0xff]
      %v4004 = vld [vmem:[#allocation3] sm:$0xff]
      %v4005 = vlog2.pop %v4004
      %v4006 = vmul.f32 %v4005, 0.6931472
      %v4007 = vadd.f32 %v4003, %v4006
      %v4008 = vld [vmem:[#allocation4] sm:$0xff]
      %v4009 = vsub.f32 %v4007, %v4008
      %v4010 = vsel %vm3997, %v4009, 0.0
      %v4011 = vrot.slane %v4010, 4
      %v4012 = vadd.f32 %v4010, %v4011
      %v4013 = vrot.slane %v4012, 2
      %v4014 = vadd.f32 %v4012, %v4013
      %v4015 = vrot.slane %v4014, 1
      %v4016 = vadd.f32 %v4014, %v4015
      %vm4017 = vcmask 0
      %4018 = vst.msk [vmem:[#allocation12] sm:$0x1] %vm4017, %v4016
    $region33: #{tpu_custom_call.1} parent=1 // pred_fallthru
      _
    // Predicated region
    $region34: #{tpu_custom_call.1} parent=1 // pred_check
      _
    $region35: #{tpu_custom_call.1} parent=1 // pred_check_branch
      %4020 = sbr.rel (0) target = $region37
    $region36: #{tpu_custom_call.1} parent=1 // pred_region
      %s4022 = ssub.s32 16, 16
      %4023 = vsyncadd [#allocation8], %s4022
      %s4025 = sshll.u32 [#allocation12], 4
      %s4026 = int_to_ptr.vmem [resolvable:$true] %s4025
      %4028 = dma.vmem_to_hbm [thread:$0]  %s4026, 16, %s3, [#allocation8]
    $region37: #{tpu_custom_call.1} parent=1 // pred_fallthru
      _
    // Predicated region
    $region38: #{tpu_custom_call.1} parent=1 // pred_check
      _
    $region39: #{tpu_custom_call.1} parent=1 // pred_check_branch
      %4030 = sbr.rel (0) target = $region41
    $region40: #{tpu_custom_call.1} parent=1 // pred_region
      %4031 = dma.done [#allocation8], 16
    $region41: #{tpu_custom_call.1} parent=1 // pred_fallthru
      _
    %4032 = vsyncpa [#allocation7], 1
    %4033 = vsyncpa [#allocation10], 1
    %4034 = vsyncpa [#allocation8], 1

</llo_original>
